<compile_context>
chip_gen: v7x
topology: tpu7x:2x2x1
jax: 0.10.0
libtpu: 0.0.40
codegen_flags: <defaults>
</compile_context>

<pallas_src>
import functools

import jax
import jax.numpy as jnp
from jax.experimental import pallas as pl
from jax.experimental.pallas import tpu as pltpu

ROWPAD = 8          # zero columns appended to every image row (>= 6 halo)
ENDPAD = 8          # extra zero lanes at both ends of the scratch (>= 6)
MXU_MIN_C = 8       # use the MXU matmul for the 1x1 conv from this many channels


def attention_kernel(x_ref, wp_ref, bp_ref, wd_ref, bd_ref, wdd_ref, bdd_ref,
                     o_ref, s1, s2, *, C, H, W, Wb, IOFF, RB):
    """x_ref / o_ref: (1, C, H*Wb) blocks (one batch element), lanes = H*Wb.

    wp_ref: (C, C)   pointwise weight        bp_ref: (C, 1) bias
    wd_ref: (C, 25)  depthwise weight        bd_ref: (C, 1) bias
    wdd_ref: (C, 25) dilated depthwise w.    bdd_ref: (C, 1) bias
    s1, s2: (C, ENDPAD + (H+12)*Wb + ENDPAD) f32 VMEM scratch (zero margins).
    """
    f32 = jnp.float32
    L = RB * Wb                      # lanes per row block
    HB = H * Wb                      # interior lanes
    TOT = s1.shape[1]

    # ---- zero the vertical margins / end pads of both scratches (every step,
    # so correctness never depends on which core ran program_id == 0).
    zfront = jnp.zeros((C, IOFF), f32)
    zback = jnp.zeros((C, TOT - (IOFF + HB)), f32)
    s1[:, :IOFF] = zfront
    s2[:, :IOFF] = zfront
    s1[:, IOFF + HB:] = zback
    s2[:, IOFF + HB:] = zback

    # ---- hoisted mask of the W real columns inside each padded row.
    col = jax.lax.broadcasted_iota(jnp.int32, (1, L), 1) % Wb
    imask = col < W                                              # (1, L) bool

    # ---- stage 1: 1x1 pointwise conv (MXU matmul per row block).
    wp_v = wp_ref[...]                                           # (C, C)
    bp_v = bp_ref[...]                                           # (C, 1)
    for h0 in range(0, H, RB):
        xc = x_ref[0, :, h0 * Wb:(h0 + RB) * Wb]                 # (C, L)
        if C >= MXU_MIN_C:
            y = jnp.dot(wp_v, xc, preferred_element_type=f32)
        else:
            # tiny-C fallback: C rank-1 updates on the VPU.
            y = None
            for ci in range(C):
                t = wp_v[:, ci:ci + 1] * xc[ci:ci + 1, :]
                y = t if y is None else y + t
        # add bias only on real columns: row-halo columns must stay exactly 0
        # because the depthwise taps below read them as implicit padding.
        s1[:, IOFF + h0 * Wb: IOFF + h0 * Wb + L] = jnp.where(imask, y + bp_v, 0.0)

    # ---- stages 2+3: the two depthwise 5x5 convs + gate, per 8-channel group.
    for c0 in range(0, C, 8):
        g = min(8, C - c0)
        w1 = wd_ref[c0:c0 + g, :]                                # (g, 25)
        b1 = bd_ref[c0:c0 + g, :]                                # (g, 1)
        w2 = wdd_ref[c0:c0 + g, :]
        b2 = bdd_ref[c0:c0 + g, :]

        # depthwise 5x5, dilation 1, padding 2   (reads s1, writes s2)
        for h0 in range(0, H, RB):
            acc = None
            for kh in range(5):
                start = IOFF + (h0 + kh - 2) * Wb - 2
                ext = s1[c0:c0 + g, start:start + L + 4]         # one load per kh
                for kw in range(5):
                    t = w1[:, kh * 5 + kw:kh * 5 + kw + 1] * ext[:, kw:kw + L]
                    acc = t if acc is None else acc + t
            s2[c0:c0 + g, IOFF + h0 * Wb: IOFF + h0 * Wb + L] = \
                jnp.where(imask, acc + b1, 0.0)

        # depthwise 5x5, dilation 3, padding 6 + gate  (reads s2 and x, writes out)
        for h0 in range(0, H, RB):
            acc = None
            for kh in range(5):
                start = IOFF + (h0 + 3 * (kh - 2)) * Wb - 6
                ext = s2[c0:c0 + g, start:start + L + 12]        # one load per kh
                for kw in range(5):
                    t = w2[:, kh * 5 + kw:kh * 5 + kw + 1] * ext[:, 3 * kw:3 * kw + L]
                    acc = t if acc is None else acc + t
            xg = x_ref[0, c0:c0 + g, h0 * Wb: h0 * Wb + L]
            # halo columns: xg is 0 there, so the (unmasked) garbage in acc+b2
            # is multiplied away; the wrapper slices the halo columns off.
            o_ref[0, c0:c0 + g, h0 * Wb: h0 * Wb + L] = \
                (xg * (acc + b2)).astype(o_ref.dtype)


def attention_forward(x, wp, bp, wd, bd, wdd, bdd):
    """Forward pass, NCHW in / NCHW out.

    x:   (N, C, H, W) float32
    wp:  (C, C)    pointwise weight [c_out, c_in]   (== torch weight[:, :, 0, 0])
    bp:  (C,)      pointwise bias
    wd:  (C, 5, 5) depthwise weight                 (== torch weight[:, 0])
    bd:  (C,)      depthwise bias
    wdd: (C, 5, 5) dilated depthwise weight
    bdd: (C,)      dilated depthwise bias
    """
    N, C, H, W = x.shape
    Wb = W + ROWPAD
    IOFF = ENDPAD + 6 * Wb                       # interior start lane in scratch
    TOT = IOFF + H * Wb + 6 * Wb + ENDPAD        # scratch lanes
    RB = max(d for d in (8, 4, 2, 1) if H % d == 0)   # rows per block
    S = H * Wb                                   # folded lane-dense spatial axis

    # Pad each row with ROWPAD zero columns and fold (H, Wb) onto the lane axis
    # (review: wrapper-side spatial fold/pad to keep the lane axis dense).
    xp = jnp.pad(x, ((0, 0), (0, 0), (0, 0), (0, ROWPAD))).reshape(N, C, S)

    kernel = functools.partial(attention_kernel, C=C, H=H, W=W, Wb=Wb,
                               IOFF=IOFF, RB=RB)

    out_flat = pl.pallas_call(
        kernel,
        out_shape=jax.ShapeDtypeStruct((N, C, S), x.dtype),
        grid_spec=pltpu.PrefetchScalarGridSpec(
            num_scalar_prefetch=0,
            grid=(N,),
            in_specs=[
                pl.BlockSpec((1, C, S), lambda n: (n, 0, 0)),    # x (padded, flat)
                pl.BlockSpec((C, C), lambda n: (0, 0)),          # pointwise weight
                pl.BlockSpec((C, 1), lambda n: (0, 0)),          # pointwise bias
                pl.BlockSpec((C, 25), lambda n: (0, 0)),         # depthwise weight
                pl.BlockSpec((C, 1), lambda n: (0, 0)),          # depthwise bias
                pl.BlockSpec((C, 25), lambda n: (0, 0)),         # dilated dw weight
                pl.BlockSpec((C, 1), lambda n: (0, 0)),          # dilated dw bias
            ],
            out_specs=pl.BlockSpec((1, C, S), lambda n: (n, 0, 0)),
            scratch_shapes=[pltpu.VMEM((C, TOT), jnp.float32),   # pointwise output
                            pltpu.VMEM((C, TOT), jnp.float32)],  # conv1 output
        ),
        compiler_params=pltpu.CompilerParams(
            dimension_semantics=("parallel",),
            vmem_limit_bytes=48 * 1024 * 1024),
    )(xp,
      wp.astype(jnp.float32),
      bp.reshape(C, 1).astype(jnp.float32),
      wd.reshape(C, 25).astype(jnp.float32),
      bd.reshape(C, 1).astype(jnp.float32),
      wdd.reshape(C, 25).astype(jnp.float32),
      bdd.reshape(C, 1).astype(jnp.float32))

    # Drop the zero halo columns again.
    return out_flat.reshape(N, C, H, Wb)[..., :W]


def reference_forward(x, wp, bp, wd, bd, wdd, bdd):
    """Pure-JAX reference (lax convs) mirroring the PyTorch module."""
    N, C, H, W = x.shape
    hi = jax.lax.Precision.HIGHEST
    attn = jnp.einsum('nchw,oc->nohw', x, wp, precision=hi) + bp.reshape(1, C, 1, 1)
    attn = jax.lax.conv_general_dilated(
        attn, wd[:, None], window_strides=(1, 1), padding=((2, 2), (2, 2)),
        feature_group_count=C, dimension_numbers=('NCHW', 'OIHW', 'NCHW'),
        precision=hi) + bd.reshape(1, C, 1, 1)
    attn = jax.lax.conv_general_dilated(
        attn, wdd[:, None], window_strides=(1, 1), padding=((6, 6), (6, 6)),
        rhs_dilation=(3, 3), feature_group_count=C,
        dimension_numbers=('NCHW', 'OIHW', 'NCHW'),
        precision=hi) + bdd.reshape(1, C, 1, 1)
    return x * attn


def _run_case(key, N, C, H, W):
    ks = jax.random.split(key, 7)
    x = jax.random.normal(ks[0], (N, C, H, W), jnp.float32)
    wp = jax.random.normal(ks[1], (C, C), jnp.float32) * 0.2
    bp = jax.random.normal(ks[2], (C,), jnp.float32) * 0.1
    wd = jax.random.normal(ks[3], (C, 5, 5), jnp.float32) * 0.1
    bd = jax.random.normal(ks[4], (C,), jnp.float32) * 0.1
    wdd = jax.random.normal(ks[5], (C, 5, 5), jnp.float32) * 0.1
    bdd = jax.random.normal(ks[6], (C,), jnp.float32) * 0.1

    out = jax.block_until_ready(attention_forward(x, wp, bp, wd, bd, wdd, bdd))
    ref = jax.block_until_ready(reference_forward(x, wp, bp, wd, bd, wdd, bdd))

    assert out.shape == (N, C, H, W)
    err = jnp.max(jnp.abs(out - ref))
    assert jnp.allclose(out, ref, atol=5e-4, rtol=5e-4), f"max abs err = {err}"


if __name__ == "__main__":
    key = jax.random.PRNGKey(0)
    k1, k2 = jax.random.split(key)
    _run_case(k1, 2, 8, 16, 16)   # exercises the MXU pointwise path
    _run_case(k2, 1, 4, 8, 8)     # exercises the small-C VPU fallback + gs < 8
    print("KERNEL_OK")
</pallas_src>

<mosaic_0001>
module attributes {stable_mosaic.version = 11 : i64} {
  func.func @attention_kernel(%arg0: i32, %arg1: memref<1x8x384xf32, #tpu.memory_space<vmem>>, %arg2: memref<8x8xf32, #tpu.memory_space<vmem>>, %arg3: memref<8x1xf32, #tpu.memory_space<vmem>>, %arg4: memref<8x25xf32, #tpu.memory_space<vmem>>, %arg5: memref<8x1xf32, #tpu.memory_space<vmem>>, %arg6: memref<8x25xf32, #tpu.memory_space<vmem>>, %arg7: memref<8x1xf32, #tpu.memory_space<vmem>>, %arg8: memref<1x8x384xf32, #tpu.memory_space<vmem>>, %arg9: memref<8x688xf32, #tpu.memory_space<vmem>>, %arg10: memref<8x688xf32, #tpu.memory_space<vmem>>) attributes {dimension_semantics = [#tpu.dimension_semantics<parallel>], iteration_bounds = array<i64: 2>, scalar_prefetch = 0 : i64, scratch_operands = 2 : i64, tpu.core_type = #tpu.core_type<tc>, window_params = [{transform_indices = @transform_0, window_bounds = array<i64: 1, 8, 384>}, {pipeline_mode = #tpu.pipeline_mode<synchronous>, transform_indices = @transform_1, window_bounds = array<i64: 8, 8>}, {pipeline_mode = #tpu.pipeline_mode<synchronous>, transform_indices = @transform_2, window_bounds = array<i64: 8, 1>}, {pipeline_mode = #tpu.pipeline_mode<synchronous>, transform_indices = @transform_3, window_bounds = array<i64: 8, 25>}, {pipeline_mode = #tpu.pipeline_mode<synchronous>, transform_indices = @transform_4, window_bounds = array<i64: 8, 1>}, {pipeline_mode = #tpu.pipeline_mode<synchronous>, transform_indices = @transform_5, window_bounds = array<i64: 8, 25>}, {pipeline_mode = #tpu.pipeline_mode<synchronous>, transform_indices = @transform_6, window_bounds = array<i64: 8, 1>}, {transform_indices = @transform_7, window_bounds = array<i64: 1, 8, 384>}]} {
    %cst = arith.constant 0.000000e+00 : f32
    %0 = vector.broadcast %cst : f32 to vector<8x152xf32>
    %cst_0 = arith.constant 0.000000e+00 : f32
    %1 = vector.broadcast %cst_0 : f32 to vector<8x152xf32>
    %c0 = arith.constant 0 : index
    %c0_1 = arith.constant 0 : index
    %2 = vector.load %arg9[%c0, %c0_1] : memref<8x688xf32, #tpu.memory_space<vmem>>, vector<8x152xf32>
    tpu.vector_store %arg9[%c0, %c0_1], %0 {strides = array<i32>} : memref<8x688xf32, #tpu.memory_space<vmem>>, vector<8x152xf32>,
    %c0_2 = arith.constant 0 : index
    %c0_3 = arith.constant 0 : index
    %3 = vector.load %arg10[%c0_2, %c0_3] : memref<8x688xf32, #tpu.memory_space<vmem>>, vector<8x152xf32>
    tpu.vector_store %arg10[%c0_2, %c0_3], %0 {strides = array<i32>} : memref<8x688xf32, #tpu.memory_space<vmem>>, vector<8x152xf32>,
    %c0_4 = arith.constant 0 : index
    %c536 = arith.constant 536 : index
    %4 = vector.load %arg9[%c0_4, %c536] : memref<8x688xf32, #tpu.memory_space<vmem>>, vector<8x152xf32>
    tpu.vector_store %arg9[%c0_4, %c536], %1 {strides = array<i32>} : memref<8x688xf32, #tpu.memory_space<vmem>>, vector<8x152xf32>,
    %c0_5 = arith.constant 0 : index
    %c536_6 = arith.constant 536 : index
    %5 = vector.load %arg10[%c0_5, %c536_6] : memref<8x688xf32, #tpu.memory_space<vmem>>, vector<8x152xf32>
    tpu.vector_store %arg10[%c0_5, %c536_6], %1 {strides = array<i32>} : memref<8x688xf32, #tpu.memory_space<vmem>>, vector<8x152xf32>,
    %6 = tpu.iota {dimensions = array<i32: 1>} : vector<1x192xi32>
    %c24_i32 = arith.constant 24 : i32
    %c0_i32 = arith.constant 0 : i32
    %7 = arith.cmpi eq, %c24_i32, %c0_i32 : i32
    %c1_i32 = arith.constant 1 : i32
    %8 = arith.select %7, %c1_i32, %c24_i32 : i32
    %9 = vector.broadcast %8 : i32 to vector<1x192xi32>
    %10 = arith.remsi %6, %9 : vector<1x192xi32>
    %c0_i32_7 = arith.constant 0 : i32
    %11 = vector.broadcast %c0_i32_7 : i32 to vector<1x192xi32>
    %12 = arith.cmpi ne, %10, %11 : vector<1x192xi32>
    %c0_i32_8 = arith.constant 0 : i32
    %13 = vector.broadcast %c0_i32_8 : i32 to vector<1x192xi32>
    %14 = arith.cmpi slt, %10, %13 : vector<1x192xi32>
    %c0_i32_9 = arith.constant 0 : i32
    %15 = arith.cmpi slt, %8, %c0_i32_9 : i32
    %16 = vector.broadcast %15 : i1 to vector<1x192xi1>
    %17 = vector.broadcast %16 : vector<1x192xi1> to vector<1x192xi1>
    %18 = arith.xori %14, %17 : vector<1x192xi1>
    %19 = arith.andi %18, %12 : vector<1x192xi1>
    %20 = vector.broadcast %8 : i32 to vector<1x192xi32>
    %21 = arith.addi %10, %20 : vector<1x192xi32>
    %22 = arith.select %19, %21, %10 : vector<1x192xi1>, vector<1x192xi32>
    %c16_i32 = arith.constant 16 : i32
    %23 = vector.broadcast %c16_i32 : i32 to vector<1x192xi32>
    %24 = arith.cmpi slt, %22, %23 : vector<1x192xi32>
    %c0_10 = arith.constant 0 : index
    %c0_11 = arith.constant 0 : index
    %25 = vector.load %arg2[%c0_10, %c0_11] : memref<8x8xf32, #tpu.memory_space<vmem>>, vector<8x8xf32>
    %c0_12 = arith.constant 0 : index
    %c0_13 = arith.constant 0 : index
    %26 = vector.load %arg3[%c0_12, %c0_13] : memref<8x1xf32, #tpu.memory_space<vmem>>, vector<8x1xf32>
    %c0_14 = arith.constant 0 : index
    %c0_15 = arith.constant 0 : index
    %c0_16 = arith.constant 0 : index
    %27 = vector.load %arg1[%c0_14, %c0_15, %c0_16] : memref<1x8x384xf32, #tpu.memory_space<vmem>>, vector<1x8x192xf32>
    %28 = vector.shape_cast %27 : vector<1x8x192xf32> to vector<8x192xf32>
    %cst_17 = arith.constant dense<0.000000e+00> : vector<8x192xf32>
    %29 = tpu.matmul %25, %28, %cst_17 {dimension_numbers = #tpu.dot_dimension_numbers<[1], [0], [0], [1], [0, 0, 1, 1], [], []>} : vector<8x8xf32>, vector<8x192xf32>, vector<8x192xf32> -> vector<8x192xf32>
    %30 = vector.broadcast %26 : vector<8x1xf32> to vector<8x192xf32>
    %31 = arith.addf %29, %30 : vector<8x192xf32>
    %cst_18 = arith.constant 0.000000e+00 : f32
    %32 = vector.shape_cast %24 : vector<1x192xi1> to vector<1x192xi1>
    %33 = vector.broadcast %32 : vector<1x192xi1> to vector<8x192xi1>
    %34 = vector.broadcast %cst_18 : f32 to vector<8x192xf32>
    %35 = arith.select %33, %31, %34 : vector<8x192xi1>, vector<8x192xf32>
    %c0_19 = arith.constant 0 : index
    %c152 = arith.constant 152 : index
    %36 = vector.load %arg9[%c0_19, %c152] : memref<8x688xf32, #tpu.memory_space<vmem>>, vector<8x192xf32>
    tpu.vector_store %arg9[%c0_19, %c152], %35 {strides = array<i32>} : memref<8x688xf32, #tpu.memory_space<vmem>>, vector<8x192xf32>,
    %c0_20 = arith.constant 0 : index
    %c0_21 = arith.constant 0 : index
    %c192 = arith.constant 192 : index
    %37 = vector.load %arg1[%c0_20, %c0_21, %c192] : memref<1x8x384xf32, #tpu.memory_space<vmem>>, vector<1x8x192xf32>
    %38 = vector.shape_cast %37 : vector<1x8x192xf32> to vector<8x192xf32>
    %cst_22 = arith.constant dense<0.000000e+00> : vector<8x192xf32>
    %39 = tpu.matmul %25, %38, %cst_22 {dimension_numbers = #tpu.dot_dimension_numbers<[1], [0], [0], [1], [0, 0, 1, 1], [], []>} : vector<8x8xf32>, vector<8x192xf32>, vector<8x192xf32> -> vector<8x192xf32>
    %40 = vector.broadcast %26 : vector<8x1xf32> to vector<8x192xf32>
    %41 = arith.addf %39, %40 : vector<8x192xf32>
    %cst_23 = arith.constant 0.000000e+00 : f32
    %42 = vector.shape_cast %24 : vector<1x192xi1> to vector<1x192xi1>
    %43 = vector.broadcast %42 : vector<1x192xi1> to vector<8x192xi1>
    %44 = vector.broadcast %cst_23 : f32 to vector<8x192xf32>
    %45 = arith.select %43, %41, %44 : vector<8x192xi1>, vector<8x192xf32>
    %c0_24 = arith.constant 0 : index
    %c344 = arith.constant 344 : index
    %46 = vector.load %arg9[%c0_24, %c344] : memref<8x688xf32, #tpu.memory_space<vmem>>, vector<8x192xf32>
    tpu.vector_store %arg9[%c0_24, %c344], %45 {strides = array<i32>} : memref<8x688xf32, #tpu.memory_space<vmem>>, vector<8x192xf32>,
    %c0_25 = arith.constant 0 : index
    %c0_26 = arith.constant 0 : index
    %47 = vector.load %arg4[%c0_25, %c0_26] : memref<8x25xf32, #tpu.memory_space<vmem>>, vector<8x25xf32>
    %c0_27 = arith.constant 0 : index
    %c0_28 = arith.constant 0 : index
    %48 = vector.load %arg5[%c0_27, %c0_28] : memref<8x1xf32, #tpu.memory_space<vmem>>, vector<8x1xf32>
    %c0_29 = arith.constant 0 : index
    %c0_30 = arith.constant 0 : index
    %49 = vector.load %arg6[%c0_29, %c0_30] : memref<8x25xf32, #tpu.memory_space<vmem>>, vector<8x25xf32>
    %c0_31 = arith.constant 0 : index
    %c0_32 = arith.constant 0 : index
    %50 = vector.load %arg7[%c0_31, %c0_32] : memref<8x1xf32, #tpu.memory_space<vmem>>, vector<8x1xf32>
    %c0_33 = arith.constant 0 : index
    %c102 = arith.constant 102 : index
    %51 = vector.load %arg9[%c0_33, %c102] : memref<8x688xf32, #tpu.memory_space<vmem>>, vector<8x196xf32>
    %52 = vector.extract_strided_slice %47 {offsets = [0, 0], sizes = [8, 1], strides = [1, 1]} : vector<8x25xf32> to vector<8x1xf32>
    %53 = vector.extract_strided_slice %51 {offsets = [0, 0], sizes = [8, 192], strides = [1, 1]} : vector<8x196xf32> to vector<8x192xf32>
    %54 = vector.broadcast %52 : vector<8x1xf32> to vector<8x192xf32>
    %55 = arith.mulf %54, %53 : vector<8x192xf32>
    %56 = vector.extract_strided_slice %47 {offsets = [0, 1], sizes = [8, 1], strides = [1, 1]} : vector<8x25xf32> to vector<8x1xf32>
    %57 = vector.extract_strided_slice %51 {offsets = [0, 1], sizes = [8, 192], strides = [1, 1]} : vector<8x196xf32> to vector<8x192xf32>
    %58 = vector.broadcast %56 : vector<8x1xf32> to vector<8x192xf32>
    %59 = arith.mulf %58, %57 : vector<8x192xf32>
    %60 = arith.addf %55, %59 : vector<8x192xf32>
    %61 = vector.extract_strided_slice %47 {offsets = [0, 2], sizes = [8, 1], strides = [1, 1]} : vector<8x25xf32> to vector<8x1xf32>
    %62 = vector.extract_strided_slice %51 {offsets = [0, 2], sizes = [8, 192], strides = [1, 1]} : vector<8x196xf32> to vector<8x192xf32>
    %63 = vector.broadcast %61 : vector<8x1xf32> to vector<8x192xf32>
    %64 = arith.mulf %63, %62 : vector<8x192xf32>
    %65 = arith.addf %60, %64 : vector<8x192xf32>
    %66 = vector.extract_strided_slice %47 {offsets = [0, 3], sizes = [8, 1], strides = [1, 1]} : vector<8x25xf32> to vector<8x1xf32>
    %67 = vector.extract_strided_slice %51 {offsets = [0, 3], sizes = [8, 192], strides = [1, 1]} : vector<8x196xf32> to vector<8x192xf32>
    %68 = vector.broadcast %66 : vector<8x1xf32> to vector<8x192xf32>
    %69 = arith.mulf %68, %67 : vector<8x192xf32>
    %70 = arith.addf %65, %69 : vector<8x192xf32>
    %71 = vector.extract_strided_slice %47 {offsets = [0, 4], sizes = [8, 1], strides = [1, 1]} : vector<8x25xf32> to vector<8x1xf32>
    %72 = vector.extract_strided_slice %51 {offsets = [0, 4], sizes = [8, 192], strides = [1, 1]} : vector<8x196xf32> to vector<8x192xf32>
    %73 = vector.broadcast %71 : vector<8x1xf32> to vector<8x192xf32>
    %74 = arith.mulf %73, %72 : vector<8x192xf32>
    %75 = arith.addf %70, %74 : vector<8x192xf32>
    %c0_34 = arith.constant 0 : index
    %c126 = arith.constant 126 : index
    %76 = vector.load %arg9[%c0_34, %c126] : memref<8x688xf32, #tpu.memory_space<vmem>>, vector<8x196xf32>
    %77 = vector.extract_strided_slice %47 {offsets = [0, 5], sizes = [8, 1], strides = [1, 1]} : vector<8x25xf32> to vector<8x1xf32>
    %78 = vector.extract_strided_slice %76 {offsets = [0, 0], sizes = [8, 192], strides = [1, 1]} : vector<8x196xf32> to vector<8x192xf32>
    %79 = vector.broadcast %77 : vector<8x1xf32> to vector<8x192xf32>
    %80 = arith.mulf %79, %78 : vector<8x192xf32>
    %81 = arith.addf %75, %80 : vector<8x192xf32>
    %82 = vector.extract_strided_slice %47 {offsets = [0, 6], sizes = [8, 1], strides = [1, 1]} : vector<8x25xf32> to vector<8x1xf32>
    %83 = vector.extract_strided_slice %76 {offsets = [0, 1], sizes = [8, 192], strides = [1, 1]} : vector<8x196xf32> to vector<8x192xf32>
    %84 = vector.broadcast %82 : vector<8x1xf32> to vector<8x192xf32>
    %85 = arith.mulf %84, %83 : vector<8x192xf32>
    %86 = arith.addf %81, %85 : vector<8x192xf32>
    %87 = vector.extract_strided_slice %47 {offsets = [0, 7], sizes = [8, 1], strides = [1, 1]} : vector<8x25xf32> to vector<8x1xf32>
    %88 = vector.extract_strided_slice %76 {offsets = [0, 2], sizes = [8, 192], strides = [1, 1]} : vector<8x196xf32> to vector<8x192xf32>
    %89 = vector.broadcast %87 : vector<8x1xf32> to vector<8x192xf32>
    %90 = arith.mulf %89, %88 : vector<8x192xf32>
    %91 = arith.addf %86, %90 : vector<8x192xf32>
    %92 = vector.extract_strided_slice %47 {offsets = [0, 8], sizes = [8, 1], strides = [1, 1]} : vector<8x25xf32> to vector<8x1xf32>
    %93 = vector.extract_strided_slice %76 {offsets = [0, 3], sizes = [8, 192], strides = [1, 1]} : vector<8x196xf32> to vector<8x192xf32>
    %94 = vector.broadcast %92 : vector<8x1xf32> to vector<8x192xf32>
    %95 = arith.mulf %94, %93 : vector<8x192xf32>
    %96 = arith.addf %91, %95 : vector<8x192xf32>
    %97 = vector.extract_strided_slice %47 {offsets = [0, 9], sizes = [8, 1], strides = [1, 1]} : vector<8x25xf32> to vector<8x1xf32>
    %98 = vector.extract_strided_slice %76 {offsets = [0, 4], sizes = [8, 192], strides = [1, 1]} : vector<8x196xf32> to vector<8x192xf32>
    %99 = vector.broadcast %97 : vector<8x1xf32> to vector<8x192xf32>
    %100 = arith.mulf %99, %98 : vector<8x192xf32>
    %101 = arith.addf %96, %100 : vector<8x192xf32>
    %c0_35 = arith.constant 0 : index
    %c150 = arith.constant 150 : index
    %102 = vector.load %arg9[%c0_35, %c150] : memref<8x688xf32, #tpu.memory_space<vmem>>, vector<8x196xf32>
    %103 = vector.extract_strided_slice %47 {offsets = [0, 10], sizes = [8, 1], strides = [1, 1]} : vector<8x25xf32> to vector<8x1xf32>
    %104 = vector.extract_strided_slice %102 {offsets = [0, 0], sizes = [8, 192], strides = [1, 1]} : vector<8x196xf32> to vector<8x192xf32>
    %105 = vector.broadcast %103 : vector<8x1xf32> to vector<8x192xf32>
    %106 = arith.mulf %105, %104 : vector<8x192xf32>
    %107 = arith.addf %101, %106 : vector<8x192xf32>
    %108 = vector.extract_strided_slice %47 {offsets = [0, 11], sizes = [8, 1], strides = [1, 1]} : vector<8x25xf32> to vector<8x1xf32>
    %109 = vector.extract_strided_slice %102 {offsets = [0, 1], sizes = [8, 192], strides = [1, 1]} : vector<8x196xf32> to vector<8x192xf32>
    %110 = vector.broadcast %108 : vector<8x1xf32> to vector<8x192xf32>
    %111 = arith.mulf %110, %109 : vector<8x192xf32>
    %112 = arith.addf %107, %111 : vector<8x192xf32>
    %113 = vector.extract_strided_slice %47 {offsets = [0, 12], sizes = [8, 1], strides = [1, 1]} : vector<8x25xf32> to vector<8x1xf32>
    %114 = vector.extract_strided_slice %102 {offsets = [0, 2], sizes = [8, 192], strides = [1, 1]} : vector<8x196xf32> to vector<8x192xf32>
    %115 = vector.broadcast %113 : vector<8x1xf32> to vector<8x192xf32>
    %116 = arith.mulf %115, %114 : vector<8x192xf32>
    %117 = arith.addf %112, %116 : vector<8x192xf32>
    %118 = vector.extract_strided_slice %47 {offsets = [0, 13], sizes = [8, 1], strides = [1, 1]} : vector<8x25xf32> to vector<8x1xf32>
    %119 = vector.extract_strided_slice %102 {offsets = [0, 3], sizes = [8, 192], strides = [1, 1]} : vector<8x196xf32> to vector<8x192xf32>
    %120 = vector.broadcast %118 : vector<8x1xf32> to vector<8x192xf32>
    %121 = arith.mulf %120, %119 : vector<8x192xf32>
    %122 = arith.addf %117, %121 : vector<8x192xf32>
    %123 = vector.extract_strided_slice %47 {offsets = [0, 14], sizes = [8, 1], strides = [1, 1]} : vector<8x25xf32> to vector<8x1xf32>
    %124 = vector.extract_strided_slice %102 {offsets = [0, 4], sizes = [8, 192], strides = [1, 1]} : vector<8x196xf32> to vector<8x192xf32>
    %125 = vector.broadcast %123 : vector<8x1xf32> to vector<8x192xf32>
    %126 = arith.mulf %125, %124 : vector<8x192xf32>
    %127 = arith.addf %122, %126 : vector<8x192xf32>
    %c0_36 = arith.constant 0 : index
    %c174 = arith.constant 174 : index
    %128 = vector.load %arg9[%c0_36, %c174] : memref<8x688xf32, #tpu.memory_space<vmem>>, vector<8x196xf32>
    %129 = vector.extract_strided_slice %47 {offsets = [0, 15], sizes = [8, 1], strides = [1, 1]} : vector<8x25xf32> to vector<8x1xf32>
    %130 = vector.extract_strided_slice %128 {offsets = [0, 0], sizes = [8, 192], strides = [1, 1]} : vector<8x196xf32> to vector<8x192xf32>
    %131 = vector.broadcast %129 : vector<8x1xf32> to vector<8x192xf32>
    %132 = arith.mulf %131, %130 : vector<8x192xf32>
    %133 = arith.addf %127, %132 : vector<8x192xf32>
    %134 = vector.extract_strided_slice %47 {offsets = [0, 16], sizes = [8, 1], strides = [1, 1]} : vector<8x25xf32> to vector<8x1xf32>
    %135 = vector.extract_strided_slice %128 {offsets = [0, 1], sizes = [8, 192], strides = [1, 1]} : vector<8x196xf32> to vector<8x192xf32>
    %136 = vector.broadcast %134 : vector<8x1xf32> to vector<8x192xf32>
    %137 = arith.mulf %136, %135 : vector<8x192xf32>
    %138 = arith.addf %133, %137 : vector<8x192xf32>
    %139 = vector.extract_strided_slice %47 {offsets = [0, 17], sizes = [8, 1], strides = [1, 1]} : vector<8x25xf32> to vector<8x1xf32>
    %140 = vector.extract_strided_slice %128 {offsets = [0, 2], sizes = [8, 192], strides = [1, 1]} : vector<8x196xf32> to vector<8x192xf32>
    %141 = vector.broadcast %139 : vector<8x1xf32> to vector<8x192xf32>
    %142 = arith.mulf %141, %140 : vector<8x192xf32>
    %143 = arith.addf %138, %142 : vector<8x192xf32>
    %144 = vector.extract_strided_slice %47 {offsets = [0, 18], sizes = [8, 1], strides = [1, 1]} : vector<8x25xf32> to vector<8x1xf32>
    %145 = vector.extract_strided_slice %128 {offsets = [0, 3], sizes = [8, 192], strides = [1, 1]} : vector<8x196xf32> to vector<8x192xf32>
    %146 = vector.broadcast %144 : vector<8x1xf32> to vector<8x192xf32>
    %147 = arith.mulf %146, %145 : vector<8x192xf32>
    %148 = arith.addf %143, %147 : vector<8x192xf32>
    %149 = vector.extract_strided_slice %47 {offsets = [0, 19], sizes = [8, 1], strides = [1, 1]} : vector<8x25xf32> to vector<8x1xf32>
    %150 = vector.extract_strided_slice %128 {offsets = [0, 4], sizes = [8, 192], strides = [1, 1]} : vector<8x196xf32> to vector<8x192xf32>
    %151 = vector.broadcast %149 : vector<8x1xf32> to vector<8x192xf32>
    %152 = arith.mulf %151, %150 : vector<8x192xf32>
    %153 = arith.addf %148, %152 : vector<8x192xf32>
    %c0_37 = arith.constant 0 : index
    %c198 = arith.constant 198 : index
    %154 = vector.load %arg9[%c0_37, %c198] : memref<8x688xf32, #tpu.memory_space<vmem>>, vector<8x196xf32>
    %155 = vector.extract_strided_slice %47 {offsets = [0, 20], sizes = [8, 1], strides = [1, 1]} : vector<8x25xf32> to vector<8x1xf32>
    %156 = vector.extract_strided_slice %154 {offsets = [0, 0], sizes = [8, 192], strides = [1, 1]} : vector<8x196xf32> to vector<8x192xf32>
    %157 = vector.broadcast %155 : vector<8x1xf32> to vector<8x192xf32>
    %158 = arith.mulf %157, %156 : vector<8x192xf32>
    %159 = arith.addf %153, %158 : vector<8x192xf32>
    %160 = vector.extract_strided_slice %47 {offsets = [0, 21], sizes = [8, 1], strides = [1, 1]} : vector<8x25xf32> to vector<8x1xf32>
    %161 = vector.extract_strided_slice %154 {offsets = [0, 1], sizes = [8, 192], strides = [1, 1]} : vector<8x196xf32> to vector<8x192xf32>
    %162 = vector.broadcast %160 : vector<8x1xf32> to vector<8x192xf32>
    %163 = arith.mulf %162, %161 : vector<8x192xf32>
    %164 = arith.addf %159, %163 : vector<8x192xf32>
    %165 = vector.extract_strided_slice %47 {offsets = [0, 22], sizes = [8, 1], strides = [1, 1]} : vector<8x25xf32> to vector<8x1xf32>
    %166 = vector.extract_strided_slice %154 {offsets = [0, 2], sizes = [8, 192], strides = [1, 1]} : vector<8x196xf32> to vector<8x192xf32>
    %167 = vector.broadcast %165 : vector<8x1xf32> to vector<8x192xf32>
    %168 = arith.mulf %167, %166 : vector<8x192xf32>
    %169 = arith.addf %164, %168 : vector<8x192xf32>
    %170 = vector.extract_strided_slice %47 {offsets = [0, 23], sizes = [8, 1], strides = [1, 1]} : vector<8x25xf32> to vector<8x1xf32>
    %171 = vector.extract_strided_slice %154 {offsets = [0, 3], sizes = [8, 192], strides = [1, 1]} : vector<8x196xf32> to vector<8x192xf32>
    %172 = vector.broadcast %170 : vector<8x1xf32> to vector<8x192xf32>
    %173 = arith.mulf %172, %171 : vector<8x192xf32>
    %174 = arith.addf %169, %173 : vector<8x192xf32>
    %175 = vector.extract_strided_slice %47 {offsets = [0, 24], sizes = [8, 1], strides = [1, 1]} : vector<8x25xf32> to vector<8x1xf32>
    %176 = vector.extract_strided_slice %154 {offsets = [0, 4], sizes = [8, 192], strides = [1, 1]} : vector<8x196xf32> to vector<8x192xf32>
    %177 = vector.broadcast %175 : vector<8x1xf32> to vector<8x192xf32>
    %178 = arith.mulf %177, %176 : vector<8x192xf32>
    %179 = arith.addf %174, %178 : vector<8x192xf32>
    %180 = vector.broadcast %48 : vector<8x1xf32> to vector<8x192xf32>
    %181 = arith.addf %179, %180 : vector<8x192xf32>
    %cst_38 = arith.constant 0.000000e+00 : f32
    %182 = vector.shape_cast %24 : vector<1x192xi1> to vector<1x192xi1>
    %183 = vector.broadcast %182 : vector<1x192xi1> to vector<8x192xi1>
    %184 = vector.broadcast %cst_38 : f32 to vector<8x192xf32>
    %185 = arith.select %183, %181, %184 : vector<8x192xi1>, vector<8x192xf32>
    %c0_39 = arith.constant 0 : index
    %c152_40 = arith.constant 152 : index
    %186 = vector.load %arg10[%c0_39, %c152_40] : memref<8x688xf32, #tpu.memory_space<vmem>>, vector<8x192xf32>
    tpu.vector_store %arg10[%c0_39, %c152_40], %185 {strides = array<i32>} : memref<8x688xf32, #tpu.memory_space<vmem>>, vector<8x192xf32>,
    %c0_41 = arith.constant 0 : index
    %c294 = arith.constant 294 : index
    %187 = vector.load %arg9[%c0_41, %c294] : memref<8x688xf32, #tpu.memory_space<vmem>>, vector<8x196xf32>
    %188 = vector.extract_strided_slice %47 {offsets = [0, 0], sizes = [8, 1], strides = [1, 1]} : vector<8x25xf32> to vector<8x1xf32>
    %189 = vector.extract_strided_slice %187 {offsets = [0, 0], sizes = [8, 192], strides = [1, 1]} : vector<8x196xf32> to vector<8x192xf32>
    %190 = vector.broadcast %188 : vector<8x1xf32> to vector<8x192xf32>
    %191 = arith.mulf %190, %189 : vector<8x192xf32>
    %192 = vector.extract_strided_slice %47 {offsets = [0, 1], sizes = [8, 1], strides = [1, 1]} : vector<8x25xf32> to vector<8x1xf32>
    %193 = vector.extract_strided_slice %187 {offsets = [0, 1], sizes = [8, 192], strides = [1, 1]} : vector<8x196xf32> to vector<8x192xf32>
    %194 = vector.broadcast %192 : vector<8x1xf32> to vector<8x192xf32>
    %195 = arith.mulf %194, %193 : vector<8x192xf32>
    %196 = arith.addf %191, %195 : vector<8x192xf32>
    %197 = vector.extract_strided_slice %47 {offsets = [0, 2], sizes = [8, 1], strides = [1, 1]} : vector<8x25xf32> to vector<8x1xf32>
    %198 = vector.extract_strided_slice %187 {offsets = [0, 2], sizes = [8, 192], strides = [1, 1]} : vector<8x196xf32> to vector<8x192xf32>
    %199 = vector.broadcast %197 : vector<8x1xf32> to vector<8x192xf32>
    %200 = arith.mulf %199, %198 : vector<8x192xf32>
    %201 = arith.addf %196, %200 : vector<8x192xf32>
    %202 = vector.extract_strided_slice %47 {offsets = [0, 3], sizes = [8, 1], strides = [1, 1]} : vector<8x25xf32> to vector<8x1xf32>
    %203 = vector.extract_strided_slice %187 {offsets = [0, 3], sizes = [8, 192], strides = [1, 1]} : vector<8x196xf32> to vector<8x192xf32>
    %204 = vector.broadcast %202 : vector<8x1xf32> to vector<8x192xf32>
    %205 = arith.mulf %204, %203 : vector<8x192xf32>
    %206 = arith.addf %201, %205 : vector<8x192xf32>
    %207 = vector.extract_strided_slice %47 {offsets = [0, 4], sizes = [8, 1], strides = [1, 1]} : vector<8x25xf32> to vector<8x1xf32>
    %208 = vector.extract_strided_slice %187 {offsets = [0, 4], sizes = [8, 192], strides = [1, 1]} : vector<8x196xf32> to vector<8x192xf32>
    %209 = vector.broadcast %207 : vector<8x1xf32> to vector<8x192xf32>
    %210 = arith.mulf %209, %208 : vector<8x192xf32>
    %211 = arith.addf %206, %210 : vector<8x192xf32>
    %c0_42 = arith.constant 0 : index
    %c318 = arith.constant 318 : index
    %212 = vector.load %arg9[%c0_42, %c318] : memref<8x688xf32, #tpu.memory_space<vmem>>, vector<8x196xf32>
    %213 = vector.extract_strided_slice %47 {offsets = [0, 5], sizes = [8, 1], strides = [1, 1]} : vector<8x25xf32> to vector<8x1xf32>
    %214 = vector.extract_strided_slice %212 {offsets = [0, 0], sizes = [8, 192], strides = [1, 1]} : vector<8x196xf32> to vector<8x192xf32>
    %215 = vector.broadcast %213 : vector<8x1xf32> to vector<8x192xf32>
    %216 = arith.mulf %215, %214 : vector<8x192xf32>
    %217 = arith.addf %211, %216 : vector<8x192xf32>
    %218 = vector.extract_strided_slice %47 {offsets = [0, 6], sizes = [8, 1], strides = [1, 1]} : vector<8x25xf32> to vector<8x1xf32>
    %219 = vector.extract_strided_slice %212 {offsets = [0, 1], sizes = [8, 192], strides = [1, 1]} : vector<8x196xf32> to vector<8x192xf32>
    %220 = vector.broadcast %218 : vector<8x1xf32> to vector<8x192xf32>
    %221 = arith.mulf %220, %219 : vector<8x192xf32>
    %222 = arith.addf %217, %221 : vector<8x192xf32>
    %223 = vector.extract_strided_slice %47 {offsets = [0, 7], sizes = [8, 1], strides = [1, 1]} : vector<8x25xf32> to vector<8x1xf32>
    %224 = vector.extract_strided_slice %212 {offsets = [0, 2], sizes = [8, 192], strides = [1, 1]} : vector<8x196xf32> to vector<8x192xf32>
    %225 = vector.broadcast %223 : vector<8x1xf32> to vector<8x192xf32>
    %226 = arith.mulf %225, %224 : vector<8x192xf32>
    %227 = arith.addf %222, %226 : vector<8x192xf32>
    %228 = vector.extract_strided_slice %47 {offsets = [0, 8], sizes = [8, 1], strides = [1, 1]} : vector<8x25xf32> to vector<8x1xf32>
    %229 = vector.extract_strided_slice %212 {offsets = [0, 3], sizes = [8, 192], strides = [1, 1]} : vector<8x196xf32> to vector<8x192xf32>
    %230 = vector.broadcast %228 : vector<8x1xf32> to vector<8x192xf32>
    %231 = arith.mulf %230, %229 : vector<8x192xf32>
    %232 = arith.addf %227, %231 : vector<8x192xf32>
    %233 = vector.extract_strided_slice %47 {offsets = [0, 9], sizes = [8, 1], strides = [1, 1]} : vector<8x25xf32> to vector<8x1xf32>
    %234 = vector.extract_strided_slice %212 {offsets = [0, 4], sizes = [8, 192], strides = [1, 1]} : vector<8x196xf32> to vector<8x192xf32>
    %235 = vector.broadcast %233 : vector<8x1xf32> to vector<8x192xf32>
    %236 = arith.mulf %235, %234 : vector<8x192xf32>
    %237 = arith.addf %232, %236 : vector<8x192xf32>
    %c0_43 = arith.constant 0 : index
    %c342 = arith.constant 342 : index
    %238 = vector.load %arg9[%c0_43, %c342] : memref<8x688xf32, #tpu.memory_space<vmem>>, vector<8x196xf32>
    %239 = vector.extract_strided_slice %47 {offsets = [0, 10], sizes = [8, 1], strides = [1, 1]} : vector<8x25xf32> to vector<8x1xf32>
    %240 = vector.extract_strided_slice %238 {offsets = [0, 0], sizes = [8, 192], strides = [1, 1]} : vector<8x196xf32> to vector<8x192xf32>
    %241 = vector.broadcast %239 : vector<8x1xf32> to vector<8x192xf32>
    %242 = arith.mulf %241, %240 : vector<8x192xf32>
    %243 = arith.addf %237, %242 : vector<8x192xf32>
    %244 = vector.extract_strided_slice %47 {offsets = [0, 11], sizes = [8, 1], strides = [1, 1]} : vector<8x25xf32> to vector<8x1xf32>
    %245 = vector.extract_strided_slice %238 {offsets = [0, 1], sizes = [8, 192], strides = [1, 1]} : vector<8x196xf32> to vector<8x192xf32>
    %246 = vector.broadcast %244 : vector<8x1xf32> to vector<8x192xf32>
    %247 = arith.mulf %246, %245 : vector<8x192xf32>
    %248 = arith.addf %243, %247 : vector<8x192xf32>
    %249 = vector.extract_strided_slice %47 {offsets = [0, 12], sizes = [8, 1], strides = [1, 1]} : vector<8x25xf32> to vector<8x1xf32>
    %250 = vector.extract_strided_slice %238 {offsets = [0, 2], sizes = [8, 192], strides = [1, 1]} : vector<8x196xf32> to vector<8x192xf32>
    %251 = vector.broadcast %249 : vector<8x1xf32> to vector<8x192xf32>
    %252 = arith.mulf %251, %250 : vector<8x192xf32>
    %253 = arith.addf %248, %252 : vector<8x192xf32>
    %254 = vector.extract_strided_slice %47 {offsets = [0, 13], sizes = [8, 1], strides = [1, 1]} : vector<8x25xf32> to vector<8x1xf32>
    %255 = vector.extract_strided_slice %238 {offsets = [0, 3], sizes = [8, 192], strides = [1, 1]} : vector<8x196xf32> to vector<8x192xf32>
    %256 = vector.broadcast %254 : vector<8x1xf32> to vector<8x192xf32>
    %257 = arith.mulf %256, %255 : vector<8x192xf32>
    %258 = arith.addf %253, %257 : vector<8x192xf32>
    %259 = vector.extract_strided_slice %47 {offsets = [0, 14], sizes = [8, 1], strides = [1, 1]} : vector<8x25xf32> to vector<8x1xf32>
    %260 = vector.extract_strided_slice %238 {offsets = [0, 4], sizes = [8, 192], strides = [1, 1]} : vector<8x196xf32> to vector<8x192xf32>
    %261 = vector.broadcast %259 : vector<8x1xf32> to vector<8x192xf32>
    %262 = arith.mulf %261, %260 : vector<8x192xf32>
    %263 = arith.addf %258, %262 : vector<8x192xf32>
    %c0_44 = arith.constant 0 : index
    %c366 = arith.constant 366 : index
    %264 = vector.load %arg9[%c0_44, %c366] : memref<8x688xf32, #tpu.memory_space<vmem>>, vector<8x196xf32>
    %265 = vector.extract_strided_slice %47 {offsets = [0, 15], sizes = [8, 1], strides = [1, 1]} : vector<8x25xf32> to vector<8x1xf32>
    %266 = vector.extract_strided_slice %264 {offsets = [0, 0], sizes = [8, 192], strides = [1, 1]} : vector<8x196xf32> to vector<8x192xf32>
    %267 = vector.broadcast %265 : vector<8x1xf32> to vector<8x192xf32>
    %268 = arith.mulf %267, %266 : vector<8x192xf32>
    %269 = arith.addf %263, %268 : vector<8x192xf32>
    %270 = vector.extract_strided_slice %47 {offsets = [0, 16], sizes = [8, 1], strides = [1, 1]} : vector<8x25xf32> to vector<8x1xf32>
    %271 = vector.extract_strided_slice %264 {offsets = [0, 1], sizes = [8, 192], strides = [1, 1]} : vector<8x196xf32> to vector<8x192xf32>
    %272 = vector.broadcast %270 : vector<8x1xf32> to vector<8x192xf32>
    %273 = arith.mulf %272, %271 : vector<8x192xf32>
    %274 = arith.addf %269, %273 : vector<8x192xf32>
    %275 = vector.extract_strided_slice %47 {offsets = [0, 17], sizes = [8, 1], strides = [1, 1]} : vector<8x25xf32> to vector<8x1xf32>
    %276 = vector.extract_strided_slice %264 {offsets = [0, 2], sizes = [8, 192], strides = [1, 1]} : vector<8x196xf32> to vector<8x192xf32>
    %277 = vector.broadcast %275 : vector<8x1xf32> to vector<8x192xf32>
    %278 = arith.mulf %277, %276 : vector<8x192xf32>
    %279 = arith.addf %274, %278 : vector<8x192xf32>
    %280 = vector.extract_strided_slice %47 {offsets = [0, 18], sizes = [8, 1], strides = [1, 1]} : vector<8x25xf32> to vector<8x1xf32>
    %281 = vector.extract_strided_slice %264 {offsets = [0, 3], sizes = [8, 192], strides = [1, 1]} : vector<8x196xf32> to vector<8x192xf32>
    %282 = vector.broadcast %280 : vector<8x1xf32> to vector<8x192xf32>
    %283 = arith.mulf %282, %281 : vector<8x192xf32>
    %284 = arith.addf %279, %283 : vector<8x192xf32>
    %285 = vector.extract_strided_slice %47 {offsets = [0, 19], sizes = [8, 1], strides = [1, 1]} : vector<8x25xf32> to vector<8x1xf32>
    %286 = vector.extract_strided_slice %264 {offsets = [0, 4], sizes = [8, 192], strides = [1, 1]} : vector<8x196xf32> to vector<8x192xf32>
    %287 = vector.broadcast %285 : vector<8x1xf32> to vector<8x192xf32>
    %288 = arith.mulf %287, %286 : vector<8x192xf32>
    %289 = arith.addf %284, %288 : vector<8x192xf32>
    %c0_45 = arith.constant 0 : index
    %c390 = arith.constant 390 : index
    %290 = vector.load %arg9[%c0_45, %c390] : memref<8x688xf32, #tpu.memory_space<vmem>>, vector<8x196xf32>
    %291 = vector.extract_strided_slice %47 {offsets = [0, 20], sizes = [8, 1], strides = [1, 1]} : vector<8x25xf32> to vector<8x1xf32>
    %292 = vector.extract_strided_slice %290 {offsets = [0, 0], sizes = [8, 192], strides = [1, 1]} : vector<8x196xf32> to vector<8x192xf32>
    %293 = vector.broadcast %291 : vector<8x1xf32> to vector<8x192xf32>
    %294 = arith.mulf %293, %292 : vector<8x192xf32>
    %295 = arith.addf %289, %294 : vector<8x192xf32>
    %296 = vector.extract_strided_slice %47 {offsets = [0, 21], sizes = [8, 1], strides = [1, 1]} : vector<8x25xf32> to vector<8x1xf32>
    %297 = vector.extract_strided_slice %290 {offsets = [0, 1], sizes = [8, 192], strides = [1, 1]} : vector<8x196xf32> to vector<8x192xf32>
    %298 = vector.broadcast %296 : vector<8x1xf32> to vector<8x192xf32>
    %299 = arith.mulf %298, %297 : vector<8x192xf32>
    %300 = arith.addf %295, %299 : vector<8x192xf32>
    %301 = vector.extract_strided_slice %47 {offsets = [0, 22], sizes = [8, 1], strides = [1, 1]} : vector<8x25xf32> to vector<8x1xf32>
    %302 = vector.extract_strided_slice %290 {offsets = [0, 2], sizes = [8, 192], strides = [1, 1]} : vector<8x196xf32> to vector<8x192xf32>
    %303 = vector.broadcast %301 : vector<8x1xf32> to vector<8x192xf32>
    %304 = arith.mulf %303, %302 : vector<8x192xf32>
    %305 = arith.addf %300, %304 : vector<8x192xf32>
    %306 = vector.extract_strided_slice %47 {offsets = [0, 23], sizes = [8, 1], strides = [1, 1]} : vector<8x25xf32> to vector<8x1xf32>
    %307 = vector.extract_strided_slice %290 {offsets = [0, 3], sizes = [8, 192], strides = [1, 1]} : vector<8x196xf32> to vector<8x192xf32>
    %308 = vector.broadcast %306 : vector<8x1xf32> to vector<8x192xf32>
    %309 = arith.mulf %308, %307 : vector<8x192xf32>
    %310 = arith.addf %305, %309 : vector<8x192xf32>
    %311 = vector.extract_strided_slice %47 {offsets = [0, 24], sizes = [8, 1], strides = [1, 1]} : vector<8x25xf32> to vector<8x1xf32>
    %312 = vector.extract_strided_slice %290 {offsets = [0, 4], sizes = [8, 192], strides = [1, 1]} : vector<8x196xf32> to vector<8x192xf32>
    %313 = vector.broadcast %311 : vector<8x1xf32> to vector<8x192xf32>
    %314 = arith.mulf %313, %312 : vector<8x192xf32>
    %315 = arith.addf %310, %314 : vector<8x192xf32>
    %316 = vector.broadcast %48 : vector<8x1xf32> to vector<8x192xf32>
    %317 = arith.addf %315, %316 : vector<8x192xf32>
    %cst_46 = arith.constant 0.000000e+00 : f32
    %318 = vector.shape_cast %24 : vector<1x192xi1> to vector<1x192xi1>
    %319 = vector.broadcast %318 : vector<1x192xi1> to vector<8x192xi1>
    %320 = vector.broadcast %cst_46 : f32 to vector<8x192xf32>
    %321 = arith.select %319, %317, %320 : vector<8x192xi1>, vector<8x192xf32>
    %c0_47 = arith.constant 0 : index
    %c344_48 = arith.constant 344 : index
    %322 = vector.load %arg10[%c0_47, %c344_48] : memref<8x688xf32, #tpu.memory_space<vmem>>, vector<8x192xf32>
    tpu.vector_store %arg10[%c0_47, %c344_48], %321 {strides = array<i32>} : memref<8x688xf32, #tpu.memory_space<vmem>>, vector<8x192xf32>,
    %c0_49 = arith.constant 0 : index
    %c2 = arith.constant 2 : index
    %323 = vector.load %arg10[%c0_49, %c2] : memref<8x688xf32, #tpu.memory_space<vmem>>, vector<8x204xf32>
    %324 = vector.extract_strided_slice %49 {offsets = [0, 0], sizes = [8, 1], strides = [1, 1]} : vector<8x25xf32> to vector<8x1xf32>
    %325 = vector.extract_strided_slice %323 {offsets = [0, 0], sizes = [8, 192], strides = [1, 1]} : vector<8x204xf32> to vector<8x192xf32>
    %326 = vector.broadcast %324 : vector<8x1xf32> to vector<8x192xf32>
    %327 = arith.mulf %326, %325 : vector<8x192xf32>
    %328 = vector.extract_strided_slice %49 {offsets = [0, 1], sizes = [8, 1], strides = [1, 1]} : vector<8x25xf32> to vector<8x1xf32>
    %329 = vector.extract_strided_slice %323 {offsets = [0, 3], sizes = [8, 192], strides = [1, 1]} : vector<8x204xf32> to vector<8x192xf32>
    %330 = vector.broadcast %328 : vector<8x1xf32> to vector<8x192xf32>
    %331 = arith.mulf %330, %329 : vector<8x192xf32>
    %332 = arith.addf %327, %331 : vector<8x192xf32>
    %333 = vector.extract_strided_slice %49 {offsets = [0, 2], sizes = [8, 1], strides = [1, 1]} : vector<8x25xf32> to vector<8x1xf32>
    %334 = vector.extract_strided_slice %323 {offsets = [0, 6], sizes = [8, 192], strides = [1, 1]} : vector<8x204xf32> to vector<8x192xf32>
    %335 = vector.broadcast %333 : vector<8x1xf32> to vector<8x192xf32>
    %336 = arith.mulf %335, %334 : vector<8x192xf32>
    %337 = arith.addf %332, %336 : vector<8x192xf32>
    %338 = vector.extract_strided_slice %49 {offsets = [0, 3], sizes = [8, 1], strides = [1, 1]} : vector<8x25xf32> to vector<8x1xf32>
    %339 = vector.extract_strided_slice %323 {offsets = [0, 9], sizes = [8, 192], strides = [1, 1]} : vector<8x204xf32> to vector<8x192xf32>
    %340 = vector.broadcast %338 : vector<8x1xf32> to vector<8x192xf32>
    %341 = arith.mulf %340, %339 : vector<8x192xf32>
    %342 = arith.addf %337, %341 : vector<8x192xf32>
    %343 = vector.extract_strided_slice %49 {offsets = [0, 4], sizes = [8, 1], strides = [1, 1]} : vector<8x25xf32> to vector<8x1xf32>
    %344 = vector.extract_strided_slice %323 {offsets = [0, 12], sizes = [8, 192], strides = [1, 1]} : vector<8x204xf32> to vector<8x192xf32>
    %345 = vector.broadcast %343 : vector<8x1xf32> to vector<8x192xf32>
    %346 = arith.mulf %345, %344 : vector<8x192xf32>
    %347 = arith.addf %342, %346 : vector<8x192xf32>
    %c0_50 = arith.constant 0 : index
    %c74 = arith.constant 74 : index
    %348 = vector.load %arg10[%c0_50, %c74] : memref<8x688xf32, #tpu.memory_space<vmem>>, vector<8x204xf32>
    %349 = vector.extract_strided_slice %49 {offsets = [0, 5], sizes = [8, 1], strides = [1, 1]} : vector<8x25xf32> to vector<8x1xf32>
    %350 = vector.extract_strided_slice %348 {offsets = [0, 0], sizes = [8, 192], strides = [1, 1]} : vector<8x204xf32> to vector<8x192xf32>
    %351 = vector.broadcast %349 : vector<8x1xf32> to vector<8x192xf32>
    %352 = arith.mulf %351, %350 : vector<8x192xf32>
    %353 = arith.addf %347, %352 : vector<8x192xf32>
    %354 = vector.extract_strided_slice %49 {offsets = [0, 6], sizes = [8, 1], strides = [1, 1]} : vector<8x25xf32> to vector<8x1xf32>
    %355 = vector.extract_strided_slice %348 {offsets = [0, 3], sizes = [8, 192], strides = [1, 1]} : vector<8x204xf32> to vector<8x192xf32>
    %356 = vector.broadcast %354 : vector<8x1xf32> to vector<8x192xf32>
    %357 = arith.mulf %356, %355 : vector<8x192xf32>
    %358 = arith.addf %353, %357 : vector<8x192xf32>
    %359 = vector.extract_strided_slice %49 {offsets = [0, 7], sizes = [8, 1], strides = [1, 1]} : vector<8x25xf32> to vector<8x1xf32>
    %360 = vector.extract_strided_slice %348 {offsets = [0, 6], sizes = [8, 192], strides = [1, 1]} : vector<8x204xf32> to vector<8x192xf32>
    %361 = vector.broadcast %359 : vector<8x1xf32> to vector<8x192xf32>
    %362 = arith.mulf %361, %360 : vector<8x192xf32>
    %363 = arith.addf %358, %362 : vector<8x192xf32>
    %364 = vector.extract_strided_slice %49 {offsets = [0, 8], sizes = [8, 1], strides = [1, 1]} : vector<8x25xf32> to vector<8x1xf32>
    %365 = vector.extract_strided_slice %348 {offsets = [0, 9], sizes = [8, 192], strides = [1, 1]} : vector<8x204xf32> to vector<8x192xf32>
    %366 = vector.broadcast %364 : vector<8x1xf32> to vector<8x192xf32>
    %367 = arith.mulf %366, %365 : vector<8x192xf32>
    %368 = arith.addf %363, %367 : vector<8x192xf32>
    %369 = vector.extract_strided_slice %49 {offsets = [0, 9], sizes = [8, 1], strides = [1, 1]} : vector<8x25xf32> to vector<8x1xf32>
    %370 = vector.extract_strided_slice %348 {offsets = [0, 12], sizes = [8, 192], strides = [1, 1]} : vector<8x204xf32> to vector<8x192xf32>
    %371 = vector.broadcast %369 : vector<8x1xf32> to vector<8x192xf32>
    %372 = arith.mulf %371, %370 : vector<8x192xf32>
    %373 = arith.addf %368, %372 : vector<8x192xf32>
    %c0_51 = arith.constant 0 : index
    %c146 = arith.constant 146 : index
    %374 = vector.load %arg10[%c0_51, %c146] : memref<8x688xf32, #tpu.memory_space<vmem>>, vector<8x204xf32>
    %375 = vector.extract_strided_slice %49 {offsets = [0, 10], sizes = [8, 1], strides = [1, 1]} : vector<8x25xf32> to vector<8x1xf32>
    %376 = vector.extract_strided_slice %374 {offsets = [0, 0], sizes = [8, 192], strides = [1, 1]} : vector<8x204xf32> to vector<8x192xf32>
    %377 = vector.broadcast %375 : vector<8x1xf32> to vector<8x192xf32>
    %378 = arith.mulf %377, %376 : vector<8x192xf32>
    %379 = arith.addf %373, %378 : vector<8x192xf32>
    %380 = vector.extract_strided_slice %49 {offsets = [0, 11], sizes = [8, 1], strides = [1, 1]} : vector<8x25xf32> to vector<8x1xf32>
    %381 = vector.extract_strided_slice %374 {offsets = [0, 3], sizes = [8, 192], strides = [1, 1]} : vector<8x204xf32> to vector<8x192xf32>
    %382 = vector.broadcast %380 : vector<8x1xf32> to vector<8x192xf32>
    %383 = arith.mulf %382, %381 : vector<8x192xf32>
    %384 = arith.addf %379, %383 : vector<8x192xf32>
    %385 = vector.extract_strided_slice %49 {offsets = [0, 12], sizes = [8, 1], strides = [1, 1]} : vector<8x25xf32> to vector<8x1xf32>
    %386 = vector.extract_strided_slice %374 {offsets = [0, 6], sizes = [8, 192], strides = [1, 1]} : vector<8x204xf32> to vector<8x192xf32>
    %387 = vector.broadcast %385 : vector<8x1xf32> to vector<8x192xf32>
    %388 = arith.mulf %387, %386 : vector<8x192xf32>
    %389 = arith.addf %384, %388 : vector<8x192xf32>
    %390 = vector.extract_strided_slice %49 {offsets = [0, 13], sizes = [8, 1], strides = [1, 1]} : vector<8x25xf32> to vector<8x1xf32>
    %391 = vector.extract_strided_slice %374 {offsets = [0, 9], sizes = [8, 192], strides = [1, 1]} : vector<8x204xf32> to vector<8x192xf32>
    %392 = vector.broadcast %390 : vector<8x1xf32> to vector<8x192xf32>
    %393 = arith.mulf %392, %391 : vector<8x192xf32>
    %394 = arith.addf %389, %393 : vector<8x192xf32>
    %395 = vector.extract_strided_slice %49 {offsets = [0, 14], sizes = [8, 1], strides = [1, 1]} : vector<8x25xf32> to vector<8x1xf32>
    %396 = vector.extract_strided_slice %374 {offsets = [0, 12], sizes = [8, 192], strides = [1, 1]} : vector<8x204xf32> to vector<8x192xf32>
    %397 = vector.broadcast %395 : vector<8x1xf32> to vector<8x192xf32>
    %398 = arith.mulf %397, %396 : vector<8x192xf32>
    %399 = arith.addf %394, %398 : vector<8x192xf32>
    %c0_52 = arith.constant 0 : index
    %c218 = arith.constant 218 : index
    %400 = vector.load %arg10[%c0_52, %c218] : memref<8x688xf32, #tpu.memory_space<vmem>>, vector<8x204xf32>
    %401 = vector.extract_strided_slice %49 {offsets = [0, 15], sizes = [8, 1], strides = [1, 1]} : vector<8x25xf32> to vector<8x1xf32>
    %402 = vector.extract_strided_slice %400 {offsets = [0, 0], sizes = [8, 192], strides = [1, 1]} : vector<8x204xf32> to vector<8x192xf32>
    %403 = vector.broadcast %401 : vector<8x1xf32> to vector<8x192xf32>
    %404 = arith.mulf %403, %402 : vector<8x192xf32>
    %405 = arith.addf %399, %404 : vector<8x192xf32>
    %406 = vector.extract_strided_slice %49 {offsets = [0, 16], sizes = [8, 1], strides = [1, 1]} : vector<8x25xf32> to vector<8x1xf32>
    %407 = vector.extract_strided_slice %400 {offsets = [0, 3], sizes = [8, 192], strides = [1, 1]} : vector<8x204xf32> to vector<8x192xf32>
    %408 = vector.broadcast %406 : vector<8x1xf32> to vector<8x192xf32>
    %409 = arith.mulf %408, %407 : vector<8x192xf32>
    %410 = arith.addf %405, %409 : vector<8x192xf32>
    %411 = vector.extract_strided_slice %49 {offsets = [0, 17], sizes = [8, 1], strides = [1, 1]} : vector<8x25xf32> to vector<8x1xf32>
    %412 = vector.extract_strided_slice %400 {offsets = [0, 6], sizes = [8, 192], strides = [1, 1]} : vector<8x204xf32> to vector<8x192xf32>
    %413 = vector.broadcast %411 : vector<8x1xf32> to vector<8x192xf32>
    %414 = arith.mulf %413, %412 : vector<8x192xf32>
    %415 = arith.addf %410, %414 : vector<8x192xf32>
    %416 = vector.extract_strided_slice %49 {offsets = [0, 18], sizes = [8, 1], strides = [1, 1]} : vector<8x25xf32> to vector<8x1xf32>
    %417 = vector.extract_strided_slice %400 {offsets = [0, 9], sizes = [8, 192], strides = [1, 1]} : vector<8x204xf32> to vector<8x192xf32>
    %418 = vector.broadcast %416 : vector<8x1xf32> to vector<8x192xf32>
    %419 = arith.mulf %418, %417 : vector<8x192xf32>
    %420 = arith.addf %415, %419 : vector<8x192xf32>
    %421 = vector.extract_strided_slice %49 {offsets = [0, 19], sizes = [8, 1], strides = [1, 1]} : vector<8x25xf32> to vector<8x1xf32>
    %422 = vector.extract_strided_slice %400 {offsets = [0, 12], sizes = [8, 192], strides = [1, 1]} : vector<8x204xf32> to vector<8x192xf32>
    %423 = vector.broadcast %421 : vector<8x1xf32> to vector<8x192xf32>
    %424 = arith.mulf %423, %422 : vector<8x192xf32>
    %425 = arith.addf %420, %424 : vector<8x192xf32>
    %c0_53 = arith.constant 0 : index
    %c290 = arith.constant 290 : index
    %426 = vector.load %arg10[%c0_53, %c290] : memref<8x688xf32, #tpu.memory_space<vmem>>, vector<8x204xf32>
    %427 = vector.extract_strided_slice %49 {offsets = [0, 20], sizes = [8, 1], strides = [1, 1]} : vector<8x25xf32> to vector<8x1xf32>
    %428 = vector.extract_strided_slice %426 {offsets = [0, 0], sizes = [8, 192], strides = [1, 1]} : vector<8x204xf32> to vector<8x192xf32>
    %429 = vector.broadcast %427 : vector<8x1xf32> to vector<8x192xf32>
    %430 = arith.mulf %429, %428 : vector<8x192xf32>
    %431 = arith.addf %425, %430 : vector<8x192xf32>
    %432 = vector.extract_strided_slice %49 {offsets = [0, 21], sizes = [8, 1], strides = [1, 1]} : vector<8x25xf32> to vector<8x1xf32>
    %433 = vector.extract_strided_slice %426 {offsets = [0, 3], sizes = [8, 192], strides = [1, 1]} : vector<8x204xf32> to vector<8x192xf32>
    %434 = vector.broadcast %432 : vector<8x1xf32> to vector<8x192xf32>
    %435 = arith.mulf %434, %433 : vector<8x192xf32>
    %436 = arith.addf %431, %435 : vector<8x192xf32>
    %437 = vector.extract_strided_slice %49 {offsets = [0, 22], sizes = [8, 1], strides = [1, 1]} : vector<8x25xf32> to vector<8x1xf32>
    %438 = vector.extract_strided_slice %426 {offsets = [0, 6], sizes = [8, 192], strides = [1, 1]} : vector<8x204xf32> to vector<8x192xf32>
    %439 = vector.broadcast %437 : vector<8x1xf32> to vector<8x192xf32>
    %440 = arith.mulf %439, %438 : vector<8x192xf32>
    %441 = arith.addf %436, %440 : vector<8x192xf32>
    %442 = vector.extract_strided_slice %49 {offsets = [0, 23], sizes = [8, 1], strides = [1, 1]} : vector<8x25xf32> to vector<8x1xf32>
    %443 = vector.extract_strided_slice %426 {offsets = [0, 9], sizes = [8, 192], strides = [1, 1]} : vector<8x204xf32> to vector<8x192xf32>
    %444 = vector.broadcast %442 : vector<8x1xf32> to vector<8x192xf32>
    %445 = arith.mulf %444, %443 : vector<8x192xf32>
    %446 = arith.addf %441, %445 : vector<8x192xf32>
    %447 = vector.extract_strided_slice %49 {offsets = [0, 24], sizes = [8, 1], strides = [1, 1]} : vector<8x25xf32> to vector<8x1xf32>
    %448 = vector.extract_strided_slice %426 {offsets = [0, 12], sizes = [8, 192], strides = [1, 1]} : vector<8x204xf32> to vector<8x192xf32>
    %449 = vector.broadcast %447 : vector<8x1xf32> to vector<8x192xf32>
    %450 = arith.mulf %449, %448 : vector<8x192xf32>
    %451 = arith.addf %446, %450 : vector<8x192xf32>
    %c0_54 = arith.constant 0 : index
    %c0_55 = arith.constant 0 : index
    %c0_56 = arith.constant 0 : index
    %452 = vector.load %arg1[%c0_54, %c0_55, %c0_56] : memref<1x8x384xf32, #tpu.memory_space<vmem>>, vector<1x8x192xf32>
    %453 = vector.shape_cast %452 : vector<1x8x192xf32> to vector<8x192xf32>
    %454 = vector.broadcast %50 : vector<8x1xf32> to vector<8x192xf32>
    %455 = arith.addf %451, %454 : vector<8x192xf32>
    %456 = arith.mulf %453, %455 : vector<8x192xf32>
    %c0_57 = arith.constant 0 : index
    %c0_58 = arith.constant 0 : index
    %c0_59 = arith.constant 0 : index
    %457 = vector.load %arg8[%c0_57, %c0_58, %c0_59] : memref<1x8x384xf32, #tpu.memory_space<vmem>>, vector<1x8x192xf32>
    %458 = vector.shape_cast %457 : vector<1x8x192xf32> to vector<8x192xf32>
    %459 = vector.shape_cast %456 : vector<8x192xf32> to vector<1x8x192xf32>
    tpu.vector_store %arg8[%c0_57, %c0_58, %c0_59], %459 {strides = array<i32>} : memref<1x8x384xf32, #tpu.memory_space<vmem>>, vector<1x8x192xf32>,
    %c0_60 = arith.constant 0 : index
    %c194 = arith.constant 194 : index
    %460 = vector.load %arg10[%c0_60, %c194] : memref<8x688xf32, #tpu.memory_space<vmem>>, vector<8x204xf32>
    %461 = vector.extract_strided_slice %49 {offsets = [0, 0], sizes = [8, 1], strides = [1, 1]} : vector<8x25xf32> to vector<8x1xf32>
    %462 = vector.extract_strided_slice %460 {offsets = [0, 0], sizes = [8, 192], strides = [1, 1]} : vector<8x204xf32> to vector<8x192xf32>
    %463 = vector.broadcast %461 : vector<8x1xf32> to vector<8x192xf32>
    %464 = arith.mulf %463, %462 : vector<8x192xf32>
    %465 = vector.extract_strided_slice %49 {offsets = [0, 1], sizes = [8, 1], strides = [1, 1]} : vector<8x25xf32> to vector<8x1xf32>
    %466 = vector.extract_strided_slice %460 {offsets = [0, 3], sizes = [8, 192], strides = [1, 1]} : vector<8x204xf32> to vector<8x192xf32>
    %467 = vector.broadcast %465 : vector<8x1xf32> to vector<8x192xf32>
    %468 = arith.mulf %467, %466 : vector<8x192xf32>
    %469 = arith.addf %464, %468 : vector<8x192xf32>
    %470 = vector.extract_strided_slice %49 {offsets = [0, 2], sizes = [8, 1], strides = [1, 1]} : vector<8x25xf32> to vector<8x1xf32>
    %471 = vector.extract_strided_slice %460 {offsets = [0, 6], sizes = [8, 192], strides = [1, 1]} : vector<8x204xf32> to vector<8x192xf32>
    %472 = vector.broadcast %470 : vector<8x1xf32> to vector<8x192xf32>
    %473 = arith.mulf %472, %471 : vector<8x192xf32>
    %474 = arith.addf %469, %473 : vector<8x192xf32>
    %475 = vector.extract_strided_slice %49 {offsets = [0, 3], sizes = [8, 1], strides = [1, 1]} : vector<8x25xf32> to vector<8x1xf32>
    %476 = vector.extract_strided_slice %460 {offsets = [0, 9], sizes = [8, 192], strides = [1, 1]} : vector<8x204xf32> to vector<8x192xf32>
    %477 = vector.broadcast %475 : vector<8x1xf32> to vector<8x192xf32>
    %478 = arith.mulf %477, %476 : vector<8x192xf32>
    %479 = arith.addf %474, %478 : vector<8x192xf32>
    %480 = vector.extract_strided_slice %49 {offsets = [0, 4], sizes = [8, 1], strides = [1, 1]} : vector<8x25xf32> to vector<8x1xf32>
    %481 = vector.extract_strided_slice %460 {offsets = [0, 12], sizes = [8, 192], strides = [1, 1]} : vector<8x204xf32> to vector<8x192xf32>
    %482 = vector.broadcast %480 : vector<8x1xf32> to vector<8x192xf32>
    %483 = arith.mulf %482, %481 : vector<8x192xf32>
    %484 = arith.addf %479, %483 : vector<8x192xf32>
    %c0_61 = arith.constant 0 : index
    %c266 = arith.constant 266 : index
    %485 = vector.load %arg10[%c0_61, %c266] : memref<8x688xf32, #tpu.memory_space<vmem>>, vector<8x204xf32>
    %486 = vector.extract_strided_slice %49 {offsets = [0, 5], sizes = [8, 1], strides = [1, 1]} : vector<8x25xf32> to vector<8x1xf32>
    %487 = vector.extract_strided_slice %485 {offsets = [0, 0], sizes = [8, 192], strides = [1, 1]} : vector<8x204xf32> to vector<8x192xf32>
    %488 = vector.broadcast %486 : vector<8x1xf32> to vector<8x192xf32>
    %489 = arith.mulf %488, %487 : vector<8x192xf32>
    %490 = arith.addf %484, %489 : vector<8x192xf32>
    %491 = vector.extract_strided_slice %49 {offsets = [0, 6], sizes = [8, 1], strides = [1, 1]} : vector<8x25xf32> to vector<8x1xf32>
    %492 = vector.extract_strided_slice %485 {offsets = [0, 3], sizes = [8, 192], strides = [1, 1]} : vector<8x204xf32> to vector<8x192xf32>
    %493 = vector.broadcast %491 : vector<8x1xf32> to vector<8x192xf32>
    %494 = arith.mulf %493, %492 : vector<8x192xf32>
    %495 = arith.addf %490, %494 : vector<8x192xf32>
    %496 = vector.extract_strided_slice %49 {offsets = [0, 7], sizes = [8, 1], strides = [1, 1]} : vector<8x25xf32> to vector<8x1xf32>
    %497 = vector.extract_strided_slice %485 {offsets = [0, 6], sizes = [8, 192], strides = [1, 1]} : vector<8x204xf32> to vector<8x192xf32>
    %498 = vector.broadcast %496 : vector<8x1xf32> to vector<8x192xf32>
    %499 = arith.mulf %498, %497 : vector<8x192xf32>
    %500 = arith.addf %495, %499 : vector<8x192xf32>
    %501 = vector.extract_strided_slice %49 {offsets = [0, 8], sizes = [8, 1], strides = [1, 1]} : vector<8x25xf32> to vector<8x1xf32>
    %502 = vector.extract_strided_slice %485 {offsets = [0, 9], sizes = [8, 192], strides = [1, 1]} : vector<8x204xf32> to vector<8x192xf32>
    %503 = vector.broadcast %501 : vector<8x1xf32> to vector<8x192xf32>
    %504 = arith.mulf %503, %502 : vector<8x192xf32>
    %505 = arith.addf %500, %504 : vector<8x192xf32>
    %506 = vector.extract_strided_slice %49 {offsets = [0, 9], sizes = [8, 1], strides = [1, 1]} : vector<8x25xf32> to vector<8x1xf32>
    %507 = vector.extract_strided_slice %485 {offsets = [0, 12], sizes = [8, 192], strides = [1, 1]} : vector<8x204xf32> to vector<8x192xf32>
    %508 = vector.broadcast %506 : vector<8x1xf32> to vector<8x192xf32>
    %509 = arith.mulf %508, %507 : vector<8x192xf32>
    %510 = arith.addf %505, %509 : vector<8x192xf32>
    %c0_62 = arith.constant 0 : index
    %c338 = arith.constant 338 : index
    %511 = vector.load %arg10[%c0_62, %c338] : memref<8x688xf32, #tpu.memory_space<vmem>>, vector<8x204xf32>
    %512 = vector.extract_strided_slice %49 {offsets = [0, 10], sizes = [8, 1], strides = [1, 1]} : vector<8x25xf32> to vector<8x1xf32>
    %513 = vector.extract_strided_slice %511 {offsets = [0, 0], sizes = [8, 192], strides = [1, 1]} : vector<8x204xf32> to vector<8x192xf32>
    %514 = vector.broadcast %512 : vector<8x1xf32> to vector<8x192xf32>
    %515 = arith.mulf %514, %513 : vector<8x192xf32>
    %516 = arith.addf %510, %515 : vector<8x192xf32>
    %517 = vector.extract_strided_slice %49 {offsets = [0, 11], sizes = [8, 1], strides = [1, 1]} : vector<8x25xf32> to vector<8x1xf32>
    %518 = vector.extract_strided_slice %511 {offsets = [0, 3], sizes = [8, 192], strides = [1, 1]} : vector<8x204xf32> to vector<8x192xf32>
    %519 = vector.broadcast %517 : vector<8x1xf32> to vector<8x192xf32>
    %520 = arith.mulf %519, %518 : vector<8x192xf32>
    %521 = arith.addf %516, %520 : vector<8x192xf32>
    %522 = vector.extract_strided_slice %49 {offsets = [0, 12], sizes = [8, 1], strides = [1, 1]} : vector<8x25xf32> to vector<8x1xf32>
    %523 = vector.extract_strided_slice %511 {offsets = [0, 6], sizes = [8, 192], strides = [1, 1]} : vector<8x204xf32> to vector<8x192xf32>
    %524 = vector.broadcast %522 : vector<8x1xf32> to vector<8x192xf32>
    %525 = arith.mulf %524, %523 : vector<8x192xf32>
    %526 = arith.addf %521, %525 : vector<8x192xf32>
    %527 = vector.extract_strided_slice %49 {offsets = [0, 13], sizes = [8, 1], strides = [1, 1]} : vector<8x25xf32> to vector<8x1xf32>
    %528 = vector.extract_strided_slice %511 {offsets = [0, 9], sizes = [8, 192], strides = [1, 1]} : vector<8x204xf32> to vector<8x192xf32>
    %529 = vector.broadcast %527 : vector<8x1xf32> to vector<8x192xf32>
    %530 = arith.mulf %529, %528 : vector<8x192xf32>
    %531 = arith.addf %526, %530 : vector<8x192xf32>
    %532 = vector.extract_strided_slice %49 {offsets = [0, 14], sizes = [8, 1], strides = [1, 1]} : vector<8x25xf32> to vector<8x1xf32>
    %533 = vector.extract_strided_slice %511 {offsets = [0, 12], sizes = [8, 192], strides = [1, 1]} : vector<8x204xf32> to vector<8x192xf32>
    %534 = vector.broadcast %532 : vector<8x1xf32> to vector<8x192xf32>
    %535 = arith.mulf %534, %533 : vector<8x192xf32>
    %536 = arith.addf %531, %535 : vector<8x192xf32>
    %c0_63 = arith.constant 0 : index
    %c410 = arith.constant 410 : index
    %537 = vector.load %arg10[%c0_63, %c410] : memref<8x688xf32, #tpu.memory_space<vmem>>, vector<8x204xf32>
    %538 = vector.extract_strided_slice %49 {offsets = [0, 15], sizes = [8, 1], strides = [1, 1]} : vector<8x25xf32> to vector<8x1xf32>
    %539 = vector.extract_strided_slice %537 {offsets = [0, 0], sizes = [8, 192], strides = [1, 1]} : vector<8x204xf32> to vector<8x192xf32>
    %540 = vector.broadcast %538 : vector<8x1xf32> to vector<8x192xf32>
    %541 = arith.mulf %540, %539 : vector<8x192xf32>
    %542 = arith.addf %536, %541 : vector<8x192xf32>
    %543 = vector.extract_strided_slice %49 {offsets = [0, 16], sizes = [8, 1], strides = [1, 1]} : vector<8x25xf32> to vector<8x1xf32>
    %544 = vector.extract_strided_slice %537 {offsets = [0, 3], sizes = [8, 192], strides = [1, 1]} : vector<8x204xf32> to vector<8x192xf32>
    %545 = vector.broadcast %543 : vector<8x1xf32> to vector<8x192xf32>
    %546 = arith.mulf %545, %544 : vector<8x192xf32>
    %547 = arith.addf %542, %546 : vector<8x192xf32>
    %548 = vector.extract_strided_slice %49 {offsets = [0, 17], sizes = [8, 1], strides = [1, 1]} : vector<8x25xf32> to vector<8x1xf32>
    %549 = vector.extract_strided_slice %537 {offsets = [0, 6], sizes = [8, 192], strides = [1, 1]} : vector<8x204xf32> to vector<8x192xf32>
    %550 = vector.broadcast %548 : vector<8x1xf32> to vector<8x192xf32>
    %551 = arith.mulf %550, %549 : vector<8x192xf32>
    %552 = arith.addf %547, %551 : vector<8x192xf32>
    %553 = vector.extract_strided_slice %49 {offsets = [0, 18], sizes = [8, 1], strides = [1, 1]} : vector<8x25xf32> to vector<8x1xf32>
    %554 = vector.extract_strided_slice %537 {offsets = [0, 9], sizes = [8, 192], strides = [1, 1]} : vector<8x204xf32> to vector<8x192xf32>
    %555 = vector.broadcast %553 : vector<8x1xf32> to vector<8x192xf32>
    %556 = arith.mulf %555, %554 : vector<8x192xf32>
    %557 = arith.addf %552, %556 : vector<8x192xf32>
    %558 = vector.extract_strided_slice %49 {offsets = [0, 19], sizes = [8, 1], strides = [1, 1]} : vector<8x25xf32> to vector<8x1xf32>
    %559 = vector.extract_strided_slice %537 {offsets = [0, 12], sizes = [8, 192], strides = [1, 1]} : vector<8x204xf32> to vector<8x192xf32>
    %560 = vector.broadcast %558 : vector<8x1xf32> to vector<8x192xf32>
    %561 = arith.mulf %560, %559 : vector<8x192xf32>
    %562 = arith.addf %557, %561 : vector<8x192xf32>
    %c0_64 = arith.constant 0 : index
    %c482 = arith.constant 482 : index
    %563 = vector.load %arg10[%c0_64, %c482] : memref<8x688xf32, #tpu.memory_space<vmem>>, vector<8x204xf32>
    %564 = vector.extract_strided_slice %49 {offsets = [0, 20], sizes = [8, 1], strides = [1, 1]} : vector<8x25xf32> to vector<8x1xf32>
    %565 = vector.extract_strided_slice %563 {offsets = [0, 0], sizes = [8, 192], strides = [1, 1]} : vector<8x204xf32> to vector<8x192xf32>
    %566 = vector.broadcast %564 : vector<8x1xf32> to vector<8x192xf32>
    %567 = arith.mulf %566, %565 : vector<8x192xf32>
    %568 = arith.addf %562, %567 : vector<8x192xf32>
    %569 = vector.extract_strided_slice %49 {offsets = [0, 21], sizes = [8, 1], strides = [1, 1]} : vector<8x25xf32> to vector<8x1xf32>
    %570 = vector.extract_strided_slice %563 {offsets = [0, 3], sizes = [8, 192], strides = [1, 1]} : vector<8x204xf32> to vector<8x192xf32>
    %571 = vector.broadcast %569 : vector<8x1xf32> to vector<8x192xf32>
    %572 = arith.mulf %571, %570 : vector<8x192xf32>
    %573 = arith.addf %568, %572 : vector<8x192xf32>
    %574 = vector.extract_strided_slice %49 {offsets = [0, 22], sizes = [8, 1], strides = [1, 1]} : vector<8x25xf32> to vector<8x1xf32>
    %575 = vector.extract_strided_slice %563 {offsets = [0, 6], sizes = [8, 192], strides = [1, 1]} : vector<8x204xf32> to vector<8x192xf32>
    %576 = vector.broadcast %574 : vector<8x1xf32> to vector<8x192xf32>
    %577 = arith.mulf %576, %575 : vector<8x192xf32>
    %578 = arith.addf %573, %577 : vector<8x192xf32>
    %579 = vector.extract_strided_slice %49 {offsets = [0, 23], sizes = [8, 1], strides = [1, 1]} : vector<8x25xf32> to vector<8x1xf32>
    %580 = vector.extract_strided_slice %563 {offsets = [0, 9], sizes = [8, 192], strides = [1, 1]} : vector<8x204xf32> to vector<8x192xf32>
    %581 = vector.broadcast %579 : vector<8x1xf32> to vector<8x192xf32>
    %582 = arith.mulf %581, %580 : vector<8x192xf32>
    %583 = arith.addf %578, %582 : vector<8x192xf32>
    %584 = vector.extract_strided_slice %49 {offsets = [0, 24], sizes = [8, 1], strides = [1, 1]} : vector<8x25xf32> to vector<8x1xf32>
    %585 = vector.extract_strided_slice %563 {offsets = [0, 12], sizes = [8, 192], strides = [1, 1]} : vector<8x204xf32> to vector<8x192xf32>
    %586 = vector.broadcast %584 : vector<8x1xf32> to vector<8x192xf32>
    %587 = arith.mulf %586, %585 : vector<8x192xf32>
    %588 = arith.addf %583, %587 : vector<8x192xf32>
    %c0_65 = arith.constant 0 : index
    %c0_66 = arith.constant 0 : index
    %c192_67 = arith.constant 192 : index
    %589 = vector.load %arg1[%c0_65, %c0_66, %c192_67] : memref<1x8x384xf32, #tpu.memory_space<vmem>>, vector<1x8x192xf32>
    %590 = vector.shape_cast %589 : vector<1x8x192xf32> to vector<8x192xf32>
    %591 = vector.broadcast %50 : vector<8x1xf32> to vector<8x192xf32>
    %592 = arith.addf %588, %591 : vector<8x192xf32>
    %593 = arith.mulf %590, %592 : vector<8x192xf32>
    %c0_68 = arith.constant 0 : index
    %c0_69 = arith.constant 0 : index
    %c192_70 = arith.constant 192 : index
    %594 = vector.load %arg8[%c0_68, %c0_69, %c192_70] : memref<1x8x384xf32, #tpu.memory_space<vmem>>, vector<1x8x192xf32>
    %595 = vector.shape_cast %594 : vector<1x8x192xf32> to vector<8x192xf32>
    %596 = vector.shape_cast %593 : vector<8x192xf32> to vector<1x8x192xf32>
    tpu.vector_store %arg8[%c0_68, %c0_69, %c192_70], %596 {strides = array<i32>} : memref<1x8x384xf32, #tpu.memory_space<vmem>>, vector<1x8x192xf32>,
    return
  }
  func.func @transform_0(%arg0: i32) -> (i32, i32, i32) {
    %c0_i32 = arith.constant 0 : i32
    %c0_i32_0 = arith.constant 0 : i32
    %c0_i32_1 = arith.constant 0 : i32
    return %arg0, %c0_i32, %c0_i32_0 : i32, i32, i32
  }
  func.func @transform_1(%arg0: i32) -> (i32, i32) {
    %c0_i32 = arith.constant 0 : i32
    %c0_i32_0 = arith.constant 0 : i32
    %c0_i32_1 = arith.constant 0 : i32
    return %c0_i32, %c0_i32_0 : i32, i32
  }
  func.func @transform_2(%arg0: i32) -> (i32, i32) {
    %c0_i32 = arith.constant 0 : i32
    %c0_i32_0 = arith.constant 0 : i32
    %c0_i32_1 = arith.constant 0 : i32
    return %c0_i32, %c0_i32_0 : i32, i32
  }
  func.func @transform_3(%arg0: i32) -> (i32, i32) {
    %c0_i32 = arith.constant 0 : i32
    %c0_i32_0 = arith.constant 0 : i32
    %c0_i32_1 = arith.constant 0 : i32
    return %c0_i32, %c0_i32_0 : i32, i32
  }
  func.func @transform_4(%arg0: i32) -> (i32, i32) {
    %c0_i32 = arith.constant 0 : i32
    %c0_i32_0 = arith.constant 0 : i32
    %c0_i32_1 = arith.constant 0 : i32
    return %c0_i32, %c0_i32_0 : i32, i32
  }
  func.func @transform_5(%arg0: i32) -> (i32, i32) {
    %c0_i32 = arith.constant 0 : i32
    %c0_i32_0 = arith.constant 0 : i32
    %c0_i32_1 = arith.constant 0 : i32
    return %c0_i32, %c0_i32_0 : i32, i32
  }
  func.func @transform_6(%arg0: i32) -> (i32, i32) {
    %c0_i32 = arith.constant 0 : i32
    %c0_i32_0 = arith.constant 0 : i32
    %c0_i32_1 = arith.constant 0 : i32
    return %c0_i32, %c0_i32_0 : i32, i32
  }
  func.func @transform_7(%arg0: i32) -> (i32, i32, i32) {
    %c0_i32 = arith.constant 0 : i32
    %c0_i32_0 = arith.constant 0 : i32
    %c0_i32_1 = arith.constant 0 : i32
    return %arg0, %c0_i32, %c0_i32_0 : i32, i32, i32
  }
}

</mosaic_0001>

<llo_original>
// kernel: tpu_custom_call.1
$region0: #{tpu_custom_call.1}
  #allocation0 [shape = 'u32[]', space=smem, size = 0x4, offset = 0x4, fixed_abs, tag = 'smem constant byte address 0x4 - core index']
  #allocation1 [shape = 'u32[144,128]{1,0:T(1,128)}', space=vmem, size = 0x12000, scoped, tag = 'internal scratch']
  #allocation2 [shape = 'f32[8,688]{1,0:T(8,128)}', space=vmem, size = 0x6000, scoped, tag = 'scratch operand']
  #allocation3 [shape = 'f32[8,688]{1,0:T(8,128)}', space=vmem, size = 0x6000, scoped, tag = 'scratch operand']
  %s0 = inlined_call_operand.hbm [shape: f32[2,8,384], index: 0, kind: input, shape index: {}]
  %s1 = inlined_call_operand.vmem [shape: f32[8,8], index: 1, kind: input, shape index: {}]
  %s2 = inlined_call_operand.vmem [shape: f32[8,1], index: 2, kind: input, shape index: {}]
  %s3 = inlined_call_operand.vmem [shape: f32[8,25], index: 3, kind: input, shape index: {}]
  %s4 = inlined_call_operand.vmem [shape: f32[8,1], index: 4, kind: input, shape index: {}]
  %s5 = inlined_call_operand.vmem [shape: f32[8,25], index: 5, kind: input, shape index: {}]
  %s6 = inlined_call_operand.vmem [shape: f32[8,1], index: 6, kind: input, shape index: {}]
  %s7 = inlined_call_operand.hbm [shape: f32[2,8,384], index: 7, kind: output, shape index: {}]
  %s8 = sld [smem:[#allocation0]]
  $region65: #{tpu_custom_call.1} parent=0
    _
  %s10 = ssub.s32 1, %s8
  %s11 = scalar_select 0, %s10, %s8
  $region1: #{tpu_custom_call.1} parent=0
    #allocation4 [shape = 'u8[24576]{0}', space=vmem, size = 0x6000, scoped, tag = 'input window, operand 0']
    #allocation5 [shape = 's32[2]{0}', space=sflag, size = 0x8, scoped, tag = 'scoped memory for tpu_custom_call.1']
    #allocation6 [shape = 's32[2]{0}', space=sflag, size = 0x8, scoped, tag = 'scoped memory for tpu_custom_call.1']
    #allocation7 [shape = 'u8[24576]{0}', space=vmem, size = 0x6000, scoped, tag = 'output window, operand 0']
    %12 = vsyncpa [#allocation5], 0
    %s13 = scalar_lea.sflag [#allocation5], 1
    %14 = vsyncpa %s13, 0
    %15 = vsyncpa [#allocation6], 0
    %s16 = scalar_lea.sflag [#allocation6], 1
    %17 = vsyncpa %s16, 0
    loop: start=0, step=1, limit=4
    $region2: #{tpu_custom_call.1} parent=1 // loop_pre_header
      _
    $region3: #{tpu_custom_call.1} parent=1 // loop_header
      %s19 = sphi 0, %s23
      %p20 = scmp.ge.s32.totalorder %s19, 4
      %s29 = sphi 0, %s31
      %s32 = sphi 0, %s29
      %s33 = sphi 0, %s32
      %s49 = sphi 0, %s33
      %s53 = sphi 0, %s53
      %s55 = sphi 0, %s53
      %s56 = sphi 0, %s55
      %s70 = sphi 0, %s56
      %s74 = sphi 0, %s74
      %s76 = sphi 0, %s74
      %s77 = sphi 0, %s76
      %s91 = sphi 0, %s77
      %s95 = sphi 0, %s95
      %s97 = sphi 0, %s95
      %s98 = sphi 0, %s97
      %s112 = sphi 0, %s98
      %s116 = sphi 0, %s116
      %s118 = sphi 0, %s116
      %s119 = sphi 0, %s118
      %s133 = sphi 0, %s119
      %s137 = sphi 0, %s137
      %s139 = sphi 0, %s137
      %s140 = sphi 0, %s139
      %s154 = sphi 0, %s140
      %s158 = sphi 0, %s158
      %s160 = sphi 0, %s158
      %s161 = sphi 0, %s160
      %s175 = sphi 0, %s161
      %s181 = sphi 0, %s183
      %s184 = sphi 0, %s181
      %s185 = sphi 0, %s184
      %s201 = sphi 0, %s185
    $region4: #{tpu_custom_call.1} parent=1 // loop_header_branch
      %22 = sbr.rel (%p20) target = $region8
    $region5: #{tpu_custom_call.1} parent=1 // loop_body
      %s24 = ssub.s32 %s19, 1
      %s25 = ssub.s32 %s19, 2
      %s26 = sadd.s32 %s19, 1
      %s27 = ssub.s32 %s19, %s26
      %p28 = scmp.eq.s32.totalorder %s27, 0
      %s30 = sadd.s32 %s29, 1
      %s31 = scalar_select %p28, %s29, %s30
      %p34 = pneg %p28
      %p35 = scmp.eq.s32.totalorder %s19, 1
      %p36 = por %p34, %p35
      %p37 = scmp.ne.s32.totalorder %s29, %s32
      %p38 = scmp.eq.s32.totalorder %s19, 0
      %p39 = por %p37, %p38
      %p40 = scmp.ne.s32.totalorder %s29, %s32
      %p41 = scmp.eq.s32.totalorder %s24, 1
      %p42 = por %p40, %p41
      %p43 = scmp.ne.s32.totalorder %s32, %s33
      %p44 = scmp.eq.s32.totalorder %s24, 0
      %p45 = por %p43, %p44
      %p46 = scmp.ne.s32.totalorder %s32, %s33
      %p47 = scmp.eq.s32.totalorder %s25, 1
      %p48 = por %p46, %p47
      %p50 = scmp.ne.s32.totalorder %s33, %s49
      %p51 = scmp.eq.s32.totalorder %s25, 0
      %p52 = por %p50, %p51
      %s54 = sadd.s32 %s53, 1
      %p57 = scmp.eq.s32.totalorder %s19, 1
      %p58 = scmp.ne.s32.totalorder %s53, %s55
      %p59 = scmp.eq.s32.totalorder %s19, 0
      %p60 = por %p58, %p59
      %p61 = scmp.ne.s32.totalorder %s53, %s55
      %p62 = scmp.eq.s32.totalorder %s24, 1
      %p63 = por %p61, %p62
      %p64 = scmp.ne.s32.totalorder %s55, %s56
      %p65 = scmp.eq.s32.totalorder %s24, 0
      %p66 = por %p64, %p65
      %p67 = scmp.ne.s32.totalorder %s55, %s56
      %p68 = scmp.eq.s32.totalorder %s25, 1
      %p69 = por %p67, %p68
      %p71 = scmp.ne.s32.totalorder %s56, %s70
      %p72 = scmp.eq.s32.totalorder %s25, 0
      %p73 = por %p71, %p72
      %s75 = sadd.s32 %s74, 1
      %p78 = scmp.eq.s32.totalorder %s19, 1
      %p79 = scmp.ne.s32.totalorder %s74, %s76
      %p80 = scmp.eq.s32.totalorder %s19, 0
      %p81 = por %p79, %p80
      %p82 = scmp.ne.s32.totalorder %s74, %s76
      %p83 = scmp.eq.s32.totalorder %s24, 1
      %p84 = por %p82, %p83
      %p85 = scmp.ne.s32.totalorder %s76, %s77
      %p86 = scmp.eq.s32.totalorder %s24, 0
      %p87 = por %p85, %p86
      %p88 = scmp.ne.s32.totalorder %s76, %s77
      %p89 = scmp.eq.s32.totalorder %s25, 1
      %p90 = por %p88, %p89
      %p92 = scmp.ne.s32.totalorder %s77, %s91
      %p93 = scmp.eq.s32.totalorder %s25, 0
      %p94 = por %p92, %p93
      %s96 = sadd.s32 %s95, 1
      %p99 = scmp.eq.s32.totalorder %s19, 1
      %p100 = scmp.ne.s32.totalorder %s95, %s97
      %p101 = scmp.eq.s32.totalorder %s19, 0
      %p102 = por %p100, %p101
      %p103 = scmp.ne.s32.totalorder %s95, %s97
      %p104 = scmp.eq.s32.totalorder %s24, 1
      %p105 = por %p103, %p104
      %p106 = scmp.ne.s32.totalorder %s97, %s98
      %p107 = scmp.eq.s32.totalorder %s24, 0
      %p108 = por %p106, %p107
      %p109 = scmp.ne.s32.totalorder %s97, %s98
      %p110 = scmp.eq.s32.totalorder %s25, 1
      %p111 = por %p109, %p110
      %p113 = scmp.ne.s32.totalorder %s98, %s112
      %p114 = scmp.eq.s32.totalorder %s25, 0
      %p115 = por %p113, %p114
      %s117 = sadd.s32 %s116, 1
      %p120 = scmp.eq.s32.totalorder %s19, 1
      %p121 = scmp.ne.s32.totalorder %s116, %s118
      %p122 = scmp.eq.s32.totalorder %s19, 0
      %p123 = por %p121, %p122
      %p124 = scmp.ne.s32.totalorder %s116, %s118
      %p125 = scmp.eq.s32.totalorder %s24, 1
      %p126 = por %p124, %p125
      %p127 = scmp.ne.s32.totalorder %s118, %s119
      %p128 = scmp.eq.s32.totalorder %s24, 0
      %p129 = por %p127, %p128
      %p130 = scmp.ne.s32.totalorder %s118, %s119
      %p131 = scmp.eq.s32.totalorder %s25, 1
      %p132 = por %p130, %p131
      %p134 = scmp.ne.s32.totalorder %s119, %s133
      %p135 = scmp.eq.s32.totalorder %s25, 0
      %p136 = por %p134, %p135
      %s138 = sadd.s32 %s137, 1
      %p141 = scmp.eq.s32.totalorder %s19, 1
      %p142 = scmp.ne.s32.totalorder %s137, %s139
      %p143 = scmp.eq.s32.totalorder %s19, 0
      %p144 = por %p142, %p143
      %p145 = scmp.ne.s32.totalorder %s137, %s139
      %p146 = scmp.eq.s32.totalorder %s24, 1
      %p147 = por %p145, %p146
      %p148 = scmp.ne.s32.totalorder %s139, %s140
      %p149 = scmp.eq.s32.totalorder %s24, 0
      %p150 = por %p148, %p149
      %p151 = scmp.ne.s32.totalorder %s139, %s140
      %p152 = scmp.eq.s32.totalorder %s25, 1
      %p153 = por %p151, %p152
      %p155 = scmp.ne.s32.totalorder %s140, %s154
      %p156 = scmp.eq.s32.totalorder %s25, 0
      %p157 = por %p155, %p156
      %s159 = sadd.s32 %s158, 1
      %p162 = scmp.eq.s32.totalorder %s19, 1
      %p163 = scmp.ne.s32.totalorder %s158, %s160
      %p164 = scmp.eq.s32.totalorder %s19, 0
      %p165 = por %p163, %p164
      %p166 = scmp.ne.s32.totalorder %s158, %s160
      %p167 = scmp.eq.s32.totalorder %s24, 1
      %p168 = por %p166, %p167
      %p169 = scmp.ne.s32.totalorder %s160, %s161
      %p170 = scmp.eq.s32.totalorder %s24, 0
      %p171 = por %p169, %p170
      %p172 = scmp.ne.s32.totalorder %s160, %s161
      %p173 = scmp.eq.s32.totalorder %s25, 1
      %p174 = por %p172, %p173
      %p176 = scmp.ne.s32.totalorder %s161, %s175
      %p177 = scmp.eq.s32.totalorder %s25, 0
      %p178 = por %p176, %p177
      %s179 = ssub.s32 %s19, %s26
      %p180 = scmp.eq.s32.totalorder %s179, 0
      %s182 = sadd.s32 %s181, 1
      %s183 = scalar_select %p180, %s181, %s182
      %p186 = pneg %p180
      %p187 = scmp.eq.s32.totalorder %s19, 1
      %p188 = por %p186, %p187
      %p189 = scmp.ne.s32.totalorder %s181, %s184
      %p190 = scmp.eq.s32.totalorder %s19, 0
      %p191 = por %p189, %p190
      %p192 = scmp.ne.s32.totalorder %s181, %s184
      %p193 = scmp.eq.s32.totalorder %s24, 1
      %p194 = por %p192, %p193
      %p195 = scmp.ne.s32.totalorder %s184, %s185
      %p196 = scmp.eq.s32.totalorder %s24, 0
      %p197 = por %p195, %p196
      %p198 = scmp.ne.s32.totalorder %s184, %s185
      %p199 = scmp.eq.s32.totalorder %s25, 1
      %p200 = por %p198, %p199
      %p202 = scmp.ne.s32.totalorder %s185, %s201
      %p203 = scmp.eq.s32.totalorder %s25, 0
      %p204 = por %p202, %p203
      %p205 = scmp.le.s32.totalorder 1, %s19
      %p206 = scmp.lt.s32.totalorder %s19, 3
      %p207 = pnand %p205, %p206
      %p208 = pneg %p207
      // Predicated region
      $region9: #{tpu_custom_call.1} parent=5 // pred_check
        _
      $region10: #{tpu_custom_call.1} parent=5 // pred_check_branch
        %210 = sbr.rel (%p207) target = $region12
      $region11: #{tpu_custom_call.1} parent=5 // pred_region
        %s211 = ssub.s32 %s19, 1
        // Predicated region
        $region13: #{tpu_custom_call.1} parent=11 // pred_check
          %p212 = pneg %p66
        $region14: #{tpu_custom_call.1} parent=11 // pred_check_branch
          %214 = sbr.rel (%p212) target = $region16
        $region15: #{tpu_custom_call.1} parent=11 // pred_region
          _
        $region16: #{tpu_custom_call.1} parent=11 // pred_fallthru
          _
        // Predicated region
        $region17: #{tpu_custom_call.1} parent=11 // pred_check
          %p215 = pneg %p87
        $region18: #{tpu_custom_call.1} parent=11 // pred_check_branch
          %217 = sbr.rel (%p215) target = $region20
        $region19: #{tpu_custom_call.1} parent=11 // pred_region
          _
        $region20: #{tpu_custom_call.1} parent=11 // pred_fallthru
          _
        // Predicated region
        $region21: #{tpu_custom_call.1} parent=11 // pred_check
          %p218 = pneg %p108
        $region22: #{tpu_custom_call.1} parent=11 // pred_check_branch
          %220 = sbr.rel (%p218) target = $region24
        $region23: #{tpu_custom_call.1} parent=11 // pred_region
          _
        $region24: #{tpu_custom_call.1} parent=11 // pred_fallthru
          _
        // Predicated region
        $region25: #{tpu_custom_call.1} parent=11 // pred_check
          %p221 = pneg %p129
        $region26: #{tpu_custom_call.1} parent=11 // pred_check_branch
          %223 = sbr.rel (%p221) target = $region28
        $region27: #{tpu_custom_call.1} parent=11 // pred_region
          _
        $region28: #{tpu_custom_call.1} parent=11 // pred_fallthru
          _
        // Predicated region
        $region29: #{tpu_custom_call.1} parent=11 // pred_check
          %p224 = pneg %p150
        $region30: #{tpu_custom_call.1} parent=11 // pred_check_branch
          %226 = sbr.rel (%p224) target = $region32
        $region31: #{tpu_custom_call.1} parent=11 // pred_region
          _
        $region32: #{tpu_custom_call.1} parent=11 // pred_fallthru
          _
        // Predicated region
        $region33: #{tpu_custom_call.1} parent=11 // pred_check
          %p227 = pneg %p171
        $region34: #{tpu_custom_call.1} parent=11 // pred_check_branch
          %229 = sbr.rel (%p227) target = $region36
        $region35: #{tpu_custom_call.1} parent=11 // pred_region
          _
        $region36: #{tpu_custom_call.1} parent=11 // pred_fallthru
          _
      $region12: #{tpu_custom_call.1} parent=5 // pred_fallthru
        _
      %p230 = scmp.lt.s32.totalorder %s19, 2
      // Predicated region
      $region37: #{tpu_custom_call.1} parent=5 // pred_check
        %p231 = pneg %p230
      $region38: #{tpu_custom_call.1} parent=5 // pred_check_branch
        %233 = sbr.rel (%p231) target = $region40
      $region39: #{tpu_custom_call.1} parent=5 // pred_region
        // Predicated region
        $region41: #{tpu_custom_call.1} parent=39 // pred_check
          %p234 = pneg %p39
        $region42: #{tpu_custom_call.1} parent=39 // pred_check_branch
          %236 = sbr.rel (%p234) target = $region44
        $region43: #{tpu_custom_call.1} parent=39 // pred_region
          %s237 = sand.u32 %s29, 1
          %s238 = scalar_lea.sflag [#allocation5], %s237
          %s239 = sand.u32 %s29, 1
          %s240 = smul.addr %s239, 24
          %s241 = scalar_lea.vmem [#allocation4], %s240
          %s243 = ssub.s32 384, 384
          %244 = vsyncadd %s238, %s243
          %s245 = smul.addr %s19, 3
          %s246 = smul.addr %s245, 128
          %s247 = scalar_lea.hbm %s0, %s246
          %s249 = sshll.u32 %s241, 4
          %s250 = int_to_ptr.vmem [resolvable:$true] %s249
          %252 = dma.hbm_to_vmem [thread:$0]  %s247, 384, %s250, %s238
        $region44: #{tpu_custom_call.1} parent=39 // pred_fallthru
          _
      $region40: #{tpu_custom_call.1} parent=5 // pred_fallthru
        _
      %p253 = scmp.le.s32.totalorder 1, %s19
      %p254 = scmp.lt.s32.totalorder %s19, 3
      %p255 = pnand %p253, %p254
      %p256 = pneg %p255
      // Predicated region
      $region45: #{tpu_custom_call.1} parent=5 // pred_check
        _
      $region46: #{tpu_custom_call.1} parent=5 // pred_check_branch
        %258 = sbr.rel (%p255) target = $region48
      $region47: #{tpu_custom_call.1} parent=5 // pred_region
        %s259 = ssub.s32 %s19, 1
        %s260 = sand.u32 %s32, 1
        %s261 = scalar_lea.sflag [#allocation5], %s260
        %s262 = sand.u32 %s32, 1
        %s263 = smul.addr %s262, 24
        %s264 = scalar_lea.vmem [#allocation4], %s263
        // Predicated region
        $region49: #{tpu_custom_call.1} parent=47 // pred_check
          %p265 = pneg %p45
        $region50: #{tpu_custom_call.1} parent=47 // pred_check_branch
          %267 = sbr.rel (%p265) target = $region52
        $region51: #{tpu_custom_call.1} parent=47 // pred_region
          %268 = dma.done %s261, 384
        $region52: #{tpu_custom_call.1} parent=47 // pred_fallthru
          _
        %s269 = sand.u32 %s32, 1
        %s270 = scalar_lea.sflag [#allocation5], %s269
        %s271 = sand.u32 %s32, 1
        %s272 = smul.addr %s271, 24
        %s273 = scalar_lea.vmem [#allocation4], %s272
        %p274 = pneg %p45
        %p275 = pneg %p42
        %p276 = pneg %p66
        %p277 = pneg %p63
        %p278 = pneg %p87
        %p279 = pneg %p84
        %p280 = pneg %p108
        %p281 = pneg %p105
        %p282 = pneg %p129
        %p283 = pneg %p126
        %p284 = pneg %p150
        %p285 = pneg %p147
        %p286 = pneg %p171
        %p287 = pneg %p168
        %p288 = pneg %p197
        %p289 = pneg %p194
        %s290 = sand.u32 %s184, 1
        %s291 = scalar_lea.sflag [#allocation6], %s290
        %s292 = sand.u32 %s184, 1
        %s293 = smul.addr %s292, 24
        %s294 = scalar_lea.vmem [#allocation7], %s293
        %295 = vst [vmem:[#allocation2] sm:$0xff] 0.0
        %vm296 = vcmask 195584
        %297 = vst.msk [vmem:[#allocation2 + $0x8] sm:$0xff] %vm296, 0.0
        %298 = vst [vmem:[#allocation3] sm:$0xff] 0.0
        %299 = vst.msk [vmem:[#allocation3 + $0x8] sm:$0xff] %vm296, 0.0
        %vm300 = vcmask 1047744
        %301 = vst.msk [vmem:[#allocation2 + $0x20] sm:$0xff] %vm300, 0.0
        %vm302 = vcmask 392192
        %303 = vst.msk [vmem:[#allocation2 + $0x28] sm:$0xff] %vm302, 0.0
        %304 = vst.msk [vmem:[#allocation3 + $0x20] sm:$0xff] %vm300, 0.0
        %305 = vst.msk [vmem:[#allocation3 + $0x28] sm:$0xff] %vm302, 0.0
        %v306 = vlaneseq
        %v307 = vand.u32 %v306, 127
        %v308 = vadd.s32 %v307, 128
        %vm309 = vcmp.lt.s32.totalorder %v307, 0
        %v310 = vsub.s32 0, %v307
        %v311 = vsel %vm309, %v310, %v307
        %v312 = vmul.u32.u64.compose %v311, 2863311531
        %v313 = vextract.low.u32 %v312
        %v314 = vextract.high.u32 %v312
        %v315 = vshrl.u32 %v314, 4
        %v316 = vmul.u32 %v315, 24
        %v317 = vsub.s32 %v311, %v316
        %v318 = vsub.s32 0, %v317
        %v319 = vsel %vm309, %v318, %v317
        %vm320 = vcmp.lt.s32.totalorder %v308, 0
        %v321 = vsub.s32 0, %v308
        %v322 = vsel %vm320, %v321, %v308
        %v323 = vmul.u32.u64.compose %v322, 2863311531
        %v324 = vextract.low.u32 %v323
        %v325 = vextract.high.u32 %v323
        %v326 = vshrl.u32 %v325, 4
        %v327 = vmul.u32 %v326, 24
        %v328 = vsub.s32 %v322, %v327
        %v329 = vsub.s32 0, %v328
        %v330 = vsel %vm320, %v329, %v328
        %vm331 = vcmp.ne.s32.totalorder %v319, 0
        %vm332 = vcmp.ne.s32.totalorder %v330, 0
        %vm333 = vcmp.lt.s32.totalorder %v319, 0
        %vm334 = vcmp.lt.s32.totalorder %v330, 0
        %vm335 = vmand %vm333, %vm331
        %vm336 = vmand %vm334, %vm332
        %v337 = vadd.s32 %v319, 24
        %v338 = vadd.s32 %v330, 24
        %v339 = vsel %vm335, %v337, %v319
        %v340 = vsel %vm336, %v338, %v330
        %vm341 = vcmp.lt.s32.totalorder %v339, 16
        %vm342 = vcmp.lt.s32.totalorder %v340, 16
        %v343 = vld [vmem:[%s1] sm:$0xff]
        %v344 = vld [vmem:[%s2] sm:$0xff]
        %v345 = vld [vmem:[%s264] sm:$0xff]
        %v346 = vld [vmem:[%s264 + $0x8] sm:$0xff]
        %348 = vset.pattern.permute.xlu0 0
        %349 = vperm.xlu0 %348, %v344
        %v350 = vpop.permute.xlu0 %349
        %vm352 = vcmask 64512
        %v354 = vsel %vm352, %v343, 0
        %356 = vmatprep.subr.mxu0 %v346
        %357 = vmatpush1.msra.mxu0 %v345
        %358 = vmatprep.subr.mxu0 0.0
        %359 = vmatpush1.msra.mxu0 0.0
        %360 = vmatprep.subr.mxu0 0.0
        %361 = vmatpush1.msra.mxu0 0.0
        %362 = vmatprep.subr.mxu0 0.0
        %363 = vmatpush1.msra.mxu0 0.0
        %364 = vmatprep.subr.mxu0 0.0
        %365 = vmatpush1.msra.mxu0 0.0
        %366 = vmatprep.subr.mxu0 0.0
        %367 = vmatpush1.msra.mxu0 0.0
        %368 = vmatprep.subr.mxu0 0.0
        %369 = vmatpush1.msra.mxu0 0.0
        %370 = vmatprep.subr.mxu0 0.0
        %371 = vmatpush1.msra.mxu0 0.0
        %372 = vmatprep.subr.mxu0 0.0
        %373 = vmatpush1.msra.mxu0 0.0
        %374 = vmatprep.subr.mxu0 0.0
        %375 = vmatpush1.msra.mxu0 0.0
        %376 = vmatprep.subr.mxu0 0.0
        %377 = vmatpush1.msra.mxu0 0.0
        %378 = vmatprep.subr.mxu0 0.0
        %379 = vmatpush1.msra.mxu0 0.0
        %380 = vmatprep.subr.mxu0 0.0
        %381 = vmatpush1.msra.mxu0 0.0
        %382 = vmatprep.subr.mxu0 0.0
        %383 = vmatpush1.msra.mxu0 0.0
        %384 = vmatprep.subr.mxu0 0.0
        %385 = vmatpush1.msra.mxu0 0.0
        %386 = vmatprep.subr.mxu0 0.0
        %387 = vmatpush1.msra.mxu0 0.0
        %388 = vmatprep.subr.mxu0 0.0
        %389 = vmatpush1.msra.mxu0 0.0
        %390 = vmatprep.subr.mxu0 0.0
        %391 = vmatpush1.msra.mxu0 0.0
        %392 = vmatprep.subr.mxu0 0.0
        %393 = vmatpush1.msra.mxu0 0.0
        %394 = vmatprep.subr.mxu0 0.0
        %395 = vmatpush1.msra.mxu0 0.0
        %396 = vmatprep.subr.mxu0 0.0
        %397 = vmatpush1.msra.mxu0 0.0
        %398 = vmatprep.subr.mxu0 0.0
        %399 = vmatpush1.msra.mxu0 0.0
        %400 = vmatprep.subr.mxu0 0.0
        %401 = vmatpush1.msra.mxu0 0.0
        %402 = vmatprep.subr.mxu0 0.0
        %403 = vmatpush1.msra.mxu0 0.0
        %404 = vmatprep.subr.mxu0 0.0
        %405 = vmatpush1.msra.mxu0 0.0
        %406 = vmatprep.subr.mxu0 0.0
        %407 = vmatpush1.msra.mxu0 0.0
        %408 = vmatprep.subr.mxu0 0.0
        %409 = vmatpush1.msra.mxu0 0.0
        %410 = vmatprep.subr.mxu0 0.0
        %411 = vmatpush1.msra.mxu0 0.0
        %412 = vmatprep.subr.mxu0 0.0
        %413 = vmatpush1.msra.mxu0 0.0
        %414 = vmatprep.subr.mxu0 0.0
        %415 = vmatpush1.msra.mxu0 0.0
        %416 = vmatprep.subr.mxu0 0.0
        %417 = vmatpush1.msra.mxu0 0.0
        %418 = vmatprep.subr.mxu0 0.0
        %419 = vmatpush1.msra.mxu0 0.0
        %420 = vmatprep.mubr.f32.mxu0 0.0
        %421 = vmatmul.mubr.f32.gmra.mrb[0].mxu0 %v354
        %v422 = vpop.f32.mrb[0].mxu0
        %v423 = vadd.f32 %v350, %v422
        %v424 = vpop.f32.mrb[0].mxu0
        %v425 = vadd.f32 %v350, %v424
        %426 = vdwg.mxu0
        %v427 = vsel %vm341, 1, 0
        %v428 = vsel %vm342, 1, 0
        %vm429 = vcmp.eq.s32.totalorder %v427, 1
        %vm430 = vcmp.eq.s32.totalorder %v428, 1
        %v431 = vsel %vm429, %v423, 0.0
        %v432 = vsel %vm430, %v425, 0.0
        %435 = vrot.lane.b32.xlu0 %v431, 24
        %v436 = vpop.permute.xlu0 %435
        %437 = vrot.lane.b32.xlu0 %v432, 24
        %v438 = vpop.permute.xlu0 %437
        %v439 = vsel %vm296, %v436, %v438
        %442 = vst.msk [vmem:[#allocation2 + $0x8] sm:$0xff] %vm300, %v436
        %vm443 = vcmask 719872
        %444 = vst.msk [vmem:[#allocation2 + $0x10] sm:$0xff] %vm443, %v439
        %v445 = vld [vmem:[%s264 + $0x8] sm:$0xff]
        %v446 = vld [vmem:[%s264 + $0x10] sm:$0xff]
        %449 = vrot.lane.b32.xlu0 %v445, 64
        %v450 = vpop.permute.xlu0 %449
        %451 = vrot.lane.b32.xlu0 %v446, 64
        %v452 = vpop.permute.xlu0 %451
        %vm453 = vcmask 523264
        %v454 = vsel %vm453, %v450, %v452
        %457 = vmatprep.subr.mxu0 %v452
        %458 = vmatpush1.msra.mxu0 %v454
        %459 = vmatprep.subr.mxu0 0.0
        %460 = vmatpush1.msra.mxu0 0.0
        %461 = vmatprep.subr.mxu0 0.0
        %462 = vmatpush1.msra.mxu0 0.0
        %463 = vmatprep.subr.mxu0 0.0
        %464 = vmatpush1.msra.mxu0 0.0
        %465 = vmatprep.subr.mxu0 0.0
        %466 = vmatpush1.msra.mxu0 0.0
        %467 = vmatprep.subr.mxu0 0.0
        %468 = vmatpush1.msra.mxu0 0.0
        %469 = vmatprep.subr.mxu0 0.0
        %470 = vmatpush1.msra.mxu0 0.0
        %471 = vmatprep.subr.mxu0 0.0
        %472 = vmatpush1.msra.mxu0 0.0
        %473 = vmatprep.subr.mxu0 0.0
        %474 = vmatpush1.msra.mxu0 0.0
        %475 = vmatprep.subr.mxu0 0.0
        %476 = vmatpush1.msra.mxu0 0.0
        %477 = vmatprep.subr.mxu0 0.0
        %478 = vmatpush1.msra.mxu0 0.0
        %479 = vmatprep.subr.mxu0 0.0
        %480 = vmatpush1.msra.mxu0 0.0
        %481 = vmatprep.subr.mxu0 0.0
        %482 = vmatpush1.msra.mxu0 0.0
        %483 = vmatprep.subr.mxu0 0.0
        %484 = vmatpush1.msra.mxu0 0.0
        %485 = vmatprep.subr.mxu0 0.0
        %486 = vmatpush1.msra.mxu0 0.0
        %487 = vmatprep.subr.mxu0 0.0
        %488 = vmatpush1.msra.mxu0 0.0
        %489 = vmatprep.subr.mxu0 0.0
        %490 = vmatpush1.msra.mxu0 0.0
        %491 = vmatprep.subr.mxu0 0.0
        %492 = vmatpush1.msra.mxu0 0.0
        %493 = vmatprep.subr.mxu0 0.0
        %494 = vmatpush1.msra.mxu0 0.0
        %495 = vmatprep.subr.mxu0 0.0
        %496 = vmatpush1.msra.mxu0 0.0
        %497 = vmatprep.subr.mxu0 0.0
        %498 = vmatpush1.msra.mxu0 0.0
        %499 = vmatprep.subr.mxu0 0.0
        %500 = vmatpush1.msra.mxu0 0.0
        %501 = vmatprep.subr.mxu0 0.0
        %502 = vmatpush1.msra.mxu0 0.0
        %503 = vmatprep.subr.mxu0 0.0
        %504 = vmatpush1.msra.mxu0 0.0
        %505 = vmatprep.subr.mxu0 0.0
        %506 = vmatpush1.msra.mxu0 0.0
        %507 = vmatprep.subr.mxu0 0.0
        %508 = vmatpush1.msra.mxu0 0.0
        %509 = vmatprep.subr.mxu0 0.0
        %510 = vmatpush1.msra.mxu0 0.0
        %511 = vmatprep.subr.mxu0 0.0
        %512 = vmatpush1.msra.mxu0 0.0
        %513 = vmatprep.subr.mxu0 0.0
        %514 = vmatpush1.msra.mxu0 0.0
        %515 = vmatprep.subr.mxu0 0.0
        %516 = vmatpush1.msra.mxu0 0.0
        %517 = vmatprep.subr.mxu0 0.0
        %518 = vmatpush1.msra.mxu0 0.0
        %519 = vmatprep.subr.mxu0 0.0
        %520 = vmatpush1.msra.mxu0 0.0
        %521 = vmatprep.mubr.f32.mxu0 0.0
        %522 = vmatmul.mubr.f32.gmra.mrb[0].mxu0 %v354
        %v523 = vpop.f32.mrb[0].mxu0
        %v524 = vadd.f32 %v350, %v523
        %v525 = vpop.f32.mrb[0].mxu0
        %v526 = vadd.f32 %v350, %v525
        %527 = vdwg.mxu0
        %v528 = vsel %vm429, %v524, 0.0
        %v529 = vsel %vm430, %v526, 0.0
        %532 = vrot.lane.b32.xlu0 %v528, 88
        %v533 = vpop.permute.xlu0 %532
        %534 = vrot.lane.b32.xlu0 %v529, 88
        %v535 = vpop.permute.xlu0 %534
        %v536 = vsel %vm443, %v533, %v535
        %vm540 = vcmask 1048256
        %541 = vst.msk [vmem:[#allocation2 + $0x10] sm:$0xff] %vm540, %v533
        %542 = vst [vmem:[#allocation2 + $0x18] sm:$0xff] %v536
        %543 = vst.msk [vmem:[#allocation2 + $0x20] sm:$0xff] %vm296, %v535
        %v544 = vld [vmem:[%s3] sm:$0xff]
        %v545 = vld [vmem:[%s4] sm:$0xff]
        %v546 = vld [vmem:[%s5] sm:$0xff]
        %v547 = vld [vmem:[%s6] sm:$0xff]
        %v548 = vld [vmem:[#allocation2] sm:$0xff]
        %v549 = vld [vmem:[#allocation2 + $0x8] sm:$0xff]
        %v550 = vld [vmem:[#allocation2 + $0x10] sm:$0xff]
        %552 = vset.pattern.permute.xlu0 0
        %553 = vperm.xlu0 %552, %v544
        %v554 = vpop.permute.xlu0 %553
        %v556 = vmul.f32 %v554, %v548
        %v557 = vmul.f32 %v554, %v549
        %v558 = vmul.f32 %v554, %v550
        %559 = vset.pattern.permute.xlu0 1
        %560 = vperm.xlu0 %559, %v544
        %v561 = vpop.permute.xlu0 %560
        %v563 = vmul.f32 %v561, %v548
        %v564 = vmul.f32 %v561, %v549
        %v565 = vmul.f32 %v561, %v550
        %569 = vrot.lane.b32.xlu0 %v563, 127
        %v570 = vpop.permute.xlu0 %569
        %571 = vrot.lane.b32.xlu0 %v564, 127
        %v572 = vpop.permute.xlu0 %571
        %573 = vrot.lane.b32.xlu0 %v565, 127
        %v574 = vpop.permute.xlu0 %573
        %vm575 = vcmask 1039360
        %v576 = vsel %vm575, %v570, %v572
        %v577 = vsel %vm575, %v572, %v574
        %v581 = vadd.f32 %v556, %v576
        %v582 = vadd.f32 %v557, %v577
        %v583 = vadd.f32 %v558, %v574
        %584 = vset.pattern.permute.xlu0 2
        %585 = vperm.xlu0 %584, %v544
        %v586 = vpop.permute.xlu0 %585
        %v588 = vmul.f32 %v586, %v548
        %v589 = vmul.f32 %v586, %v549
        %v590 = vmul.f32 %v586, %v550
        %594 = vrot.lane.b32.xlu0 %v588, 126
        %v595 = vpop.permute.xlu0 %594
        %596 = vrot.lane.b32.xlu0 %v589, 126
        %v597 = vpop.permute.xlu0 %596
        %598 = vrot.lane.b32.xlu0 %v590, 126
        %v599 = vpop.permute.xlu0 %598
        %vm600 = vcmask 1031168
        %v601 = vsel %vm600, %v595, %v597
        %v602 = vsel %vm600, %v597, %v599
        %v606 = vadd.f32 %v581, %v601
        %v607 = vadd.f32 %v582, %v602
        %v608 = vadd.f32 %v583, %v599
        %609 = vset.pattern.permute.xlu0 3
        %610 = vperm.xlu0 %609, %v544
        %v611 = vpop.permute.xlu0 %610
        %v613 = vmul.f32 %v611, %v548
        %v614 = vmul.f32 %v611, %v549
        %v615 = vmul.f32 %v611, %v550
        %619 = vrot.lane.b32.xlu0 %v613, 125
        %v620 = vpop.permute.xlu0 %619
        %621 = vrot.lane.b32.xlu0 %v614, 125
        %v622 = vpop.permute.xlu0 %621
        %623 = vrot.lane.b32.xlu0 %v615, 125
        %v624 = vpop.permute.xlu0 %623
        %vm625 = vcmask 1022976
        %v626 = vsel %vm625, %v620, %v622
        %v627 = vsel %vm625, %v622, %v624
        %v631 = vadd.f32 %v606, %v626
        %v632 = vadd.f32 %v607, %v627
        %v633 = vadd.f32 %v608, %v624
        %634 = vset.pattern.permute.xlu0 4
        %635 = vperm.xlu0 %634, %v544
        %v636 = vpop.permute.xlu0 %635
        %v638 = vmul.f32 %v636, %v548
        %v639 = vmul.f32 %v636, %v549
        %v640 = vmul.f32 %v636, %v550
        %644 = vrot.lane.b32.xlu0 %v638, 124
        %v645 = vpop.permute.xlu0 %644
        %646 = vrot.lane.b32.xlu0 %v639, 124
        %v647 = vpop.permute.xlu0 %646
        %648 = vrot.lane.b32.xlu0 %v640, 124
        %v649 = vpop.permute.xlu0 %648
        %vm650 = vcmask 1014784
        %v651 = vsel %vm650, %v645, %v647
        %v652 = vsel %vm650, %v647, %v649
        %v656 = vadd.f32 %v631, %v651
        %v657 = vadd.f32 %v632, %v652
        %v658 = vadd.f32 %v633, %v649
        %659 = vset.pattern.permute.xlu0 5
        %660 = vperm.xlu0 %659, %v544
        %v661 = vpop.permute.xlu0 %660
        %v663 = vmul.f32 %v661, %v548
        %v664 = vmul.f32 %v661, %v549
        %v665 = vmul.f32 %v661, %v550
        %669 = vrot.lane.b32.xlu0 %v663, 104
        %v670 = vpop.permute.xlu0 %669
        %671 = vrot.lane.b32.xlu0 %v664, 104
        %v672 = vpop.permute.xlu0 %671
        %673 = vrot.lane.b32.xlu0 %v665, 104
        %v674 = vpop.permute.xlu0 %673
        %vm675 = vcmask 850944
        %v676 = vsel %vm675, %v670, %v672
        %v677 = vsel %vm675, %v672, %v674
        %v681 = vadd.f32 %v656, %v676
        %v682 = vadd.f32 %v657, %v677
        %v683 = vadd.f32 %v658, %v674
        %684 = vset.pattern.permute.xlu0 6
        %685 = vperm.xlu0 %684, %v544
        %v686 = vpop.permute.xlu0 %685
        %v688 = vmul.f32 %v686, %v548
        %v689 = vmul.f32 %v686, %v549
        %v690 = vmul.f32 %v686, %v550
        %694 = vrot.lane.b32.xlu0 %v688, 103
        %v695 = vpop.permute.xlu0 %694
        %696 = vrot.lane.b32.xlu0 %v689, 103
        %v697 = vpop.permute.xlu0 %696
        %698 = vrot.lane.b32.xlu0 %v690, 103
        %v699 = vpop.permute.xlu0 %698
        %vm700 = vcmask 842752
        %v701 = vsel %vm700, %v695, %v697
        %v702 = vsel %vm700, %v697, %v699
        %v706 = vadd.f32 %v681, %v701
        %v707 = vadd.f32 %v682, %v702
        %v708 = vadd.f32 %v683, %v699
        %709 = vset.pattern.permute.xlu0 7
        %710 = vperm.xlu0 %709, %v544
        %v711 = vpop.permute.xlu0 %710
        %v713 = vmul.f32 %v711, %v549
        %v714 = vmul.f32 %v711, %v550
        %717 = vrot.lane.b32.xlu0 %v713, 102
        %v718 = vpop.permute.xlu0 %717
        %719 = vrot.lane.b32.xlu0 %v714, 102
        %v720 = vpop.permute.xlu0 %719
        %vm721 = vcmask 834560
        %v722 = vsel %vm721, %v718, %v720
        %v726 = vadd.f32 %v706, %v718
        %v727 = vadd.f32 %v707, %v722
        %v728 = vadd.f32 %v708, %v720
        %729 = vset.pattern.permute.xlu0 8
        %730 = vperm.xlu0 %729, %v544
        %v731 = vpop.permute.xlu0 %730
        %v733 = vmul.f32 %v731, %v549
        %v734 = vmul.f32 %v731, %v550
        %737 = vrot.lane.b32.xlu0 %v733, 101
        %v738 = vpop.permute.xlu0 %737
        %739 = vrot.lane.b32.xlu0 %v734, 101
        %v740 = vpop.permute.xlu0 %739
        %vm741 = vcmask 826368
        %v742 = vsel %vm741, %v738, %v740
        %v746 = vadd.f32 %v726, %v738
        %v747 = vadd.f32 %v727, %v742
        %v748 = vadd.f32 %v728, %v740
        %749 = vset.pattern.permute.xlu0 9
        %750 = vperm.xlu0 %749, %v544
        %v751 = vpop.permute.xlu0 %750
        %v753 = vmul.f32 %v751, %v549
        %v754 = vmul.f32 %v751, %v550
        %757 = vrot.lane.b32.xlu0 %v753, 100
        %v758 = vpop.permute.xlu0 %757
        %759 = vrot.lane.b32.xlu0 %v754, 100
        %v760 = vpop.permute.xlu0 %759
        %vm761 = vcmask 818176
        %v762 = vsel %vm761, %v758, %v760
        %v766 = vadd.f32 %v746, %v758
        %v767 = vadd.f32 %v747, %v762
        %v768 = vadd.f32 %v748, %v760
        %769 = vset.pattern.permute.xlu0 10
        %770 = vperm.xlu0 %769, %v544
        %v771 = vpop.permute.xlu0 %770
        %v773 = vmul.f32 %v771, %v549
        %v774 = vmul.f32 %v771, %v550
        %777 = vrot.lane.b32.xlu0 %v773, 80
        %v778 = vpop.permute.xlu0 %777
        %779 = vrot.lane.b32.xlu0 %v774, 80
        %v780 = vpop.permute.xlu0 %779
        %vm781 = vcmask 654336
        %v782 = vsel %vm781, %v778, %v780
        %v786 = vadd.f32 %v766, %v778
        %v787 = vadd.f32 %v767, %v782
        %v788 = vadd.f32 %v768, %v780
        %789 = vset.pattern.permute.xlu0 11
        %790 = vperm.xlu0 %789, %v544
        %v791 = vpop.permute.xlu0 %790
        %v793 = vmul.f32 %v791, %v549
        %v794 = vmul.f32 %v791, %v550
        %797 = vrot.lane.b32.xlu0 %v793, 79
        %v798 = vpop.permute.xlu0 %797
        %799 = vrot.lane.b32.xlu0 %v794, 79
        %v800 = vpop.permute.xlu0 %799
        %vm801 = vcmask 646144
        %v802 = vsel %vm801, %v798, %v800
        %v806 = vadd.f32 %v786, %v798
        %v807 = vadd.f32 %v787, %v802
        %v808 = vadd.f32 %v788, %v800
        %809 = vset.pattern.permute.xlu0 12
        %810 = vperm.xlu0 %809, %v544
        %v811 = vpop.permute.xlu0 %810
        %v813 = vmul.f32 %v811, %v549
        %v814 = vmul.f32 %v811, %v550
        %817 = vrot.lane.b32.xlu0 %v813, 78
        %v818 = vpop.permute.xlu0 %817
        %819 = vrot.lane.b32.xlu0 %v814, 78
        %v820 = vpop.permute.xlu0 %819
        %vm821 = vcmask 637952
        %v822 = vsel %vm821, %v818, %v820
        %v826 = vadd.f32 %v806, %v818
        %v827 = vadd.f32 %v807, %v822
        %v828 = vadd.f32 %v808, %v820
        %829 = vset.pattern.permute.xlu0 13
        %830 = vperm.xlu0 %829, %v544
        %v831 = vpop.permute.xlu0 %830
        %v833 = vmul.f32 %v831, %v549
        %v834 = vmul.f32 %v831, %v550
        %837 = vrot.lane.b32.xlu0 %v833, 77
        %v838 = vpop.permute.xlu0 %837
        %839 = vrot.lane.b32.xlu0 %v834, 77
        %v840 = vpop.permute.xlu0 %839
        %vm841 = vcmask 629760
        %v842 = vsel %vm841, %v838, %v840
        %v846 = vadd.f32 %v826, %v838
        %v847 = vadd.f32 %v827, %v842
        %v848 = vadd.f32 %v828, %v840
        %849 = vset.pattern.permute.xlu0 14
        %850 = vperm.xlu0 %849, %v544
        %v851 = vpop.permute.xlu0 %850
        %v853 = vmul.f32 %v851, %v549
        %v854 = vmul.f32 %v851, %v550
        %857 = vrot.lane.b32.xlu0 %v853, 76
        %v858 = vpop.permute.xlu0 %857
        %859 = vrot.lane.b32.xlu0 %v854, 76
        %v860 = vpop.permute.xlu0 %859
        %vm861 = vcmask 621568
        %v862 = vsel %vm861, %v858, %v860
        %v866 = vadd.f32 %v846, %v858
        %v867 = vadd.f32 %v847, %v862
        %v868 = vadd.f32 %v848, %v860
        %869 = vset.pattern.permute.xlu0 15
        %870 = vperm.xlu0 %869, %v544
        %v871 = vpop.permute.xlu0 %870
        %v873 = vmul.f32 %v871, %v549
        %v874 = vmul.f32 %v871, %v550
        %877 = vrot.lane.b32.xlu0 %v873, 56
        %v878 = vpop.permute.xlu0 %877
        %879 = vrot.lane.b32.xlu0 %v874, 56
        %v880 = vpop.permute.xlu0 %879
        %vm881 = vcmask 457728
        %v882 = vsel %vm881, %v878, %v880
        %v886 = vadd.f32 %v866, %v878
        %v887 = vadd.f32 %v867, %v882
        %v888 = vadd.f32 %v868, %v880
        %889 = vset.pattern.permute.xlu0 16
        %890 = vperm.xlu0 %889, %v544
        %v891 = vpop.permute.xlu0 %890
        %v893 = vmul.f32 %v891, %v549
        %v894 = vmul.f32 %v891, %v550
        %897 = vrot.lane.b32.xlu0 %v893, 55
        %v898 = vpop.permute.xlu0 %897
        %899 = vrot.lane.b32.xlu0 %v894, 55
        %v900 = vpop.permute.xlu0 %899
        %vm901 = vcmask 449536
        %v902 = vsel %vm901, %v898, %v900
        %v906 = vadd.f32 %v886, %v898
        %v907 = vadd.f32 %v887, %v902
        %v908 = vadd.f32 %v888, %v900
        %909 = vset.pattern.permute.xlu0 17
        %910 = vperm.xlu0 %909, %v544
        %v911 = vpop.permute.xlu0 %910
        %v913 = vmul.f32 %v911, %v549
        %v914 = vmul.f32 %v911, %v550
        %917 = vrot.lane.b32.xlu0 %v913, 54
        %v918 = vpop.permute.xlu0 %917
        %919 = vrot.lane.b32.xlu0 %v914, 54
        %v920 = vpop.permute.xlu0 %919
        %vm921 = vcmask 441344
        %v922 = vsel %vm921, %v918, %v920
        %v926 = vadd.f32 %v906, %v918
        %v927 = vadd.f32 %v907, %v922
        %v928 = vadd.f32 %v908, %v920
        %929 = vset.pattern.permute.xlu0 18
        %930 = vperm.xlu0 %929, %v544
        %v931 = vpop.permute.xlu0 %930
        %v933 = vmul.f32 %v931, %v549
        %v934 = vmul.f32 %v931, %v550
        %937 = vrot.lane.b32.xlu0 %v933, 53
        %v938 = vpop.permute.xlu0 %937
        %939 = vrot.lane.b32.xlu0 %v934, 53
        %v940 = vpop.permute.xlu0 %939
        %vm941 = vcmask 433152
        %v942 = vsel %vm941, %v938, %v940
        %v946 = vadd.f32 %v926, %v938
        %v947 = vadd.f32 %v927, %v942
        %v948 = vadd.f32 %v928, %v940
        %949 = vset.pattern.permute.xlu0 19
        %950 = vperm.xlu0 %949, %v544
        %v951 = vpop.permute.xlu0 %950
        %v953 = vmul.f32 %v951, %v549
        %v954 = vmul.f32 %v951, %v550
        %957 = vrot.lane.b32.xlu0 %v953, 52
        %v958 = vpop.permute.xlu0 %957
        %959 = vrot.lane.b32.xlu0 %v954, 52
        %v960 = vpop.permute.xlu0 %959
        %vm961 = vcmask 424960
        %v962 = vsel %vm961, %v958, %v960
        %v966 = vadd.f32 %v946, %v958
        %v967 = vadd.f32 %v947, %v962
        %v968 = vadd.f32 %v948, %v960
        %v969 = vld [vmem:[#allocation2 + $0x8] sm:$0xff]
        %v970 = vld [vmem:[#allocation2 + $0x10] sm:$0xff]
        %v971 = vld [vmem:[#allocation2 + $0x18] sm:$0xff]
        %972 = vset.pattern.permute.xlu0 20
        %973 = vperm.xlu0 %972, %v544
        %v974 = vpop.permute.xlu0 %973
        %v976 = vmul.f32 %v974, %v969
        %v977 = vmul.f32 %v974, %v970
        %v978 = vmul.f32 %v974, %v971
        %982 = vrot.lane.b32.xlu0 %v976, 32
        %v983 = vpop.permute.xlu0 %982
        %984 = vrot.lane.b32.xlu0 %v977, 32
        %v985 = vpop.permute.xlu0 %984
        %986 = vrot.lane.b32.xlu0 %v978, 32
        %v987 = vpop.permute.xlu0 %986
        %vm988 = vcmask 261120
        %v989 = vsel %vm988, %v983, %v985
        %v990 = vsel %vm988, %v985, %v987
        %v994 = vadd.f32 %v966, %v983
        %v995 = vadd.f32 %v967, %v989
        %v996 = vadd.f32 %v968, %v990
        %997 = vset.pattern.permute.xlu0 21
        %998 = vperm.xlu0 %997, %v544
        %v999 = vpop.permute.xlu0 %998
        %v1001 = vmul.f32 %v999, %v969
        %v1002 = vmul.f32 %v999, %v970
        %v1003 = vmul.f32 %v999, %v971
        %1007 = vrot.lane.b32.xlu0 %v1001, 31
        %v1008 = vpop.permute.xlu0 %1007
        %1009 = vrot.lane.b32.xlu0 %v1002, 31
        %v1010 = vpop.permute.xlu0 %1009
        %1011 = vrot.lane.b32.xlu0 %v1003, 31
        %v1012 = vpop.permute.xlu0 %1011
        %vm1013 = vcmask 252928
        %v1014 = vsel %vm1013, %v1008, %v1010
        %v1015 = vsel %vm1013, %v1010, %v1012
        %v1019 = vadd.f32 %v994, %v1008
        %v1020 = vadd.f32 %v995, %v1014
        %v1021 = vadd.f32 %v996, %v1015
        %1022 = vset.pattern.permute.xlu0 22
        %1023 = vperm.xlu0 %1022, %v544
        %v1024 = vpop.permute.xlu0 %1023
        %v1026 = vmul.f32 %v1024, %v969
        %v1027 = vmul.f32 %v1024, %v970
        %v1028 = vmul.f32 %v1024, %v971
        %1032 = vrot.lane.b32.xlu0 %v1026, 30
        %v1033 = vpop.permute.xlu0 %1032
        %1034 = vrot.lane.b32.xlu0 %v1027, 30
        %v1035 = vpop.permute.xlu0 %1034
        %1036 = vrot.lane.b32.xlu0 %v1028, 30
        %v1037 = vpop.permute.xlu0 %1036
        %vm1038 = vcmask 244736
        %v1039 = vsel %vm1038, %v1033, %v1035
        %v1040 = vsel %vm1038, %v1035, %v1037
        %v1044 = vadd.f32 %v1019, %v1033
        %v1045 = vadd.f32 %v1020, %v1039
        %v1046 = vadd.f32 %v1021, %v1040
        %1047 = vset.pattern.permute.xlu0 23
        %1048 = vperm.xlu0 %1047, %v544
        %v1049 = vpop.permute.xlu0 %1048
        %v1051 = vmul.f32 %v1049, %v969
        %v1052 = vmul.f32 %v1049, %v970
        %v1053 = vmul.f32 %v1049, %v971
        %1057 = vrot.lane.b32.xlu0 %v1051, 29
        %v1058 = vpop.permute.xlu0 %1057
        %1059 = vrot.lane.b32.xlu0 %v1052, 29
        %v1060 = vpop.permute.xlu0 %1059
        %1061 = vrot.lane.b32.xlu0 %v1053, 29
        %v1062 = vpop.permute.xlu0 %1061
        %vm1063 = vcmask 236544
        %v1064 = vsel %vm1063, %v1058, %v1060
        %v1065 = vsel %vm1063, %v1060, %v1062
        %v1069 = vadd.f32 %v1044, %v1058
        %v1070 = vadd.f32 %v1045, %v1064
        %v1071 = vadd.f32 %v1046, %v1065
        %1072 = vset.pattern.permute.xlu0 24
        %1073 = vperm.xlu0 %1072, %v544
        %v1074 = vpop.permute.xlu0 %1073
        %v1076 = vmul.f32 %v1074, %v969
        %v1077 = vmul.f32 %v1074, %v970
        %v1078 = vmul.f32 %v1074, %v971
        %1082 = vrot.lane.b32.xlu0 %v1076, 28
        %v1083 = vpop.permute.xlu0 %1082
        %1084 = vrot.lane.b32.xlu0 %v1077, 28
        %v1085 = vpop.permute.xlu0 %1084
        %1086 = vrot.lane.b32.xlu0 %v1078, 28
        %v1087 = vpop.permute.xlu0 %1086
        %vm1088 = vcmask 228352
        %v1089 = vsel %vm1088, %v1083, %v1085
        %v1090 = vsel %vm1088, %v1085, %v1087
        %v1094 = vadd.f32 %v1069, %v1083
        %v1095 = vadd.f32 %v1070, %v1089
        %v1096 = vadd.f32 %v1071, %v1090
        %1098 = vset.pattern.permute.xlu0 0
        %1099 = vperm.xlu0 %1098, %v545
        %v1100 = vpop.permute.xlu0 %1099
        %v1102 = vadd.f32 %v1094, %v1100
        %v1103 = vadd.f32 %v1095, %v1100
        %v1104 = vadd.f32 %v1096, %v1100
        %1108 = vrot.lane.b32.xlu0 %v1102, 26
        %v1109 = vpop.permute.xlu0 %1108
        %1110 = vrot.lane.b32.xlu0 %v1103, 26
        %v1111 = vpop.permute.xlu0 %1110
        %1112 = vrot.lane.b32.xlu0 %v1104, 26
        %v1113 = vpop.permute.xlu0 %1112
        %vm1114 = vcmask 211968
        %v1115 = vsel %vm1114, %v1109, %v1111
        %v1116 = vsel %vm1114, %v1111, %v1113
        %v1119 = vsel %vm429, %v1115, 0.0
        %v1120 = vsel %vm430, %v1116, 0.0
        %1123 = vrot.lane.b32.xlu0 %v1119, 24
        %v1124 = vpop.permute.xlu0 %1123
        %1125 = vrot.lane.b32.xlu0 %v1120, 24
        %v1126 = vpop.permute.xlu0 %1125
        %v1127 = vsel %vm296, %v1124, %v1126
        %1130 = vst.msk [vmem:[#allocation3 + $0x8] sm:$0xff] %vm300, %v1124
        %1131 = vst.msk [vmem:[#allocation3 + $0x10] sm:$0xff] %vm443, %v1127
        %v1132 = vld [vmem:[#allocation2 + $0x10] sm:$0xff]
        %v1133 = vld [vmem:[#allocation2 + $0x18] sm:$0xff]
        %v1134 = vmul.f32 %v554, %v1132
        %v1135 = vmul.f32 %v554, %v1133
        %v1136 = vmul.f32 %v561, %v1132
        %v1137 = vmul.f32 %v561, %v1133
        %1140 = vrot.lane.b32.xlu0 %v1136, 127
        %v1141 = vpop.permute.xlu0 %1140
        %1142 = vrot.lane.b32.xlu0 %v1137, 127
        %v1143 = vpop.permute.xlu0 %1142
        %v1144 = vsel %vm575, %v1141, %v1143
        %v1147 = vadd.f32 %v1134, %v1144
        %v1148 = vadd.f32 %v1135, %v1143
        %v1149 = vmul.f32 %v586, %v1132
        %v1150 = vmul.f32 %v586, %v1133
        %1153 = vrot.lane.b32.xlu0 %v1149, 126
        %v1154 = vpop.permute.xlu0 %1153
        %1155 = vrot.lane.b32.xlu0 %v1150, 126
        %v1156 = vpop.permute.xlu0 %1155
        %v1157 = vsel %vm600, %v1154, %v1156
        %v1160 = vadd.f32 %v1147, %v1157
        %v1161 = vadd.f32 %v1148, %v1156
        %v1162 = vmul.f32 %v611, %v1132
        %v1163 = vmul.f32 %v611, %v1133
        %1166 = vrot.lane.b32.xlu0 %v1162, 125
        %v1167 = vpop.permute.xlu0 %1166
        %1168 = vrot.lane.b32.xlu0 %v1163, 125
        %v1169 = vpop.permute.xlu0 %1168
        %v1170 = vsel %vm625, %v1167, %v1169
        %v1173 = vadd.f32 %v1160, %v1170
        %v1174 = vadd.f32 %v1161, %v1169
        %v1175 = vmul.f32 %v636, %v1132
        %v1176 = vmul.f32 %v636, %v1133
        %1179 = vrot.lane.b32.xlu0 %v1175, 124
        %v1180 = vpop.permute.xlu0 %1179
        %1181 = vrot.lane.b32.xlu0 %v1176, 124
        %v1182 = vpop.permute.xlu0 %1181
        %v1183 = vsel %vm650, %v1180, %v1182
        %v1186 = vadd.f32 %v1173, %v1183
        %v1187 = vadd.f32 %v1174, %v1182
        %v1188 = vld [vmem:[#allocation2 + $0x20] sm:$0xff]
        %v1189 = vmul.f32 %v661, %v1132
        %v1190 = vmul.f32 %v661, %v1133
        %1193 = vrot.lane.b32.xlu0 %v1189, 104
        %v1194 = vpop.permute.xlu0 %1193
        %1195 = vrot.lane.b32.xlu0 %v1190, 104
        %v1196 = vpop.permute.xlu0 %1195
        %v1197 = vsel %vm675, %v1194, %v1196
        %v1200 = vadd.f32 %v1186, %v1197
        %v1201 = vadd.f32 %v1187, %v1196
        %v1202 = vmul.f32 %v686, %v1132
        %v1203 = vmul.f32 %v686, %v1133
        %1206 = vrot.lane.b32.xlu0 %v1202, 103
        %v1207 = vpop.permute.xlu0 %1206
        %1208 = vrot.lane.b32.xlu0 %v1203, 103
        %v1209 = vpop.permute.xlu0 %1208
        %v1210 = vsel %vm700, %v1207, %v1209
        %v1213 = vadd.f32 %v1200, %v1210
        %v1214 = vadd.f32 %v1201, %v1209
        %v1215 = vmul.f32 %v711, %v1132
        %v1216 = vmul.f32 %v711, %v1133
        %1219 = vrot.lane.b32.xlu0 %v1215, 102
        %v1220 = vpop.permute.xlu0 %1219
        %1221 = vrot.lane.b32.xlu0 %v1216, 102
        %v1222 = vpop.permute.xlu0 %1221
        %v1223 = vsel %vm721, %v1220, %v1222
        %v1226 = vadd.f32 %v1213, %v1223
        %v1227 = vadd.f32 %v1214, %v1222
        %v1228 = vmul.f32 %v731, %v1132
        %v1229 = vmul.f32 %v731, %v1133
        %v1230 = vmul.f32 %v731, %v1188
        %1234 = vrot.lane.b32.xlu0 %v1228, 101
        %v1235 = vpop.permute.xlu0 %1234
        %1236 = vrot.lane.b32.xlu0 %v1229, 101
        %v1237 = vpop.permute.xlu0 %1236
        %1238 = vrot.lane.b32.xlu0 %v1230, 101
        %v1239 = vpop.permute.xlu0 %1238
        %v1240 = vsel %vm741, %v1235, %v1237
        %v1241 = vsel %vm741, %v1237, %v1239
        %v1244 = vadd.f32 %v1226, %v1240
        %v1245 = vadd.f32 %v1227, %v1241
        %v1246 = vmul.f32 %v751, %v1132
        %v1247 = vmul.f32 %v751, %v1133
        %v1248 = vmul.f32 %v751, %v1188
        %1252 = vrot.lane.b32.xlu0 %v1246, 100
        %v1253 = vpop.permute.xlu0 %1252
        %1254 = vrot.lane.b32.xlu0 %v1247, 100
        %v1255 = vpop.permute.xlu0 %1254
        %1256 = vrot.lane.b32.xlu0 %v1248, 100
        %v1257 = vpop.permute.xlu0 %1256
        %v1258 = vsel %vm761, %v1253, %v1255
        %v1259 = vsel %vm761, %v1255, %v1257
        %v1262 = vadd.f32 %v1244, %v1258
        %v1263 = vadd.f32 %v1245, %v1259
        %v1264 = vmul.f32 %v771, %v1132
        %v1265 = vmul.f32 %v771, %v1133
        %v1266 = vmul.f32 %v771, %v1188
        %1270 = vrot.lane.b32.xlu0 %v1264, 80
        %v1271 = vpop.permute.xlu0 %1270
        %1272 = vrot.lane.b32.xlu0 %v1265, 80
        %v1273 = vpop.permute.xlu0 %1272
        %1274 = vrot.lane.b32.xlu0 %v1266, 80
        %v1275 = vpop.permute.xlu0 %1274
        %v1276 = vsel %vm781, %v1271, %v1273
        %v1277 = vsel %vm781, %v1273, %v1275
        %v1280 = vadd.f32 %v1262, %v1276
        %v1281 = vadd.f32 %v1263, %v1277
        %v1282 = vmul.f32 %v791, %v1132
        %v1283 = vmul.f32 %v791, %v1133
        %v1284 = vmul.f32 %v791, %v1188
        %1288 = vrot.lane.b32.xlu0 %v1282, 79
        %v1289 = vpop.permute.xlu0 %1288
        %1290 = vrot.lane.b32.xlu0 %v1283, 79
        %v1291 = vpop.permute.xlu0 %1290
        %1292 = vrot.lane.b32.xlu0 %v1284, 79
        %v1293 = vpop.permute.xlu0 %1292
        %v1294 = vsel %vm801, %v1289, %v1291
        %v1295 = vsel %vm801, %v1291, %v1293
        %v1298 = vadd.f32 %v1280, %v1294
        %v1299 = vadd.f32 %v1281, %v1295
        %v1300 = vmul.f32 %v811, %v1132
        %v1301 = vmul.f32 %v811, %v1133
        %v1302 = vmul.f32 %v811, %v1188
        %1306 = vrot.lane.b32.xlu0 %v1300, 78
        %v1307 = vpop.permute.xlu0 %1306
        %1308 = vrot.lane.b32.xlu0 %v1301, 78
        %v1309 = vpop.permute.xlu0 %1308
        %1310 = vrot.lane.b32.xlu0 %v1302, 78
        %v1311 = vpop.permute.xlu0 %1310
        %v1312 = vsel %vm821, %v1307, %v1309
        %v1313 = vsel %vm821, %v1309, %v1311
        %v1316 = vadd.f32 %v1298, %v1312
        %v1317 = vadd.f32 %v1299, %v1313
        %v1318 = vmul.f32 %v831, %v1132
        %v1319 = vmul.f32 %v831, %v1133
        %v1320 = vmul.f32 %v831, %v1188
        %1324 = vrot.lane.b32.xlu0 %v1318, 77
        %v1325 = vpop.permute.xlu0 %1324
        %1326 = vrot.lane.b32.xlu0 %v1319, 77
        %v1327 = vpop.permute.xlu0 %1326
        %1328 = vrot.lane.b32.xlu0 %v1320, 77
        %v1329 = vpop.permute.xlu0 %1328
        %v1330 = vsel %vm841, %v1325, %v1327
        %v1331 = vsel %vm841, %v1327, %v1329
        %v1334 = vadd.f32 %v1316, %v1330
        %v1335 = vadd.f32 %v1317, %v1331
        %v1336 = vmul.f32 %v851, %v1132
        %v1337 = vmul.f32 %v851, %v1133
        %v1338 = vmul.f32 %v851, %v1188
        %1342 = vrot.lane.b32.xlu0 %v1336, 76
        %v1343 = vpop.permute.xlu0 %1342
        %1344 = vrot.lane.b32.xlu0 %v1337, 76
        %v1345 = vpop.permute.xlu0 %1344
        %1346 = vrot.lane.b32.xlu0 %v1338, 76
        %v1347 = vpop.permute.xlu0 %1346
        %v1348 = vsel %vm861, %v1343, %v1345
        %v1349 = vsel %vm861, %v1345, %v1347
        %v1352 = vadd.f32 %v1334, %v1348
        %v1353 = vadd.f32 %v1335, %v1349
        %v1354 = vmul.f32 %v871, %v1132
        %v1355 = vmul.f32 %v871, %v1133
        %v1356 = vmul.f32 %v871, %v1188
        %1360 = vrot.lane.b32.xlu0 %v1354, 56
        %v1361 = vpop.permute.xlu0 %1360
        %1362 = vrot.lane.b32.xlu0 %v1355, 56
        %v1363 = vpop.permute.xlu0 %1362
        %1364 = vrot.lane.b32.xlu0 %v1356, 56
        %v1365 = vpop.permute.xlu0 %1364
        %v1366 = vsel %vm881, %v1361, %v1363
        %v1367 = vsel %vm881, %v1363, %v1365
        %v1370 = vadd.f32 %v1352, %v1366
        %v1371 = vadd.f32 %v1353, %v1367
        %v1372 = vmul.f32 %v891, %v1132
        %v1373 = vmul.f32 %v891, %v1133
        %v1374 = vmul.f32 %v891, %v1188
        %1378 = vrot.lane.b32.xlu0 %v1372, 55
        %v1379 = vpop.permute.xlu0 %1378
        %1380 = vrot.lane.b32.xlu0 %v1373, 55
        %v1381 = vpop.permute.xlu0 %1380
        %1382 = vrot.lane.b32.xlu0 %v1374, 55
        %v1383 = vpop.permute.xlu0 %1382
        %v1384 = vsel %vm901, %v1379, %v1381
        %v1385 = vsel %vm901, %v1381, %v1383
        %v1388 = vadd.f32 %v1370, %v1384
        %v1389 = vadd.f32 %v1371, %v1385
        %v1390 = vmul.f32 %v911, %v1132
        %v1391 = vmul.f32 %v911, %v1133
        %v1392 = vmul.f32 %v911, %v1188
        %1396 = vrot.lane.b32.xlu0 %v1390, 54
        %v1397 = vpop.permute.xlu0 %1396
        %1398 = vrot.lane.b32.xlu0 %v1391, 54
        %v1399 = vpop.permute.xlu0 %1398
        %1400 = vrot.lane.b32.xlu0 %v1392, 54
        %v1401 = vpop.permute.xlu0 %1400
        %v1402 = vsel %vm921, %v1397, %v1399
        %v1403 = vsel %vm921, %v1399, %v1401
        %v1406 = vadd.f32 %v1388, %v1402
        %v1407 = vadd.f32 %v1389, %v1403
        %v1408 = vmul.f32 %v931, %v1132
        %v1409 = vmul.f32 %v931, %v1133
        %v1410 = vmul.f32 %v931, %v1188
        %1414 = vrot.lane.b32.xlu0 %v1408, 53
        %v1415 = vpop.permute.xlu0 %1414
        %1416 = vrot.lane.b32.xlu0 %v1409, 53
        %v1417 = vpop.permute.xlu0 %1416
        %1418 = vrot.lane.b32.xlu0 %v1410, 53
        %v1419 = vpop.permute.xlu0 %1418
        %v1420 = vsel %vm941, %v1415, %v1417
        %v1421 = vsel %vm941, %v1417, %v1419
        %v1424 = vadd.f32 %v1406, %v1420
        %v1425 = vadd.f32 %v1407, %v1421
        %v1426 = vmul.f32 %v951, %v1132
        %v1427 = vmul.f32 %v951, %v1133
        %v1428 = vmul.f32 %v951, %v1188
        %1432 = vrot.lane.b32.xlu0 %v1426, 52
        %v1433 = vpop.permute.xlu0 %1432
        %1434 = vrot.lane.b32.xlu0 %v1427, 52
        %v1435 = vpop.permute.xlu0 %1434
        %1436 = vrot.lane.b32.xlu0 %v1428, 52
        %v1437 = vpop.permute.xlu0 %1436
        %v1438 = vsel %vm961, %v1433, %v1435
        %v1439 = vsel %vm961, %v1435, %v1437
        %v1442 = vadd.f32 %v1424, %v1438
        %v1443 = vadd.f32 %v1425, %v1439
        %v1444 = vmul.f32 %v974, %v1133
        %v1445 = vmul.f32 %v974, %v1188
        %1448 = vrot.lane.b32.xlu0 %v1444, 32
        %v1449 = vpop.permute.xlu0 %1448
        %1450 = vrot.lane.b32.xlu0 %v1445, 32
        %v1451 = vpop.permute.xlu0 %1450
        %v1452 = vsel %vm988, %v1449, %v1451
        %v1455 = vadd.f32 %v1442, %v1449
        %v1456 = vadd.f32 %v1443, %v1452
        %v1457 = vmul.f32 %v999, %v1133
        %v1458 = vmul.f32 %v999, %v1188
        %1461 = vrot.lane.b32.xlu0 %v1457, 31
        %v1462 = vpop.permute.xlu0 %1461
        %1463 = vrot.lane.b32.xlu0 %v1458, 31
        %v1464 = vpop.permute.xlu0 %1463
        %v1465 = vsel %vm1013, %v1462, %v1464
        %v1468 = vadd.f32 %v1455, %v1462
        %v1469 = vadd.f32 %v1456, %v1465
        %v1470 = vmul.f32 %v1024, %v1133
        %v1471 = vmul.f32 %v1024, %v1188
        %1474 = vrot.lane.b32.xlu0 %v1470, 30
        %v1475 = vpop.permute.xlu0 %1474
        %1476 = vrot.lane.b32.xlu0 %v1471, 30
        %v1477 = vpop.permute.xlu0 %1476
        %v1478 = vsel %vm1038, %v1475, %v1477
        %v1481 = vadd.f32 %v1468, %v1475
        %v1482 = vadd.f32 %v1469, %v1478
        %v1483 = vmul.f32 %v1049, %v1133
        %v1484 = vmul.f32 %v1049, %v1188
        %1487 = vrot.lane.b32.xlu0 %v1483, 29
        %v1488 = vpop.permute.xlu0 %1487
        %1489 = vrot.lane.b32.xlu0 %v1484, 29
        %v1490 = vpop.permute.xlu0 %1489
        %v1491 = vsel %vm1063, %v1488, %v1490
        %v1494 = vadd.f32 %v1481, %v1488
        %v1495 = vadd.f32 %v1482, %v1491
        %v1496 = vmul.f32 %v1074, %v1133
        %v1497 = vmul.f32 %v1074, %v1188
        %1500 = vrot.lane.b32.xlu0 %v1496, 28
        %v1501 = vpop.permute.xlu0 %1500
        %1502 = vrot.lane.b32.xlu0 %v1497, 28
        %v1503 = vpop.permute.xlu0 %1502
        %v1504 = vsel %vm1088, %v1501, %v1503
        %v1507 = vadd.f32 %v1494, %v1501
        %v1508 = vadd.f32 %v1495, %v1504
        %v1509 = vadd.f32 %v1507, %v1100
        %v1510 = vadd.f32 %v1508, %v1100
        %1513 = vrot.lane.b32.xlu0 %v1509, 90
        %v1514 = vpop.permute.xlu0 %1513
        %1515 = vrot.lane.b32.xlu0 %v1510, 90
        %v1516 = vpop.permute.xlu0 %1515
        %vm1517 = vcmask 736256
        %v1518 = vsel %vm1517, %v1514, %v1516
        %v1521 = vsel %vm429, %v1518, 0.0
        %v1522 = vsel %vm430, %v1516, 0.0
        %1525 = vrot.lane.b32.xlu0 %v1521, 88
        %v1526 = vpop.permute.xlu0 %1525
        %1527 = vrot.lane.b32.xlu0 %v1522, 88
        %v1528 = vpop.permute.xlu0 %1527
        %v1529 = vsel %vm443, %v1526, %v1528
        %1533 = vst.msk [vmem:[#allocation3 + $0x10] sm:$0xff] %vm540, %v1526
        %1534 = vst [vmem:[#allocation3 + $0x18] sm:$0xff] %v1529
        %1535 = vst.msk [vmem:[#allocation3 + $0x20] sm:$0xff] %vm296, %v1528
        %v1536 = vld [vmem:[#allocation3] sm:$0xff]
        %v1537 = vld [vmem:[#allocation3 + $0x8] sm:$0xff]
        %1539 = vset.pattern.permute.xlu0 0
        %1540 = vperm.xlu0 %1539, %v546
        %v1541 = vpop.permute.xlu0 %1540
        %v1543 = vmul.f32 %v1541, %v1536
        %v1544 = vmul.f32 %v1541, %v1537
        %1545 = vset.pattern.permute.xlu0 1
        %1546 = vperm.xlu0 %1545, %v546
        %v1547 = vpop.permute.xlu0 %1546
        %v1549 = vmul.f32 %v1547, %v1536
        %v1550 = vmul.f32 %v1547, %v1537
        %1553 = vrot.lane.b32.xlu0 %v1549, 125
        %v1554 = vpop.permute.xlu0 %1553
        %1555 = vrot.lane.b32.xlu0 %v1550, 125
        %v1556 = vpop.permute.xlu0 %1555
        %v1557 = vsel %vm625, %v1554, %v1556
        %v1560 = vadd.f32 %v1543, %v1557
        %v1561 = vadd.f32 %v1544, %v1556
        %1562 = vset.pattern.permute.xlu0 2
        %1563 = vperm.xlu0 %1562, %v546
        %v1564 = vpop.permute.xlu0 %1563
        %v1566 = vmul.f32 %v1564, %v1536
        %v1567 = vmul.f32 %v1564, %v1537
        %1570 = vrot.lane.b32.xlu0 %v1566, 122
        %v1571 = vpop.permute.xlu0 %1570
        %1572 = vrot.lane.b32.xlu0 %v1567, 122
        %v1573 = vpop.permute.xlu0 %1572
        %vm1574 = vcmask 998400
        %v1575 = vsel %vm1574, %v1571, %v1573
        %v1578 = vadd.f32 %v1560, %v1575
        %v1579 = vadd.f32 %v1561, %v1573
        %1580 = vset.pattern.permute.xlu0 3
        %1581 = vperm.xlu0 %1580, %v546
        %v1582 = vpop.permute.xlu0 %1581
        %v1584 = vmul.f32 %v1582, %v1536
        %v1585 = vmul.f32 %v1582, %v1537
        %1588 = vrot.lane.b32.xlu0 %v1584, 119
        %v1589 = vpop.permute.xlu0 %1588
        %1590 = vrot.lane.b32.xlu0 %v1585, 119
        %v1591 = vpop.permute.xlu0 %1590
        %vm1592 = vcmask 973824
        %v1593 = vsel %vm1592, %v1589, %v1591
        %v1596 = vadd.f32 %v1578, %v1593
        %v1597 = vadd.f32 %v1579, %v1591
        %1598 = vset.pattern.permute.xlu0 4
        %1599 = vperm.xlu0 %1598, %v546
        %v1600 = vpop.permute.xlu0 %1599
        %v1602 = vmul.f32 %v1600, %v1536
        %v1603 = vmul.f32 %v1600, %v1537
        %1606 = vrot.lane.b32.xlu0 %v1602, 116
        %v1607 = vpop.permute.xlu0 %1606
        %1608 = vrot.lane.b32.xlu0 %v1603, 116
        %v1609 = vpop.permute.xlu0 %1608
        %vm1610 = vcmask 949248
        %v1611 = vsel %vm1610, %v1607, %v1609
        %v1614 = vadd.f32 %v1596, %v1611
        %v1615 = vadd.f32 %v1597, %v1609
        %v1616 = vld [vmem:[#allocation3] sm:$0xff]
        %v1617 = vld [vmem:[#allocation3 + $0x8] sm:$0xff]
        %v1618 = vld [vmem:[#allocation3 + $0x10] sm:$0xff]
        %1619 = vset.pattern.permute.xlu0 5
        %1620 = vperm.xlu0 %1619, %v546
        %v1621 = vpop.permute.xlu0 %1620
        %v1623 = vmul.f32 %v1621, %v1616
        %v1624 = vmul.f32 %v1621, %v1617
        %v1625 = vmul.f32 %v1621, %v1618
        %1629 = vrot.lane.b32.xlu0 %v1623, 56
        %v1630 = vpop.permute.xlu0 %1629
        %1631 = vrot.lane.b32.xlu0 %v1624, 56
        %v1632 = vpop.permute.xlu0 %1631
        %1633 = vrot.lane.b32.xlu0 %v1625, 56
        %v1634 = vpop.permute.xlu0 %1633
        %v1635 = vsel %vm881, %v1630, %v1632
        %v1636 = vsel %vm881, %v1632, %v1634
        %v1639 = vadd.f32 %v1614, %v1635
        %v1640 = vadd.f32 %v1615, %v1636
        %1641 = vset.pattern.permute.xlu0 6
        %1642 = vperm.xlu0 %1641, %v546
        %v1643 = vpop.permute.xlu0 %1642
        %v1645 = vmul.f32 %v1643, %v1616
        %v1646 = vmul.f32 %v1643, %v1617
        %v1647 = vmul.f32 %v1643, %v1618
        %1651 = vrot.lane.b32.xlu0 %v1645, 53
        %v1652 = vpop.permute.xlu0 %1651
        %1653 = vrot.lane.b32.xlu0 %v1646, 53
        %v1654 = vpop.permute.xlu0 %1653
        %1655 = vrot.lane.b32.xlu0 %v1647, 53
        %v1656 = vpop.permute.xlu0 %1655
        %v1657 = vsel %vm941, %v1652, %v1654
        %v1658 = vsel %vm941, %v1654, %v1656
        %v1661 = vadd.f32 %v1639, %v1657
        %v1662 = vadd.f32 %v1640, %v1658
        %1663 = vset.pattern.permute.xlu0 7
        %1664 = vperm.xlu0 %1663, %v546
        %v1665 = vpop.permute.xlu0 %1664
        %v1667 = vmul.f32 %v1665, %v1616
        %v1668 = vmul.f32 %v1665, %v1617
        %v1669 = vmul.f32 %v1665, %v1618
        %1673 = vrot.lane.b32.xlu0 %v1667, 50
        %v1674 = vpop.permute.xlu0 %1673
        %1675 = vrot.lane.b32.xlu0 %v1668, 50
        %v1676 = vpop.permute.xlu0 %1675
        %1677 = vrot.lane.b32.xlu0 %v1669, 50
        %v1678 = vpop.permute.xlu0 %1677
        %vm1679 = vcmask 408576
        %v1680 = vsel %vm1679, %v1674, %v1676
        %v1681 = vsel %vm1679, %v1676, %v1678
        %v1684 = vadd.f32 %v1661, %v1680
        %v1685 = vadd.f32 %v1662, %v1681
        %1686 = vset.pattern.permute.xlu0 8
        %1687 = vperm.xlu0 %1686, %v546
        %v1688 = vpop.permute.xlu0 %1687
        %v1690 = vmul.f32 %v1688, %v1616
        %v1691 = vmul.f32 %v1688, %v1617
        %v1692 = vmul.f32 %v1688, %v1618
        %1696 = vrot.lane.b32.xlu0 %v1690, 47
        %v1697 = vpop.permute.xlu0 %1696
        %1698 = vrot.lane.b32.xlu0 %v1691, 47
        %v1699 = vpop.permute.xlu0 %1698
        %1700 = vrot.lane.b32.xlu0 %v1692, 47
        %v1701 = vpop.permute.xlu0 %1700
        %vm1702 = vcmask 384000
        %v1703 = vsel %vm1702, %v1697, %v1699
        %v1704 = vsel %vm1702, %v1699, %v1701
        %v1707 = vadd.f32 %v1684, %v1703
        %v1708 = vadd.f32 %v1685, %v1704
        %1709 = vset.pattern.permute.xlu0 9
        %1710 = vperm.xlu0 %1709, %v546
        %v1711 = vpop.permute.xlu0 %1710
        %v1713 = vmul.f32 %v1711, %v1616
        %v1714 = vmul.f32 %v1711, %v1617
        %v1715 = vmul.f32 %v1711, %v1618
        %1719 = vrot.lane.b32.xlu0 %v1713, 44
        %v1720 = vpop.permute.xlu0 %1719
        %1721 = vrot.lane.b32.xlu0 %v1714, 44
        %v1722 = vpop.permute.xlu0 %1721
        %1723 = vrot.lane.b32.xlu0 %v1715, 44
        %v1724 = vpop.permute.xlu0 %1723
        %vm1725 = vcmask 359424
        %v1726 = vsel %vm1725, %v1720, %v1722
        %v1727 = vsel %vm1725, %v1722, %v1724
        %v1730 = vadd.f32 %v1707, %v1726
        %v1731 = vadd.f32 %v1708, %v1727
        %1732 = vset.pattern.permute.xlu0 10
        %1733 = vperm.xlu0 %1732, %v546
        %v1734 = vpop.permute.xlu0 %1733
        %v1736 = vmul.f32 %v1734, %v1617
        %v1737 = vmul.f32 %v1734, %v1618
        %1740 = vrot.lane.b32.xlu0 %v1736, 112
        %v1741 = vpop.permute.xlu0 %1740
        %1742 = vrot.lane.b32.xlu0 %v1737, 112
        %v1743 = vpop.permute.xlu0 %1742
        %vm1744 = vcmask 916480
        %v1745 = vsel %vm1744, %v1741, %v1743
        %v1748 = vadd.f32 %v1730, %v1745
        %v1749 = vadd.f32 %v1731, %v1743
        %1750 = vset.pattern.permute.xlu0 11
        %1751 = vperm.xlu0 %1750, %v546
        %v1752 = vpop.permute.xlu0 %1751
        %v1754 = vmul.f32 %v1752, %v1617
        %v1755 = vmul.f32 %v1752, %v1618
        %1758 = vrot.lane.b32.xlu0 %v1754, 109
        %v1759 = vpop.permute.xlu0 %1758
        %1760 = vrot.lane.b32.xlu0 %v1755, 109
        %v1761 = vpop.permute.xlu0 %1760
        %vm1762 = vcmask 891904
        %v1763 = vsel %vm1762, %v1759, %v1761
        %v1766 = vadd.f32 %v1748, %v1763
        %v1767 = vadd.f32 %v1749, %v1761
        %1768 = vset.pattern.permute.xlu0 12
        %1769 = vperm.xlu0 %1768, %v546
        %v1770 = vpop.permute.xlu0 %1769
        %v1772 = vmul.f32 %v1770, %v1617
        %v1773 = vmul.f32 %v1770, %v1618
        %1776 = vrot.lane.b32.xlu0 %v1772, 106
        %v1777 = vpop.permute.xlu0 %1776
        %1778 = vrot.lane.b32.xlu0 %v1773, 106
        %v1779 = vpop.permute.xlu0 %1778
        %vm1780 = vcmask 867328
        %v1781 = vsel %vm1780, %v1777, %v1779
        %v1784 = vadd.f32 %v1766, %v1781
        %v1785 = vadd.f32 %v1767, %v1779
        %1786 = vset.pattern.permute.xlu0 13
        %1787 = vperm.xlu0 %1786, %v546
        %v1788 = vpop.permute.xlu0 %1787
        %v1790 = vmul.f32 %v1788, %v1617
        %v1791 = vmul.f32 %v1788, %v1618
        %1794 = vrot.lane.b32.xlu0 %v1790, 103
        %v1795 = vpop.permute.xlu0 %1794
        %1796 = vrot.lane.b32.xlu0 %v1791, 103
        %v1797 = vpop.permute.xlu0 %1796
        %v1798 = vsel %vm700, %v1795, %v1797
        %v1801 = vadd.f32 %v1784, %v1798
        %v1802 = vadd.f32 %v1785, %v1797
        %1803 = vset.pattern.permute.xlu0 14
        %1804 = vperm.xlu0 %1803, %v546
        %v1805 = vpop.permute.xlu0 %1804
        %v1807 = vmul.f32 %v1805, %v1617
        %v1808 = vmul.f32 %v1805, %v1618
        %1811 = vrot.lane.b32.xlu0 %v1807, 100
        %v1812 = vpop.permute.xlu0 %1811
        %1813 = vrot.lane.b32.xlu0 %v1808, 100
        %v1814 = vpop.permute.xlu0 %1813
        %v1815 = vsel %vm761, %v1812, %v1814
        %v1818 = vadd.f32 %v1801, %v1815
        %v1819 = vadd.f32 %v1802, %v1814
        %v1820 = vld [vmem:[#allocation3 + $0x8] sm:$0xff]
        %v1821 = vld [vmem:[#allocation3 + $0x10] sm:$0xff]
        %v1822 = vld [vmem:[#allocation3 + $0x18] sm:$0xff]
        %1823 = vset.pattern.permute.xlu0 15
        %1824 = vperm.xlu0 %1823, %v546
        %v1825 = vpop.permute.xlu0 %1824
        %v1827 = vmul.f32 %v1825, %v1820
        %v1828 = vmul.f32 %v1825, %v1821
        %v1829 = vmul.f32 %v1825, %v1822
        %1833 = vrot.lane.b32.xlu0 %v1827, 40
        %v1834 = vpop.permute.xlu0 %1833
        %1835 = vrot.lane.b32.xlu0 %v1828, 40
        %v1836 = vpop.permute.xlu0 %1835
        %1837 = vrot.lane.b32.xlu0 %v1829, 40
        %v1838 = vpop.permute.xlu0 %1837
        %vm1839 = vcmask 326656
        %v1840 = vsel %vm1839, %v1834, %v1836
        %v1841 = vsel %vm1839, %v1836, %v1838
        %v1844 = vadd.f32 %v1818, %v1840
        %v1845 = vadd.f32 %v1819, %v1841
        %1846 = vset.pattern.permute.xlu0 16
        %1847 = vperm.xlu0 %1846, %v546
        %v1848 = vpop.permute.xlu0 %1847
        %v1850 = vmul.f32 %v1848, %v1820
        %v1851 = vmul.f32 %v1848, %v1821
        %v1852 = vmul.f32 %v1848, %v1822
        %1856 = vrot.lane.b32.xlu0 %v1850, 37
        %v1857 = vpop.permute.xlu0 %1856
        %1858 = vrot.lane.b32.xlu0 %v1851, 37
        %v1859 = vpop.permute.xlu0 %1858
        %1860 = vrot.lane.b32.xlu0 %v1852, 37
        %v1861 = vpop.permute.xlu0 %1860
        %vm1862 = vcmask 302080
        %v1863 = vsel %vm1862, %v1857, %v1859
        %v1864 = vsel %vm1862, %v1859, %v1861
        %v1867 = vadd.f32 %v1844, %v1863
        %v1868 = vadd.f32 %v1845, %v1864
        %1869 = vset.pattern.permute.xlu0 17
        %1870 = vperm.xlu0 %1869, %v546
        %v1871 = vpop.permute.xlu0 %1870
        %v1873 = vmul.f32 %v1871, %v1820
        %v1874 = vmul.f32 %v1871, %v1821
        %v1875 = vmul.f32 %v1871, %v1822
        %1879 = vrot.lane.b32.xlu0 %v1873, 34
        %v1880 = vpop.permute.xlu0 %1879
        %1881 = vrot.lane.b32.xlu0 %v1874, 34
        %v1882 = vpop.permute.xlu0 %1881
        %1883 = vrot.lane.b32.xlu0 %v1875, 34
        %v1884 = vpop.permute.xlu0 %1883
        %vm1885 = vcmask 277504
        %v1886 = vsel %vm1885, %v1880, %v1882
        %v1887 = vsel %vm1885, %v1882, %v1884
        %v1890 = vadd.f32 %v1867, %v1886
        %v1891 = vadd.f32 %v1868, %v1887
        %1892 = vset.pattern.permute.xlu0 18
        %1893 = vperm.xlu0 %1892, %v546
        %v1894 = vpop.permute.xlu0 %1893
        %v1896 = vmul.f32 %v1894, %v1820
        %v1897 = vmul.f32 %v1894, %v1821
        %v1898 = vmul.f32 %v1894, %v1822
        %1902 = vrot.lane.b32.xlu0 %v1896, 31
        %v1903 = vpop.permute.xlu0 %1902
        %1904 = vrot.lane.b32.xlu0 %v1897, 31
        %v1905 = vpop.permute.xlu0 %1904
        %1906 = vrot.lane.b32.xlu0 %v1898, 31
        %v1907 = vpop.permute.xlu0 %1906
        %v1908 = vsel %vm1013, %v1903, %v1905
        %v1909 = vsel %vm1013, %v1905, %v1907
        %v1912 = vadd.f32 %v1890, %v1908
        %v1913 = vadd.f32 %v1891, %v1909
        %1914 = vset.pattern.permute.xlu0 19
        %1915 = vperm.xlu0 %1914, %v546
        %v1916 = vpop.permute.xlu0 %1915
        %v1918 = vmul.f32 %v1916, %v1820
        %v1919 = vmul.f32 %v1916, %v1821
        %v1920 = vmul.f32 %v1916, %v1822
        %1924 = vrot.lane.b32.xlu0 %v1918, 28
        %v1925 = vpop.permute.xlu0 %1924
        %1926 = vrot.lane.b32.xlu0 %v1919, 28
        %v1927 = vpop.permute.xlu0 %1926
        %1928 = vrot.lane.b32.xlu0 %v1920, 28
        %v1929 = vpop.permute.xlu0 %1928
        %v1930 = vsel %vm1088, %v1925, %v1927
        %v1931 = vsel %vm1088, %v1927, %v1929
        %v1934 = vadd.f32 %v1912, %v1930
        %v1935 = vadd.f32 %v1913, %v1931
        %1936 = vset.pattern.permute.xlu0 20
        %1937 = vperm.xlu0 %1936, %v546
        %v1938 = vpop.permute.xlu0 %1937
        %v1940 = vmul.f32 %v1938, %v1821
        %v1941 = vmul.f32 %v1938, %v1822
        %1944 = vrot.lane.b32.xlu0 %v1940, 96
        %v1945 = vpop.permute.xlu0 %1944
        %1946 = vrot.lane.b32.xlu0 %v1941, 96
        %v1947 = vpop.permute.xlu0 %1946
        %vm1948 = vcmask 785408
        %v1949 = vsel %vm1948, %v1945, %v1947
        %v1952 = vadd.f32 %v1934, %v1949
        %v1953 = vadd.f32 %v1935, %v1947
        %1954 = vset.pattern.permute.xlu0 21
        %1955 = vperm.xlu0 %1954, %v546
        %v1956 = vpop.permute.xlu0 %1955
        %v1958 = vmul.f32 %v1956, %v1821
        %v1959 = vmul.f32 %v1956, %v1822
        %1962 = vrot.lane.b32.xlu0 %v1958, 93
        %v1963 = vpop.permute.xlu0 %1962
        %1964 = vrot.lane.b32.xlu0 %v1959, 93
        %v1965 = vpop.permute.xlu0 %1964
        %vm1966 = vcmask 760832
        %v1967 = vsel %vm1966, %v1963, %v1965
        %v1970 = vadd.f32 %v1952, %v1967
        %v1971 = vadd.f32 %v1953, %v1965
        %1972 = vset.pattern.permute.xlu0 22
        %1973 = vperm.xlu0 %1972, %v546
        %v1974 = vpop.permute.xlu0 %1973
        %v1976 = vmul.f32 %v1974, %v1821
        %v1977 = vmul.f32 %v1974, %v1822
        %1980 = vrot.lane.b32.xlu0 %v1976, 90
        %v1981 = vpop.permute.xlu0 %1980
        %1982 = vrot.lane.b32.xlu0 %v1977, 90
        %v1983 = vpop.permute.xlu0 %1982
        %v1984 = vsel %vm1517, %v1981, %v1983
        %v1987 = vadd.f32 %v1970, %v1984
        %v1988 = vadd.f32 %v1971, %v1983
        %1989 = vset.pattern.permute.xlu0 23
        %1990 = vperm.xlu0 %1989, %v546
        %v1991 = vpop.permute.xlu0 %1990
        %v1993 = vmul.f32 %v1991, %v1821
        %v1994 = vmul.f32 %v1991, %v1822
        %1997 = vrot.lane.b32.xlu0 %v1993, 87
        %v1998 = vpop.permute.xlu0 %1997
        %1999 = vrot.lane.b32.xlu0 %v1994, 87
        %v2000 = vpop.permute.xlu0 %1999
        %vm2001 = vcmask 711680
        %v2002 = vsel %vm2001, %v1998, %v2000
        %v2005 = vadd.f32 %v1987, %v2002
        %v2006 = vadd.f32 %v1988, %v2000
        %2007 = vset.pattern.permute.xlu0 24
        %2008 = vperm.xlu0 %2007, %v546
        %v2009 = vpop.permute.xlu0 %2008
        %v2011 = vmul.f32 %v2009, %v1821
        %v2012 = vmul.f32 %v2009, %v1822
        %2015 = vrot.lane.b32.xlu0 %v2011, 84
        %v2016 = vpop.permute.xlu0 %2015
        %2017 = vrot.lane.b32.xlu0 %v2012, 84
        %v2018 = vpop.permute.xlu0 %2017
        %vm2019 = vcmask 687104
        %v2020 = vsel %vm2019, %v2016, %v2018
        %v2023 = vadd.f32 %v2005, %v2020
        %v2024 = vadd.f32 %v2006, %v2018
        %v2025 = vld [vmem:[%s264] sm:$0xff]
        %v2026 = vld [vmem:[%s264 + $0x8] sm:$0xff]
        %2028 = vset.pattern.permute.xlu0 0
        %2029 = vperm.xlu0 %2028, %v547
        %v2030 = vpop.permute.xlu0 %2029
        %v2032 = vadd.f32 %v2023, %v2030
        %v2033 = vadd.f32 %v2024, %v2030
        %2036 = vrot.lane.b32.xlu0 %v2032, 126
        %v2037 = vpop.permute.xlu0 %2036
        %2038 = vrot.lane.b32.xlu0 %v2033, 126
        %v2039 = vpop.permute.xlu0 %2038
        %v2040 = vsel %vm600, %v2037, %v2039
        %v2043 = vmul.f32 %v2025, %v2040
        %v2044 = vmul.f32 %v2026, %v2039
        %2045 = vst [vmem:[%s294] sm:$0xff] %v2043
        %2046 = vst.msk [vmem:[%s294 + $0x8] sm:$0xff] %vm453, %v2044
        %v2047 = vld [vmem:[#allocation3 + $0x8] sm:$0xff]
        %v2048 = vld [vmem:[#allocation3 + $0x10] sm:$0xff]
        %v2049 = vld [vmem:[#allocation3 + $0x18] sm:$0xff]
        %v2050 = vmul.f32 %v1541, %v2047
        %v2051 = vmul.f32 %v1541, %v2048
        %v2052 = vmul.f32 %v1541, %v2049
        %v2053 = vmul.f32 %v1547, %v2047
        %v2054 = vmul.f32 %v1547, %v2048
        %v2055 = vmul.f32 %v1547, %v2049
        %2059 = vrot.lane.b32.xlu0 %v2053, 125
        %v2060 = vpop.permute.xlu0 %2059
        %2061 = vrot.lane.b32.xlu0 %v2054, 125
        %v2062 = vpop.permute.xlu0 %2061
        %2063 = vrot.lane.b32.xlu0 %v2055, 125
        %v2064 = vpop.permute.xlu0 %2063
        %v2065 = vsel %vm625, %v2060, %v2062
        %v2066 = vsel %vm625, %v2062, %v2064
        %v2070 = vadd.f32 %v2050, %v2065
        %v2071 = vadd.f32 %v2051, %v2066
        %v2072 = vadd.f32 %v2052, %v2064
        %v2073 = vmul.f32 %v1564, %v2047
        %v2074 = vmul.f32 %v1564, %v2048
        %v2075 = vmul.f32 %v1564, %v2049
        %2079 = vrot.lane.b32.xlu0 %v2073, 122
        %v2080 = vpop.permute.xlu0 %2079
        %2081 = vrot.lane.b32.xlu0 %v2074, 122
        %v2082 = vpop.permute.xlu0 %2081
        %2083 = vrot.lane.b32.xlu0 %v2075, 122
        %v2084 = vpop.permute.xlu0 %2083
        %v2085 = vsel %vm1574, %v2080, %v2082
        %v2086 = vsel %vm1574, %v2082, %v2084
        %v2090 = vadd.f32 %v2070, %v2085
        %v2091 = vadd.f32 %v2071, %v2086
        %v2092 = vadd.f32 %v2072, %v2084
        %v2093 = vmul.f32 %v1582, %v2047
        %v2094 = vmul.f32 %v1582, %v2048
        %v2095 = vmul.f32 %v1582, %v2049
        %2099 = vrot.lane.b32.xlu0 %v2093, 119
        %v2100 = vpop.permute.xlu0 %2099
        %2101 = vrot.lane.b32.xlu0 %v2094, 119
        %v2102 = vpop.permute.xlu0 %2101
        %2103 = vrot.lane.b32.xlu0 %v2095, 119
        %v2104 = vpop.permute.xlu0 %2103
        %v2105 = vsel %vm1592, %v2100, %v2102
        %v2106 = vsel %vm1592, %v2102, %v2104
        %v2110 = vadd.f32 %v2090, %v2105
        %v2111 = vadd.f32 %v2091, %v2106
        %v2112 = vadd.f32 %v2092, %v2104
        %v2113 = vmul.f32 %v1600, %v2047
        %v2114 = vmul.f32 %v1600, %v2048
        %v2115 = vmul.f32 %v1600, %v2049
        %2119 = vrot.lane.b32.xlu0 %v2113, 116
        %v2120 = vpop.permute.xlu0 %2119
        %2121 = vrot.lane.b32.xlu0 %v2114, 116
        %v2122 = vpop.permute.xlu0 %2121
        %2123 = vrot.lane.b32.xlu0 %v2115, 116
        %v2124 = vpop.permute.xlu0 %2123
        %v2125 = vsel %vm1610, %v2120, %v2122
        %v2126 = vsel %vm1610, %v2122, %v2124
        %v2130 = vadd.f32 %v2110, %v2125
        %v2131 = vadd.f32 %v2111, %v2126
        %v2132 = vadd.f32 %v2112, %v2124
        %v2133 = vmul.f32 %v1621, %v2048
        %v2134 = vmul.f32 %v1621, %v2049
        %2137 = vrot.lane.b32.xlu0 %v2133, 56
        %v2138 = vpop.permute.xlu0 %2137
        %2139 = vrot.lane.b32.xlu0 %v2134, 56
        %v2140 = vpop.permute.xlu0 %2139
        %v2141 = vsel %vm881, %v2138, %v2140
        %v2145 = vadd.f32 %v2130, %v2138
        %v2146 = vadd.f32 %v2131, %v2141
        %v2147 = vadd.f32 %v2132, %v2140
        %v2148 = vmul.f32 %v1643, %v2048
        %v2149 = vmul.f32 %v1643, %v2049
        %2152 = vrot.lane.b32.xlu0 %v2148, 53
        %v2153 = vpop.permute.xlu0 %2152
        %2154 = vrot.lane.b32.xlu0 %v2149, 53
        %v2155 = vpop.permute.xlu0 %2154
        %v2156 = vsel %vm941, %v2153, %v2155
        %v2160 = vadd.f32 %v2145, %v2153
        %v2161 = vadd.f32 %v2146, %v2156
        %v2162 = vadd.f32 %v2147, %v2155
        %v2163 = vmul.f32 %v1665, %v2048
        %v2164 = vmul.f32 %v1665, %v2049
        %2167 = vrot.lane.b32.xlu0 %v2163, 50
        %v2168 = vpop.permute.xlu0 %2167
        %2169 = vrot.lane.b32.xlu0 %v2164, 50
        %v2170 = vpop.permute.xlu0 %2169
        %v2171 = vsel %vm1679, %v2168, %v2170
        %v2175 = vadd.f32 %v2160, %v2168
        %v2176 = vadd.f32 %v2161, %v2171
        %v2177 = vadd.f32 %v2162, %v2170
        %v2178 = vmul.f32 %v1688, %v2048
        %v2179 = vmul.f32 %v1688, %v2049
        %2182 = vrot.lane.b32.xlu0 %v2178, 47
        %v2183 = vpop.permute.xlu0 %2182
        %2184 = vrot.lane.b32.xlu0 %v2179, 47
        %v2185 = vpop.permute.xlu0 %2184
        %v2186 = vsel %vm1702, %v2183, %v2185
        %v2190 = vadd.f32 %v2175, %v2183
        %v2191 = vadd.f32 %v2176, %v2186
        %v2192 = vadd.f32 %v2177, %v2185
        %v2193 = vmul.f32 %v1711, %v2048
        %v2194 = vmul.f32 %v1711, %v2049
        %2197 = vrot.lane.b32.xlu0 %v2193, 44
        %v2198 = vpop.permute.xlu0 %2197
        %2199 = vrot.lane.b32.xlu0 %v2194, 44
        %v2200 = vpop.permute.xlu0 %2199
        %v2201 = vsel %vm1725, %v2198, %v2200
        %v2205 = vadd.f32 %v2190, %v2198
        %v2206 = vadd.f32 %v2191, %v2201
        %v2207 = vadd.f32 %v2192, %v2200
        %v2208 = vld [vmem:[#allocation3 + $0x20] sm:$0xff]
        %v2209 = vmul.f32 %v1734, %v2048
        %v2210 = vmul.f32 %v1734, %v2049
        %v2211 = vmul.f32 %v1734, %v2208
        %2215 = vrot.lane.b32.xlu0 %v2209, 112
        %v2216 = vpop.permute.xlu0 %2215
        %2217 = vrot.lane.b32.xlu0 %v2210, 112
        %v2218 = vpop.permute.xlu0 %2217
        %2219 = vrot.lane.b32.xlu0 %v2211, 112
        %v2220 = vpop.permute.xlu0 %2219
        %v2221 = vsel %vm1744, %v2216, %v2218
        %v2222 = vsel %vm1744, %v2218, %v2220
        %v2226 = vadd.f32 %v2205, %v2221
        %v2227 = vadd.f32 %v2206, %v2222
        %v2228 = vadd.f32 %v2207, %v2220
        %v2229 = vmul.f32 %v1752, %v2048
        %v2230 = vmul.f32 %v1752, %v2049
        %v2231 = vmul.f32 %v1752, %v2208
        %2235 = vrot.lane.b32.xlu0 %v2229, 109
        %v2236 = vpop.permute.xlu0 %2235
        %2237 = vrot.lane.b32.xlu0 %v2230, 109
        %v2238 = vpop.permute.xlu0 %2237
        %2239 = vrot.lane.b32.xlu0 %v2231, 109
        %v2240 = vpop.permute.xlu0 %2239
        %v2241 = vsel %vm1762, %v2236, %v2238
        %v2242 = vsel %vm1762, %v2238, %v2240
        %v2246 = vadd.f32 %v2226, %v2241
        %v2247 = vadd.f32 %v2227, %v2242
        %v2248 = vadd.f32 %v2228, %v2240
        %v2249 = vmul.f32 %v1770, %v2048
        %v2250 = vmul.f32 %v1770, %v2049
        %v2251 = vmul.f32 %v1770, %v2208
        %2255 = vrot.lane.b32.xlu0 %v2249, 106
        %v2256 = vpop.permute.xlu0 %2255
        %2257 = vrot.lane.b32.xlu0 %v2250, 106
        %v2258 = vpop.permute.xlu0 %2257
        %2259 = vrot.lane.b32.xlu0 %v2251, 106
        %v2260 = vpop.permute.xlu0 %2259
        %v2261 = vsel %vm1780, %v2256, %v2258
        %v2262 = vsel %vm1780, %v2258, %v2260
        %v2266 = vadd.f32 %v2246, %v2261
        %v2267 = vadd.f32 %v2247, %v2262
        %v2268 = vadd.f32 %v2248, %v2260
        %v2269 = vmul.f32 %v1788, %v2048
        %v2270 = vmul.f32 %v1788, %v2049
        %v2271 = vmul.f32 %v1788, %v2208
        %2275 = vrot.lane.b32.xlu0 %v2269, 103
        %v2276 = vpop.permute.xlu0 %2275
        %2277 = vrot.lane.b32.xlu0 %v2270, 103
        %v2278 = vpop.permute.xlu0 %2277
        %2279 = vrot.lane.b32.xlu0 %v2271, 103
        %v2280 = vpop.permute.xlu0 %2279
        %v2281 = vsel %vm700, %v2276, %v2278
        %v2282 = vsel %vm700, %v2278, %v2280
        %v2286 = vadd.f32 %v2266, %v2281
        %v2287 = vadd.f32 %v2267, %v2282
        %v2288 = vadd.f32 %v2268, %v2280
        %v2289 = vmul.f32 %v1805, %v2048
        %v2290 = vmul.f32 %v1805, %v2049
        %v2291 = vmul.f32 %v1805, %v2208
        %2295 = vrot.lane.b32.xlu0 %v2289, 100
        %v2296 = vpop.permute.xlu0 %2295
        %2297 = vrot.lane.b32.xlu0 %v2290, 100
        %v2298 = vpop.permute.xlu0 %2297
        %2299 = vrot.lane.b32.xlu0 %v2291, 100
        %v2300 = vpop.permute.xlu0 %2299
        %v2301 = vsel %vm761, %v2296, %v2298
        %v2302 = vsel %vm761, %v2298, %v2300
        %v2306 = vadd.f32 %v2286, %v2301
        %v2307 = vadd.f32 %v2287, %v2302
        %v2308 = vadd.f32 %v2288, %v2300
        %v2309 = vmul.f32 %v1825, %v2049
        %v2310 = vmul.f32 %v1825, %v2208
        %2313 = vrot.lane.b32.xlu0 %v2309, 40
        %v2314 = vpop.permute.xlu0 %2313
        %2315 = vrot.lane.b32.xlu0 %v2310, 40
        %v2316 = vpop.permute.xlu0 %2315
        %v2317 = vsel %vm1839, %v2314, %v2316
        %v2321 = vadd.f32 %v2306, %v2314
        %v2322 = vadd.f32 %v2307, %v2317
        %v2323 = vadd.f32 %v2308, %v2316
        %v2324 = vmul.f32 %v1848, %v2049
        %v2325 = vmul.f32 %v1848, %v2208
        %2328 = vrot.lane.b32.xlu0 %v2324, 37
        %v2329 = vpop.permute.xlu0 %2328
        %2330 = vrot.lane.b32.xlu0 %v2325, 37
        %v2331 = vpop.permute.xlu0 %2330
        %v2332 = vsel %vm1862, %v2329, %v2331
        %v2336 = vadd.f32 %v2321, %v2329
        %v2337 = vadd.f32 %v2322, %v2332
        %v2338 = vadd.f32 %v2323, %v2331
        %v2339 = vmul.f32 %v1871, %v2049
        %v2340 = vmul.f32 %v1871, %v2208
        %2343 = vrot.lane.b32.xlu0 %v2339, 34
        %v2344 = vpop.permute.xlu0 %2343
        %2345 = vrot.lane.b32.xlu0 %v2340, 34
        %v2346 = vpop.permute.xlu0 %2345
        %v2347 = vsel %vm1885, %v2344, %v2346
        %v2351 = vadd.f32 %v2336, %v2344
        %v2352 = vadd.f32 %v2337, %v2347
        %v2353 = vadd.f32 %v2338, %v2346
        %v2354 = vmul.f32 %v1894, %v2049
        %v2355 = vmul.f32 %v1894, %v2208
        %2358 = vrot.lane.b32.xlu0 %v2354, 31
        %v2359 = vpop.permute.xlu0 %2358
        %2360 = vrot.lane.b32.xlu0 %v2355, 31
        %v2361 = vpop.permute.xlu0 %2360
        %v2362 = vsel %vm1013, %v2359, %v2361
        %v2366 = vadd.f32 %v2351, %v2359
        %v2367 = vadd.f32 %v2352, %v2362
        %v2368 = vadd.f32 %v2353, %v2361
        %v2369 = vmul.f32 %v1916, %v2049
        %v2370 = vmul.f32 %v1916, %v2208
        %2373 = vrot.lane.b32.xlu0 %v2369, 28
        %v2374 = vpop.permute.xlu0 %2373
        %2375 = vrot.lane.b32.xlu0 %v2370, 28
        %v2376 = vpop.permute.xlu0 %2375
        %v2377 = vsel %vm1088, %v2374, %v2376
        %v2381 = vadd.f32 %v2366, %v2374
        %v2382 = vadd.f32 %v2367, %v2377
        %v2383 = vadd.f32 %v2368, %v2376
        %v2384 = vld [vmem:[#allocation3 + $0x28] sm:$0xff]
        %v2385 = vmul.f32 %v1938, %v2049
        %v2386 = vmul.f32 %v1938, %v2208
        %v2387 = vmul.f32 %v1938, %v2384
        %2391 = vrot.lane.b32.xlu0 %v2385, 96
        %v2392 = vpop.permute.xlu0 %2391
        %2393 = vrot.lane.b32.xlu0 %v2386, 96
        %v2394 = vpop.permute.xlu0 %2393
        %2395 = vrot.lane.b32.xlu0 %v2387, 96
        %v2396 = vpop.permute.xlu0 %2395
        %v2397 = vsel %vm1948, %v2392, %v2394
        %v2398 = vsel %vm1948, %v2394, %v2396
        %v2402 = vadd.f32 %v2381, %v2397
        %v2403 = vadd.f32 %v2382, %v2398
        %v2404 = vadd.f32 %v2383, %v2396
        %v2405 = vmul.f32 %v1956, %v2049
        %v2406 = vmul.f32 %v1956, %v2208
        %v2407 = vmul.f32 %v1956, %v2384
        %2411 = vrot.lane.b32.xlu0 %v2405, 93
        %v2412 = vpop.permute.xlu0 %2411
        %2413 = vrot.lane.b32.xlu0 %v2406, 93
        %v2414 = vpop.permute.xlu0 %2413
        %2415 = vrot.lane.b32.xlu0 %v2407, 93
        %v2416 = vpop.permute.xlu0 %2415
        %v2417 = vsel %vm1966, %v2412, %v2414
        %v2418 = vsel %vm1966, %v2414, %v2416
        %v2422 = vadd.f32 %v2402, %v2417
        %v2423 = vadd.f32 %v2403, %v2418
        %v2424 = vadd.f32 %v2404, %v2416
        %v2425 = vmul.f32 %v1974, %v2049
        %v2426 = vmul.f32 %v1974, %v2208
        %v2427 = vmul.f32 %v1974, %v2384
        %2431 = vrot.lane.b32.xlu0 %v2425, 90
        %v2432 = vpop.permute.xlu0 %2431
        %2433 = vrot.lane.b32.xlu0 %v2426, 90
        %v2434 = vpop.permute.xlu0 %2433
        %2435 = vrot.lane.b32.xlu0 %v2427, 90
        %v2436 = vpop.permute.xlu0 %2435
        %v2437 = vsel %vm1517, %v2432, %v2434
        %v2438 = vsel %vm1517, %v2434, %v2436
        %v2442 = vadd.f32 %v2422, %v2437
        %v2443 = vadd.f32 %v2423, %v2438
        %v2444 = vadd.f32 %v2424, %v2436
        %v2445 = vmul.f32 %v1991, %v2049
        %v2446 = vmul.f32 %v1991, %v2208
        %v2447 = vmul.f32 %v1991, %v2384
        %2451 = vrot.lane.b32.xlu0 %v2445, 87
        %v2452 = vpop.permute.xlu0 %2451
        %2453 = vrot.lane.b32.xlu0 %v2446, 87
        %v2454 = vpop.permute.xlu0 %2453
        %2455 = vrot.lane.b32.xlu0 %v2447, 87
        %v2456 = vpop.permute.xlu0 %2455
        %v2457 = vsel %vm2001, %v2452, %v2454
        %v2458 = vsel %vm2001, %v2454, %v2456
        %v2462 = vadd.f32 %v2442, %v2457
        %v2463 = vadd.f32 %v2443, %v2458
        %v2464 = vadd.f32 %v2444, %v2456
        %v2465 = vmul.f32 %v2009, %v2049
        %v2466 = vmul.f32 %v2009, %v2208
        %v2467 = vmul.f32 %v2009, %v2384
        %2471 = vrot.lane.b32.xlu0 %v2465, 84
        %v2472 = vpop.permute.xlu0 %2471
        %2473 = vrot.lane.b32.xlu0 %v2466, 84
        %v2474 = vpop.permute.xlu0 %2473
        %2475 = vrot.lane.b32.xlu0 %v2467, 84
        %v2476 = vpop.permute.xlu0 %2475
        %v2477 = vsel %vm2019, %v2472, %v2474
        %v2478 = vsel %vm2019, %v2474, %v2476
        %v2482 = vadd.f32 %v2462, %v2477
        %v2483 = vadd.f32 %v2463, %v2478
        %v2484 = vadd.f32 %v2464, %v2476
        %v2485 = vld [vmem:[%s264 + $0x8] sm:$0xff]
        %v2486 = vld [vmem:[%s264 + $0x10] sm:$0xff]
        %v2487 = vadd.f32 %v2482, %v2030
        %v2488 = vadd.f32 %v2483, %v2030
        %v2489 = vadd.f32 %v2484, %v2030
        %2493 = vrot.lane.b32.xlu0 %v2487, 126
        %v2494 = vpop.permute.xlu0 %2493
        %2495 = vrot.lane.b32.xlu0 %v2488, 126
        %v2496 = vpop.permute.xlu0 %2495
        %2497 = vrot.lane.b32.xlu0 %v2489, 126
        %v2498 = vpop.permute.xlu0 %2497
        %v2499 = vsel %vm600, %v2494, %v2496
        %v2500 = vsel %vm600, %v2496, %v2498
        %v2503 = vmul.f32 %v2485, %v2499
        %v2504 = vmul.f32 %v2486, %v2500
        %vm2505 = vcmask 1048064
        %2506 = vst.msk [vmem:[%s294 + $0x8] sm:$0xff] %vm2505, %v2503
        %2507 = vst [vmem:[%s294 + $0x10] sm:$0xff] %v2504
        %s2508 = sand.u32 %s184, 1
        %s2509 = scalar_lea.sflag [#allocation6], %s2508
        %s2510 = sand.u32 %s184, 1
        %s2511 = smul.addr %s2510, 24
        %s2512 = scalar_lea.vmem [#allocation7], %s2511
        // Predicated region
        $region53: #{tpu_custom_call.1} parent=47 // pred_check
          %p2513 = pneg %p194
        $region54: #{tpu_custom_call.1} parent=47 // pred_check_branch
          %2515 = sbr.rel (%p2513) target = $region56
        $region55: #{tpu_custom_call.1} parent=47 // pred_region
          %s2517 = ssub.s32 384, 384
          %2518 = vsyncadd %s2509, %s2517
          %s2519 = smul.addr %s24, 3
          %s2520 = smul.addr %s2519, 128
          %s2521 = scalar_lea.hbm %s7, %s2520
          %s2523 = sshll.u32 %s2512, 4
          %s2524 = int_to_ptr.vmem [resolvable:$true] %s2523
          %2526 = dma.vmem_to_hbm [thread:$0]  %s2524, 384, %s2521, %s2509
        $region56: #{tpu_custom_call.1} parent=47 // pred_fallthru
          _
      $region48: #{tpu_custom_call.1} parent=5 // pred_fallthru
        _
      %p2527 = scmp.le.s32.totalorder 2, %s19
      // Predicated region
      $region57: #{tpu_custom_call.1} parent=5 // pred_check
        %p2528 = pneg %p2527
      $region58: #{tpu_custom_call.1} parent=5 // pred_check_branch
        %2530 = sbr.rel (%p2528) target = $region60
      $region59: #{tpu_custom_call.1} parent=5 // pred_region
        %s2531 = ssub.s32 %s19, 2
        // Predicated region
        $region61: #{tpu_custom_call.1} parent=59 // pred_check
          %p2532 = pneg %p200
        $region62: #{tpu_custom_call.1} parent=59 // pred_check_branch
          %2534 = sbr.rel (%p2532) target = $region64
        $region63: #{tpu_custom_call.1} parent=59 // pred_region
          %s2535 = sand.u32 %s185, 1
          %s2536 = scalar_lea.sflag [#allocation6], %s2535
          %s2537 = sand.u32 %s185, 1
          %s2538 = smul.addr %s2537, 24
          %s2539 = scalar_lea.vmem [#allocation7], %s2538
          %2540 = dma.done %s2536, 384
        $region64: #{tpu_custom_call.1} parent=59 // pred_fallthru
          _
      $region60: #{tpu_custom_call.1} parent=5 // pred_fallthru
        _
    $region6: #{tpu_custom_call.1} parent=1 // loop_footer
      %s23 = sadd.s32 1, %s19
    $region7: #{tpu_custom_call.1} parent=1 // loop_footer_branch
      %18 = sbr.rel target = $region3
    $region8: #{tpu_custom_call.1} parent=1 // loop_exit
      _
    %2541 = vsyncpa [#allocation5], 1
    %s2542 = scalar_lea.sflag [#allocation5], 1
    %2543 = vsyncpa %s2542, 1
    %2544 = vsyncpa [#allocation6], 1
    %s2545 = scalar_lea.sflag [#allocation6], 1
    %2546 = vsyncpa %s2545, 1

</llo_original>
